<compile_context>
chip_gen: v7x
topology: tpu7x:2x2x1
jax: 0.10.0
libtpu: 0.0.40
codegen_flags: <defaults>
</compile_context>

<pallas_src>
import functools

import jax
import jax.numpy as jnp
from jax import lax
from jax.experimental import pallas as pl
from jax.experimental.pallas import tpu as pltpu


def _round_up(a, b):
    return (a + b - 1) // b * b


def _vmem_limit_bytes():
    """Review #4: scoped-VMEM defaults are only 16 MiB (v5e) / 32 MiB (v6e, v7x).

    Ask for most of the physical VMEM, leaving headroom (v7x has only 64 MiB physical)."""
    mib = 1024 * 1024
    try:
        cap = pltpu.get_tpu_info().vmem_capacity_bytes
    except Exception:  # older runtimes / interpret mode
        cap = 64 * mib
    return int(max(32 * mib, min(cap - 8 * mib, 100 * mib)))


# ------------------------------------------------------------------------------------------------
# Kernel 1: TransformerConv(heads, concat=False, edge_dim) — edge-tiled, node accumulators in VMEM.
#           Also emits the two node-side halves of the edge-MLP first layer (x_conv@w1s, x_conv@w1d+b1).
# ------------------------------------------------------------------------------------------------
def _conv_kernel(heads, hidden, e_total, tile_e, use_bf16,
                 # inputs
                 x_ref, ea_ref, src_ref, dst_ref, dstrow_ref,
                 wproj_ref, bproj_ref, we_ref, hsum_ref, mean_ref,
                 w1s_ref, w1d_ref, b1_ref,
                 # outputs
                 out_ref,
                 # scratch (resident across the edge-tile axis)
                 q_s, kv_s, skip_s, num_s, den_s, m_s):
    f32 = jnp.float32
    cdt = jnp.bfloat16 if use_bf16 else jnp.float32
    H, C = heads, hidden
    HC = H * C
    n_pad = x_ref.shape[0]
    t = pl.program_id(0)

    def mm(a, b):  # MXU matmul: cdt operands, f32 accumulate
        return jnp.dot(a.astype(cdt), b.astype(cdt), preferred_element_type=f32)

    def expand_heads(v):  # [*, H] -> [*, HC]: replicate each head value across its C lanes.
        # hsum is 0/1 so this is exact; kept in f32 (accuracy-critical softmax bookkeeping).
        return lax.dot_general(v, hsum_ref[...], (((1,), (1,)), ((), ())),
                               preferred_element_type=f32)

    # ---- once, at the first edge tile: fused node projections + accumulator init --------------
    @pl.when(t == 0)
    def _init():
        proj = mm(x_ref[...], wproj_ref[...]) + bproj_ref[...]   # [N, 3HC + C]
        q_s[...] = proj[:, :HC].astype(cdt)                       # 1/sqrt(C) folded into wq/bq
        kv_s[...] = proj[:, HC:3 * HC].astype(cdt)                # [k | v]
        skip_s[...] = proj[:, 3 * HC:]                            # lin_skip output (f32)
        num_s[...] = jnp.zeros_like(num_s)
        den_s[...] = jnp.zeros_like(den_s)
        m_s[...] = jnp.full_like(m_s, -1e30)

    # ---- per-tile one-hot gather / scatter matrices (exact in bf16) ---------------------------
    iota_row = lax.broadcasted_iota(jnp.int32, (1, n_pad), 1)     # review #8: in-kernel iota
    iota_col = lax.broadcasted_iota(jnp.int32, (n_pad, 1), 0)
    src_oh = (src_ref[...] == iota_row).astype(cdt)               # [TE, N]  gather orientation
    dst_oh = (dst_ref[...] == iota_row).astype(cdt)               # [TE, N]
    dst_scat = (iota_col == dstrow_ref[...]).astype(cdt)          # [N, TE]  review #5

    # ---- per-edge q / k / v --------------------------------------------------------------------
    e_emb = mm(ea_ref[...], we_ref[...])                          # [TE, HC] review #6: single 'we'
    q_i = mm(dst_oh, q_s[...])                                    # [TE, HC]
    kv_j = mm(src_oh, kv_s[...])                                  # [TE, 2HC]
    k_j = kv_j[:, :HC] + e_emb
    v_j = kv_j[:, HC:] + e_emb

    # ---- attention logits + online per-head global max (review #1) ----------------------------
    lh = mm(q_i * k_j, hsum_ref[...])                             # [TE, H]
    eidx = t * tile_e + lax.broadcasted_iota(jnp.int32, (tile_e, 1), 0)
    valid = eidx < e_total                                        # [TE, 1] mask padded edges
    lh = jnp.where(valid, lh, -1e30)                              # f32 only (no bf16 sentinel)

    m_new = jnp.maximum(m_s[...], jnp.max(lh, axis=0, keepdims=True))   # [1, H]
    corr = jnp.exp(m_s[...] - m_new)                              # rescale factor for running max
    p = jnp.exp(lh - m_new) * valid.astype(f32)                   # [TE, H], padded edges -> 0
    p_full = expand_heads(p)                                      # [TE, HC]

    # scatter-add into resident node accumulators — native [N, TE] orientation (MXU, no transpose)
    num_s[...] = num_s[...] * expand_heads(corr) + mm(dst_scat, p_full * v_j)   # [N, HC]
    den_s[...] = den_s[...] * corr + mm(dst_scat, p)                            # [N, H]
    m_s[...] = m_new

    # ---- once, after the last tile: normalize, mean over heads, skip, edge-MLP node halves ----
    @pl.when(t == pl.num_programs(0) - 1)
    def _finalize():
        den_full = expand_heads(den_s[...])                       # [N, HC]
        safe = jnp.where(den_full > 0.0, den_full, 1.0)           # nodes w/o in-edges -> 0 message
        if use_bf16:
            x_conv = num_s[...] * pl.reciprocal(safe, approx=True)   # EUP (free slot)
        else:
            x_conv = num_s[...] / safe
        x_conv = mm(x_conv, mean_ref[...]) + skip_s[...]          # [N, C]  (1/heads folded in mean)
        xs = mm(x_conv, w1s_ref[...])                             # src half of edge-MLP layer 1
        xd = mm(x_conv, w1d_ref[...]) + b1_ref[...]               # dst half (+ bias, added once)
        out_ref[...] = jnp.concatenate([xs, xd], axis=0)          # [2N, C]


# ------------------------------------------------------------------------------------------------
# Kernel 2: edge MLP — embarrassingly parallel over edge tiles (marked "parallel" -> megacore).
# ------------------------------------------------------------------------------------------------
def _edge_mlp_kernel(use_bf16,
                     nodes_ref, ea_ref, src_ref, dst_ref,
                     w1e_ref, w2row_ref, b2_ref,
                     out_ref):
    f32 = jnp.float32
    cdt = jnp.bfloat16 if use_bf16 else jnp.float32
    n2 = nodes_ref.shape[0]           # 2 * N_pad  ([x_conv@w1s ; x_conv@w1d + b1] stacked)
    n_pad = n2 // 2

    def mm(a, b):
        return jnp.dot(a.astype(cdt), b.astype(cdt), preferred_element_type=f32)

    # fused gather: one [TE, 2N] one-hot matmul picks both the src and dst halves per edge
    iota2 = lax.broadcasted_iota(jnp.int32, (1, n2), 1)
    oh2 = jnp.logical_or(src_ref[...] == iota2,
                         (dst_ref[...] + n_pad) == iota2).astype(cdt)     # [TE, 2N]
    h1 = mm(oh2, nodes_ref[...]) + mm(ea_ref[...], w1e_ref[...])          # [TE, C]
    h1 = jnp.maximum(h1, 0.0)                                             # ReLU (f32 VPU)

    # final Linear(C, 1) emitted row-oriented (review #9): contract C of [1,C] with C of [TE,C]
    row = lax.dot_general(w2row_ref[...].astype(cdt), h1.astype(cdt),
                          (((1,), (1,)), ((), ())), preferred_element_type=f32)   # [1, TE]
    out_ref[...] = row + b2_ref[...]                                       # lane-dense packed logits


# ------------------------------------------------------------------------------------------------
# Wrapper
# ------------------------------------------------------------------------------------------------
def edge_gnn_classifier(x, edge_index, edge_attr, params, *, heads, hidden,
                        use_bf16=True, tile_e=128):
    """x: [N, Fin] f32, edge_index: [2, E] int, edge_attr: [E, Ein] f32 -> [E] f32 logits."""
    assert tile_e % 128 == 0, "edge tile must be lane-aligned (review #7)"
    N, f_in = x.shape
    E, e_in = edge_attr.shape
    H, C = heads, hidden
    HC = H * C
    cdt = jnp.bfloat16 if use_bf16 else jnp.float32

    n_pad = _round_up(N, 128)             # review #7: MXU-aligned gather contraction dim
    e_pad = _round_up(E, tile_e)
    n_tiles = e_pad // tile_e

    src = edge_index[0].astype(jnp.int32)
    dst = edge_index[1].astype(jnp.int32)
    src_col = jnp.zeros((e_pad, 1), jnp.int32).at[:E, 0].set(src)
    dst_col = jnp.zeros((e_pad, 1), jnp.int32).at[:E, 0].set(dst)
    dst_row = dst_col.reshape(1, e_pad)                     # lane-oriented copy for the scatter
    ea_pad = jnp.zeros((e_pad, e_in), jnp.float32).at[:E].set(edge_attr)
    x_pad = jnp.zeros((n_pad, f_in), jnp.float32).at[:N].set(x)

    # host-side weight fusion (once per trace)
    scale = 1.0 / (C ** 0.5)
    w_proj = jnp.concatenate([params["wq"] * scale, params["wk"],
                              params["wv"], params["ws"]], axis=1)        # [Fin, 3HC + C]
    b_proj = jnp.concatenate([params["bq"] * scale, params["bk"],
                              params["bv"], params["bs"]], axis=1)        # [1, 3HC + C]
    hsum = jnp.repeat(jnp.eye(H, dtype=jnp.float32), C, axis=0)           # [HC, H] per-head sum
    mean = jnp.tile(jnp.eye(C, dtype=jnp.float32), (H, 1)) / H            # [HC, C] mean over heads
    w2_row = params["w2"].reshape(1, C)                                   # [1, C]

    vmem_limit = _vmem_limit_bytes()                                      # review #4

    # ---- pass 1: TransformerConv over edge tiles ('arbitrary': carries node accumulators) -----
    nodes_packed = pl.pallas_call(
        functools.partial(_conv_kernel, H, C, E, tile_e, use_bf16),
        out_shape=jax.ShapeDtypeStruct((2 * n_pad, C), jnp.float32),
        grid=(n_tiles,),
        in_specs=[
            pl.BlockSpec((n_pad, f_in), lambda t: (0, 0)),          # x (resident)
            pl.BlockSpec((tile_e, e_in), lambda t: (t, 0)),         # edge_attr tile
            pl.BlockSpec((tile_e, 1), lambda t: (t, 0)),            # src ids (column)
            pl.BlockSpec((tile_e, 1), lambda t: (t, 0)),            # dst ids (column)
            pl.BlockSpec((1, tile_e), lambda t: (0, t)),            # dst ids (row, scatter orient.)
            pl.BlockSpec((f_in, 3 * HC + C), lambda t: (0, 0)),     # fused [wq|wk|wv|ws]
            pl.BlockSpec((1, 3 * HC + C), lambda t: (0, 0)),        # fused biases
            pl.BlockSpec((e_in, HC), lambda t: (0, 0)),             # we (single copy, review #6)
            pl.BlockSpec((HC, H), lambda t: (0, 0)),                # head block-sum
            pl.BlockSpec((HC, C), lambda t: (0, 0)),                # head mean (1/heads folded)
            pl.BlockSpec((C, C), lambda t: (0, 0)),                 # w1s
            pl.BlockSpec((C, C), lambda t: (0, 0)),                 # w1d
            pl.BlockSpec((1, C), lambda t: (0, 0)),                 # b1
        ],
        out_specs=pl.BlockSpec((2 * n_pad, C), lambda t: (0, 0)),   # resident, written at the end
        scratch_shapes=[
            pltpu.VMEM((n_pad, HC), cdt),            # q
            pltpu.VMEM((n_pad, 2 * HC), cdt),        # [k | v]
            pltpu.VMEM((n_pad, C), jnp.float32),     # skip
            pltpu.VMEM((n_pad, HC), jnp.float32),    # softmax numerator accumulator
            pltpu.VMEM((n_pad, H), jnp.float32),     # softmax denominator accumulator
            pltpu.VMEM((1, H), jnp.float32),         # running per-head max
        ],
        compiler_params=pltpu.CompilerParams(
            dimension_semantics=("arbitrary",),      # review #3: reduction axis (accumulators)
            vmem_limit_bytes=vmem_limit),
    )(x_pad, ea_pad, src_col, dst_col, dst_row, w_proj, b_proj,
      params["we"], hsum, mean, params["w1s"], params["w1d"], params["b1"])

    # ---- pass 2: edge MLP over edge tiles ('parallel': both v7x TensorCores) -------------------
    logits = pl.pallas_call(
        functools.partial(_edge_mlp_kernel, use_bf16),
        out_shape=jax.ShapeDtypeStruct((n_tiles, tile_e), jnp.float32),   # review #9: packed rows
        grid=(n_tiles,),
        in_specs=[
            pl.BlockSpec((2 * n_pad, C), lambda t: (0, 0)),         # [x_conv@w1s ; x_conv@w1d+b1]
            pl.BlockSpec((tile_e, e_in), lambda t: (t, 0)),
            pl.BlockSpec((tile_e, 1), lambda t: (t, 0)),
            pl.BlockSpec((tile_e, 1), lambda t: (t, 0)),
            pl.BlockSpec((e_in, C), lambda t: (0, 0)),              # w1e
            pl.BlockSpec((1, C), lambda t: (0, 0)),                 # w2 (row)
            pl.BlockSpec((1, 1), lambda t: (0, 0)),                 # b2
        ],
        out_specs=pl.BlockSpec((1, tile_e), lambda t: (t, 0)),
        compiler_params=pltpu.CompilerParams(
            dimension_semantics=("parallel",),
            vmem_limit_bytes=vmem_limit),
    )(nodes_packed, ea_pad, src_col, dst_col,
      params["w1e"], w2_row, params["b2"])

    return logits.reshape(-1)[:E]


# ------------------------------------------------------------------------------------------------
# Pure-JAX f32 reference (unfused math, same semantics as the PyTorch module)
# ------------------------------------------------------------------------------------------------
def _reference(x, edge_index, edge_attr, params, *, heads, hidden):
    C = hidden
    src, dst = edge_index[0], edge_index[1]
    q = x @ params["wq"] + params["bq"]
    k = x @ params["wk"] + params["bk"]
    v = x @ params["wv"] + params["bv"]
    e = edge_attr @ params["we"]
    skip = x @ params["ws"] + params["bs"]
    N = x.shape[0]
    qh = q.reshape(N, heads, C)[dst]
    kh = k.reshape(N, heads, C)[src] + e.reshape(-1, heads, C)
    vh = v.reshape(N, heads, C)[src] + e.reshape(-1, heads, C)
    logits = (qh * kh).sum(-1) / (C ** 0.5)                      # [E, H]
    m = jax.ops.segment_max(logits, dst, num_segments=N)
    p = jnp.exp(logits - m[dst])
    denom = jax.ops.segment_sum(p, dst, num_segments=N)
    alpha = p / denom[dst]
    agg = jax.ops.segment_sum(vh * alpha[..., None], dst, num_segments=N)
    x_conv = agg.mean(1) + skip
    h1 = jax.nn.relu(x_conv[src] @ params["w1s"] + edge_attr @ params["w1e"]
                     + x_conv[dst] @ params["w1d"] + params["b1"])
    return (h1 @ params["w2"] + params["b2"]).reshape(-1)


if __name__ == "__main__":
    # small but multi-tile problem: 48 nodes, 200 edges -> 2 edge tiles of 128 (56 padded edges),
    # nodes padded to 128 (exercises the edge mask and the empty-destination guard).
    N, E = 48, 200
    IN_CH, EDGE_IN, HIDDEN, HEADS = 4, 6, 32, 4
    HC = HEADS * HIDDEN

    key = jax.random.PRNGKey(0)
    ks = jax.random.split(key, 8)
    x = jax.random.normal(ks[0], (N, IN_CH), jnp.float32)
    edge_attr = jax.random.normal(ks[1], (E, EDGE_IN), jnp.float32)
    src = jax.random.randint(ks[2], (E,), 0, N, jnp.int32)
    dst = jax.random.randint(ks[3], (E,), 0, N, jnp.int32)
    edge_index = jnp.stack([src, dst], axis=0)

    def lin(k, fin, fout, scale=None):
        scale = scale if scale is not None else 1.0 / (fin ** 0.5)
        return jax.random.uniform(k, (fin, fout), jnp.float32, -scale, scale)

    kk = iter(jax.random.split(ks[4], 24))
    params = {
        # TransformerConv weights stored as [in, out] (== W^T of nn.Linear)
        "wq": lin(next(kk), IN_CH, HC), "bq": lin(next(kk), 1, HC),
        "wk": lin(next(kk), IN_CH, HC), "bk": lin(next(kk), 1, HC),
        "wv": lin(next(kk), IN_CH, HC), "bv": lin(next(kk), 1, HC),
        "we": lin(next(kk), EDGE_IN, HC),                                  # lin_edge (no bias)
        "ws": lin(next(kk), IN_CH, HIDDEN), "bs": lin(next(kk), 1, HIDDEN),  # lin_skip
        # edge MLP Linear(2H + E, H) split into [x_src | edge_attr | x_dst] row blocks
        "w1s": lin(next(kk), HIDDEN, HIDDEN, 1.0 / ((2 * HIDDEN + EDGE_IN) ** 0.5)),
        "w1e": lin(next(kk), EDGE_IN, HIDDEN, 1.0 / ((2 * HIDDEN + EDGE_IN) ** 0.5)),
        "w1d": lin(next(kk), HIDDEN, HIDDEN, 1.0 / ((2 * HIDDEN + EDGE_IN) ** 0.5)),
        "b1": lin(next(kk), 1, HIDDEN),
        "w2": lin(next(kk), HIDDEN, 1), "b2": lin(next(kk), 1, 1),
    }

    # f32 reference at full matmul precision (avoids the XLA-side bf16-pass matmul default)
    with jax.default_matmul_precision("highest"):
        ref = _reference(x, edge_index, edge_attr, params, heads=HEADS, hidden=HIDDEN)
        ref = jax.block_until_ready(ref)

    # f32 kernel path: checks the restructured (tiled / online-max / fused) math
    out_f32 = edge_gnn_classifier(x, edge_index, edge_attr, params,
                                  heads=HEADS, hidden=HIDDEN, use_bf16=False)
    out_f32 = jax.block_until_ready(out_f32)
    assert out_f32.shape == (E,)
    assert jnp.allclose(out_f32, ref, atol=5e-3, rtol=5e-3), \
        float(jnp.max(jnp.abs(out_f32 - ref)))

    # bf16-MXU path (default fast config for v6e/v7x): looser check vs the f32 reference
    out_bf16 = edge_gnn_classifier(x, edge_index, edge_attr, params,
                                   heads=HEADS, hidden=HIDDEN, use_bf16=True)
    out_bf16 = jax.block_until_ready(out_bf16)
    assert out_bf16.shape == (E,)
    assert jnp.allclose(out_bf16, ref, atol=2e-1, rtol=2e-1), \
        float(jnp.max(jnp.abs(out_bf16 - ref)))

    print("KERNEL_OK")
</pallas_src>

<mosaic_0001>
module attributes {stable_mosaic.version = 11 : i64} {
  func.func @_conv_kernel(%arg0: i32, %arg1: memref<128x4xf32, #tpu.memory_space<vmem>>, %arg2: memref<128x6xf32, #tpu.memory_space<vmem>>, %arg3: memref<128x1xi32, #tpu.memory_space<vmem>>, %arg4: memref<128x1xi32, #tpu.memory_space<vmem>>, %arg5: memref<1x128xi32, #tpu.memory_space<vmem>>, %arg6: memref<4x416xf32, #tpu.memory_space<vmem>>, %arg7: memref<1x416xf32, #tpu.memory_space<vmem>>, %arg8: memref<6x128xf32, #tpu.memory_space<vmem>>, %arg9: memref<128x4xf32, #tpu.memory_space<vmem>>, %arg10: memref<128x32xf32, #tpu.memory_space<vmem>>, %arg11: memref<32x32xf32, #tpu.memory_space<vmem>>, %arg12: memref<32x32xf32, #tpu.memory_space<vmem>>, %arg13: memref<1x32xf32, #tpu.memory_space<vmem>>, %arg14: memref<256x32xf32, #tpu.memory_space<vmem>>, %arg15: memref<128x128xf32, #tpu.memory_space<vmem>>, %arg16: memref<128x256xf32, #tpu.memory_space<vmem>>, %arg17: memref<128x32xf32, #tpu.memory_space<vmem>>, %arg18: memref<128x128xf32, #tpu.memory_space<vmem>>, %arg19: memref<128x4xf32, #tpu.memory_space<vmem>>, %arg20: memref<1x4xf32, #tpu.memory_space<vmem>>) attributes {dimension_semantics = [#tpu.dimension_semantics<arbitrary>], iteration_bounds = array<i64: 2>, scalar_prefetch = 0 : i64, scratch_operands = 6 : i64, tpu.core_type = #tpu.core_type<tc>, window_params = [{pipeline_mode = #tpu.pipeline_mode<synchronous>, transform_indices = @transform_0, window_bounds = array<i64: 128, 4>}, {transform_indices = @transform_1, window_bounds = array<i64: 128, 6>}, {transform_indices = @transform_2, window_bounds = array<i64: 128, 1>}, {transform_indices = @transform_3, window_bounds = array<i64: 128, 1>}, {transform_indices = @transform_4, window_bounds = array<i64: 1, 128>}, {pipeline_mode = #tpu.pipeline_mode<synchronous>, transform_indices = @transform_5, window_bounds = array<i64: 4, 416>}, {pipeline_mode = #tpu.pipeline_mode<synchronous>, transform_indices = @transform_6, window_bounds = array<i64: 1, 416>}, {pipeline_mode = #tpu.pipeline_mode<synchronous>, transform_indices = @transform_7, window_bounds = array<i64: 6, 128>}, {pipeline_mode = #tpu.pipeline_mode<synchronous>, transform_indices = @transform_8, window_bounds = array<i64: 128, 4>}, {pipeline_mode = #tpu.pipeline_mode<synchronous>, transform_indices = @transform_9, window_bounds = array<i64: 128, 32>}, {pipeline_mode = #tpu.pipeline_mode<synchronous>, transform_indices = @transform_10, window_bounds = array<i64: 32, 32>}, {pipeline_mode = #tpu.pipeline_mode<synchronous>, transform_indices = @transform_11, window_bounds = array<i64: 32, 32>}, {pipeline_mode = #tpu.pipeline_mode<synchronous>, transform_indices = @transform_12, window_bounds = array<i64: 1, 32>}, {pipeline_mode = #tpu.pipeline_mode<synchronous>, transform_indices = @transform_13, window_bounds = array<i64: 256, 32>}]} {
    %c0_i32 = arith.constant 0 : i32
    %0 = arith.cmpi eq, %arg0, %c0_i32 : i32
    %1 = arith.extui %0 : i1 to i32
    %c0_i32_0 = arith.constant 0 : i32
    %2 = arith.cmpi ne, %1, %c0_i32_0 : i32
    scf.if %2 {
      %c0_44 = arith.constant 0 : index
      %c0_45 = arith.constant 0 : index
      %82 = vector.load %arg1[%c0_44, %c0_45] : memref<128x4xf32, #tpu.memory_space<vmem>>, vector<128x4xf32>
      %c0_46 = arith.constant 0 : index
      %c0_47 = arith.constant 0 : index
      %83 = vector.load %arg6[%c0_46, %c0_47] : memref<4x416xf32, #tpu.memory_space<vmem>>, vector<4x416xf32>
      %cst_48 = arith.constant dense<0.000000e+00> : vector<128x416xf32>
      %84 = tpu.matmul %82, %83, %cst_48 {dimension_numbers = #tpu.dot_dimension_numbers<[1], [0], [0], [1], [0, 0, 1, 1], [], []>} : vector<128x4xf32>, vector<4x416xf32>, vector<128x416xf32> -> vector<128x416xf32>
      %c0_49 = arith.constant 0 : index
      %c0_50 = arith.constant 0 : index
      %85 = vector.load %arg7[%c0_49, %c0_50] : memref<1x416xf32, #tpu.memory_space<vmem>>, vector<1x416xf32>
      %86 = vector.broadcast %85 : vector<1x416xf32> to vector<128x416xf32>
      %87 = arith.addf %84, %86 : vector<128x416xf32>
      %88 = vector.extract_strided_slice %87 {offsets = [0, 0], sizes = [128, 128], strides = [1, 1]} : vector<128x416xf32> to vector<128x128xf32>
      %c0_51 = arith.constant 0 : index
      %c0_52 = arith.constant 0 : index
      %89 = vector.load %arg15[%c0_51, %c0_52] : memref<128x128xf32, #tpu.memory_space<vmem>>, vector<128x128xf32>
      tpu.vector_store %arg15[%c0_51, %c0_52], %88 {strides = array<i32>} : memref<128x128xf32, #tpu.memory_space<vmem>>, vector<128x128xf32>,
      %90 = vector.extract_strided_slice %87 {offsets = [0, 128], sizes = [128, 256], strides = [1, 1]} : vector<128x416xf32> to vector<128x256xf32>
      %c0_53 = arith.constant 0 : index
      %c0_54 = arith.constant 0 : index
      %91 = vector.load %arg16[%c0_53, %c0_54] : memref<128x256xf32, #tpu.memory_space<vmem>>, vector<128x256xf32>
      tpu.vector_store %arg16[%c0_53, %c0_54], %90 {strides = array<i32>} : memref<128x256xf32, #tpu.memory_space<vmem>>, vector<128x256xf32>,
      %92 = vector.extract_strided_slice %87 {offsets = [0, 384], sizes = [128, 32], strides = [1, 1]} : vector<128x416xf32> to vector<128x32xf32>
      %c0_55 = arith.constant 0 : index
      %c0_56 = arith.constant 0 : index
      %93 = vector.load %arg17[%c0_55, %c0_56] : memref<128x32xf32, #tpu.memory_space<vmem>>, vector<128x32xf32>
      tpu.vector_store %arg17[%c0_55, %c0_56], %92 {strides = array<i32>} : memref<128x32xf32, #tpu.memory_space<vmem>>, vector<128x32xf32>,
      %cst_57 = arith.constant 0.000000e+00 : f32
      %94 = vector.broadcast %cst_57 : f32 to vector<128x128xf32>
      %c0_58 = arith.constant 0 : index
      %c0_59 = arith.constant 0 : index
      %95 = vector.load %arg18[%c0_58, %c0_59] : memref<128x128xf32, #tpu.memory_space<vmem>>, vector<128x128xf32>
      tpu.vector_store %arg18[%c0_58, %c0_59], %94 {strides = array<i32>} : memref<128x128xf32, #tpu.memory_space<vmem>>, vector<128x128xf32>,
      %cst_60 = arith.constant 0.000000e+00 : f32
      %96 = vector.broadcast %cst_60 : f32 to vector<128x4xf32>
      %c0_61 = arith.constant 0 : index
      %c0_62 = arith.constant 0 : index
      %97 = vector.load %arg19[%c0_61, %c0_62] : memref<128x4xf32, #tpu.memory_space<vmem>>, vector<128x4xf32>
      tpu.vector_store %arg19[%c0_61, %c0_62], %96 {strides = array<i32>} : memref<128x4xf32, #tpu.memory_space<vmem>>, vector<128x4xf32>,
      %cst_63 = arith.constant -1.000000e+30 : f32
      %98 = vector.broadcast %cst_63 : f32 to vector<1x4xf32>
      %c0_64 = arith.constant 0 : index
      %c0_65 = arith.constant 0 : index
      %99 = vector.load %arg20[%c0_64, %c0_65] : memref<1x4xf32, #tpu.memory_space<vmem>>, vector<1x4xf32>
      tpu.vector_store %arg20[%c0_64, %c0_65], %98 {strides = array<i32>} : memref<1x4xf32, #tpu.memory_space<vmem>>, vector<1x4xf32>,
    } else {
    }
    %3 = tpu.iota {dimensions = array<i32: 1>} : vector<1x128xi32>
    %4 = tpu.iota {dimensions = array<i32: 0>} : vector<128x1xi32>
    %c0 = arith.constant 0 : index
    %c0_1 = arith.constant 0 : index
    %5 = vector.load %arg3[%c0, %c0_1] : memref<128x1xi32, #tpu.memory_space<vmem>>, vector<128x1xi32>
    %6 = vector.broadcast %5 : vector<128x1xi32> to vector<128x128xi32>
    %7 = vector.broadcast %3 : vector<1x128xi32> to vector<128x128xi32>
    %8 = arith.cmpi eq, %6, %7 : vector<128x128xi32>
    %9 = arith.extui %8 : vector<128x128xi1> to vector<128x128xi32>
    %10 = arith.sitofp %9 : vector<128x128xi32> to vector<128x128xf32>
    %c0_2 = arith.constant 0 : index
    %c0_3 = arith.constant 0 : index
    %11 = vector.load %arg4[%c0_2, %c0_3] : memref<128x1xi32, #tpu.memory_space<vmem>>, vector<128x1xi32>
    %12 = vector.broadcast %11 : vector<128x1xi32> to vector<128x128xi32>
    %13 = vector.broadcast %3 : vector<1x128xi32> to vector<128x128xi32>
    %14 = arith.cmpi eq, %12, %13 : vector<128x128xi32>
    %15 = arith.extui %14 : vector<128x128xi1> to vector<128x128xi32>
    %16 = arith.sitofp %15 : vector<128x128xi32> to vector<128x128xf32>
    %c0_4 = arith.constant 0 : index
    %c0_5 = arith.constant 0 : index
    %17 = vector.load %arg5[%c0_4, %c0_5] : memref<1x128xi32, #tpu.memory_space<vmem>>, vector<1x128xi32>
    %18 = vector.broadcast %4 : vector<128x1xi32> to vector<128x128xi32>
    %19 = vector.broadcast %17 : vector<1x128xi32> to vector<128x128xi32>
    %20 = arith.cmpi eq, %18, %19 : vector<128x128xi32>
    %21 = arith.extui %20 : vector<128x128xi1> to vector<128x128xi32>
    %22 = arith.sitofp %21 : vector<128x128xi32> to vector<128x128xf32>
    %c0_6 = arith.constant 0 : index
    %c0_7 = arith.constant 0 : index
    %23 = vector.load %arg2[%c0_6, %c0_7] : memref<128x6xf32, #tpu.memory_space<vmem>>, vector<128x6xf32>
    %c0_8 = arith.constant 0 : index
    %c0_9 = arith.constant 0 : index
    %24 = vector.load %arg8[%c0_8, %c0_9] : memref<6x128xf32, #tpu.memory_space<vmem>>, vector<6x128xf32>
    %cst = arith.constant dense<0.000000e+00> : vector<128x128xf32>
    %25 = tpu.matmul %23, %24, %cst {dimension_numbers = #tpu.dot_dimension_numbers<[1], [0], [0], [1], [0, 0, 1, 1], [], []>} : vector<128x6xf32>, vector<6x128xf32>, vector<128x128xf32> -> vector<128x128xf32>
    %c0_10 = arith.constant 0 : index
    %c0_11 = arith.constant 0 : index
    %26 = vector.load %arg15[%c0_10, %c0_11] : memref<128x128xf32, #tpu.memory_space<vmem>>, vector<128x128xf32>
    %cst_12 = arith.constant dense<0.000000e+00> : vector<128x128xf32>
    %27 = tpu.matmul %16, %26, %cst_12 {dimension_numbers = #tpu.dot_dimension_numbers<[1], [0], [0], [1], [0, 0, 1, 1], [], []>} : vector<128x128xf32>, vector<128x128xf32>, vector<128x128xf32> -> vector<128x128xf32>
    %c0_13 = arith.constant 0 : index
    %c0_14 = arith.constant 0 : index
    %28 = vector.load %arg16[%c0_13, %c0_14] : memref<128x256xf32, #tpu.memory_space<vmem>>, vector<128x256xf32>
    %cst_15 = arith.constant dense<0.000000e+00> : vector<128x256xf32>
    %29 = tpu.matmul %10, %28, %cst_15 {dimension_numbers = #tpu.dot_dimension_numbers<[1], [0], [0], [1], [0, 0, 1, 1], [], []>} : vector<128x128xf32>, vector<128x256xf32>, vector<128x256xf32> -> vector<128x256xf32>
    %30 = vector.extract_strided_slice %29 {offsets = [0, 0], sizes = [128, 128], strides = [1, 1]} : vector<128x256xf32> to vector<128x128xf32>
    %31 = arith.addf %30, %25 : vector<128x128xf32>
    %32 = vector.extract_strided_slice %29 {offsets = [0, 128], sizes = [128, 128], strides = [1, 1]} : vector<128x256xf32> to vector<128x128xf32>
    %33 = arith.addf %32, %25 : vector<128x128xf32>
    %34 = arith.mulf %27, %31 : vector<128x128xf32>
    %c0_16 = arith.constant 0 : index
    %c0_17 = arith.constant 0 : index
    %35 = vector.load %arg9[%c0_16, %c0_17] : memref<128x4xf32, #tpu.memory_space<vmem>>, vector<128x4xf32>
    %cst_18 = arith.constant dense<0.000000e+00> : vector<128x4xf32>
    %36 = tpu.matmul %34, %35, %cst_18 {dimension_numbers = #tpu.dot_dimension_numbers<[1], [0], [0], [1], [0, 0, 1, 1], [], []>} : vector<128x128xf32>, vector<128x4xf32>, vector<128x4xf32> -> vector<128x4xf32>
    %c128_i32 = arith.constant 128 : i32
    %37 = arith.muli %arg0, %c128_i32 : i32
    %38 = tpu.iota {dimensions = array<i32: 0>} : vector<128x1xi32>
    %39 = vector.broadcast %37 : i32 to vector<128x1xi32>
    %40 = arith.addi %39, %38 : vector<128x1xi32>
    %c200_i32 = arith.constant 200 : i32
    %41 = vector.broadcast %c200_i32 : i32 to vector<128x1xi32>
    %42 = arith.cmpi slt, %40, %41 : vector<128x1xi32>
    %cst_19 = arith.constant -1.000000e+30 : f32
    %43 = vector.shape_cast %42 : vector<128x1xi1> to vector<128x1xi1>
    %44 = vector.broadcast %43 : vector<128x1xi1> to vector<128x4xi1>
    %45 = vector.broadcast %cst_19 : f32 to vector<128x4xf32>
    %46 = arith.select %44, %36, %45 : vector<128x4xi1>, vector<128x4xf32>
    %c0_20 = arith.constant 0 : index
    %c0_21 = arith.constant 0 : index
    %47 = vector.load %arg20[%c0_20, %c0_21] : memref<1x4xf32, #tpu.memory_space<vmem>>, vector<1x4xf32>
    %cst_22 = arith.constant dense<0xFF800000> : vector<4xf32>
    %48 = vector.multi_reduction <maximumf>, %46, %cst_22 [0] : vector<128x4xf32> to vector<4xf32>
    %49 = vector.shape_cast %48 : vector<4xf32> to vector<1x4xf32>
    %50 = arith.maximumf %47, %49 : vector<1x4xf32>
    %c0_23 = arith.constant 0 : index
    %c0_24 = arith.constant 0 : index
    %51 = vector.load %arg20[%c0_23, %c0_24] : memref<1x4xf32, #tpu.memory_space<vmem>>, vector<1x4xf32>
    %52 = arith.subf %51, %50 : vector<1x4xf32>
    %53 = math.exp %52 : vector<1x4xf32>
    %54 = vector.broadcast %50 : vector<1x4xf32> to vector<128x4xf32>
    %55 = arith.subf %46, %54 : vector<128x4xf32>
    %56 = math.exp %55 : vector<128x4xf32>
    %57 = arith.extui %42 : vector<128x1xi1> to vector<128x1xi32>
    %58 = arith.sitofp %57 : vector<128x1xi32> to vector<128x1xf32>
    %59 = vector.broadcast %58 : vector<128x1xf32> to vector<128x4xf32>
    %60 = arith.mulf %56, %59 : vector<128x4xf32>
    %c0_25 = arith.constant 0 : index
    %c0_26 = arith.constant 0 : index
    %61 = vector.load %arg9[%c0_25, %c0_26] : memref<128x4xf32, #tpu.memory_space<vmem>>, vector<128x4xf32>
    %cst_27 = arith.constant dense<0.000000e+00> : vector<128x128xf32>
    %62 = tpu.matmul %60, %61, %cst_27 {dimension_numbers = #tpu.dot_dimension_numbers<[1], [1], [0], [0], [0, 0, 1, 0], [], []>} : vector<128x4xf32>, vector<128x4xf32>, vector<128x128xf32> -> vector<128x128xf32>
    %c0_28 = arith.constant 0 : index
    %c0_29 = arith.constant 0 : index
    %63 = vector.load %arg18[%c0_28, %c0_29] : memref<128x128xf32, #tpu.memory_space<vmem>>, vector<128x128xf32>
    %c0_30 = arith.constant 0 : index
    %c0_31 = arith.constant 0 : index
    %64 = vector.load %arg9[%c0_30, %c0_31] : memref<128x4xf32, #tpu.memory_space<vmem>>, vector<128x4xf32>
    %cst_32 = arith.constant dense<0.000000e+00> : vector<1x128xf32>
    %65 = tpu.matmul %53, %64, %cst_32 {dimension_numbers = #tpu.dot_dimension_numbers<[1], [1], [0], [0], [0, 0, 1, 0], [], []>} : vector<1x4xf32>, vector<128x4xf32>, vector<1x128xf32> -> vector<1x128xf32>
    %66 = vector.broadcast %65 : vector<1x128xf32> to vector<128x128xf32>
    %67 = arith.mulf %63, %66 : vector<128x128xf32>
    %68 = arith.mulf %62, %33 : vector<128x128xf32>
    %cst_33 = arith.constant dense<0.000000e+00> : vector<128x128xf32>
    %69 = tpu.matmul %22, %68, %cst_33 {dimension_numbers = #tpu.dot_dimension_numbers<[1], [0], [0], [1], [0, 0, 1, 1], [], []>} : vector<128x128xf32>, vector<128x128xf32>, vector<128x128xf32> -> vector<128x128xf32>
    %70 = arith.addf %67, %69 : vector<128x128xf32>
    %c0_34 = arith.constant 0 : index
    %c0_35 = arith.constant 0 : index
    %71 = vector.load %arg18[%c0_34, %c0_35] : memref<128x128xf32, #tpu.memory_space<vmem>>, vector<128x128xf32>
    tpu.vector_store %arg18[%c0_34, %c0_35], %70 {strides = array<i32>} : memref<128x128xf32, #tpu.memory_space<vmem>>, vector<128x128xf32>,
    %c0_36 = arith.constant 0 : index
    %c0_37 = arith.constant 0 : index
    %72 = vector.load %arg19[%c0_36, %c0_37] : memref<128x4xf32, #tpu.memory_space<vmem>>, vector<128x4xf32>
    %73 = vector.broadcast %53 : vector<1x4xf32> to vector<128x4xf32>
    %74 = arith.mulf %72, %73 : vector<128x4xf32>
    %cst_38 = arith.constant dense<0.000000e+00> : vector<128x4xf32>
    %75 = tpu.matmul %22, %60, %cst_38 {dimension_numbers = #tpu.dot_dimension_numbers<[1], [0], [0], [1], [0, 0, 1, 1], [], []>} : vector<128x128xf32>, vector<128x4xf32>, vector<128x4xf32> -> vector<128x4xf32>
    %76 = arith.addf %74, %75 : vector<128x4xf32>
    %c0_39 = arith.constant 0 : index
    %c0_40 = arith.constant 0 : index
    %77 = vector.load %arg19[%c0_39, %c0_40] : memref<128x4xf32, #tpu.memory_space<vmem>>, vector<128x4xf32>
    tpu.vector_store %arg19[%c0_39, %c0_40], %76 {strides = array<i32>} : memref<128x4xf32, #tpu.memory_space<vmem>>, vector<128x4xf32>,
    %c0_41 = arith.constant 0 : index
    %c0_42 = arith.constant 0 : index
    %78 = vector.load %arg20[%c0_41, %c0_42] : memref<1x4xf32, #tpu.memory_space<vmem>>, vector<1x4xf32>
    tpu.vector_store %arg20[%c0_41, %c0_42], %50 {strides = array<i32>} : memref<1x4xf32, #tpu.memory_space<vmem>>, vector<1x4xf32>,
    %c1_i32 = arith.constant 1 : i32
    %79 = arith.cmpi eq, %arg0, %c1_i32 : i32
    %80 = arith.extui %79 : i1 to i32
    %c0_i32_43 = arith.constant 0 : i32
    %81 = arith.cmpi ne, %80, %c0_i32_43 : i32
    scf.if %81 {
      %c0_44 = arith.constant 0 : index
      %c0_45 = arith.constant 0 : index
      %82 = vector.load %arg19[%c0_44, %c0_45] : memref<128x4xf32, #tpu.memory_space<vmem>>, vector<128x4xf32>
      %c0_46 = arith.constant 0 : index
      %c0_47 = arith.constant 0 : index
      %83 = vector.load %arg9[%c0_46, %c0_47] : memref<128x4xf32, #tpu.memory_space<vmem>>, vector<128x4xf32>
      %cst_48 = arith.constant dense<0.000000e+00> : vector<128x128xf32>
      %84 = tpu.matmul %82, %83, %cst_48 {dimension_numbers = #tpu.dot_dimension_numbers<[1], [1], [0], [0], [0, 0, 1, 0], [], []>} : vector<128x4xf32>, vector<128x4xf32>, vector<128x128xf32> -> vector<128x128xf32>
      %cst_49 = arith.constant 0.000000e+00 : f32
      %85 = vector.broadcast %cst_49 : f32 to vector<128x128xf32>
      %86 = arith.cmpf ogt, %84, %85 : vector<128x128xf32>
      %cst_50 = arith.constant 1.000000e+00 : f32
      %87 = vector.broadcast %cst_50 : f32 to vector<128x128xf32>
      %88 = arith.select %86, %84, %87 : vector<128x128xi1>, vector<128x128xf32>
      %c0_51 = arith.constant 0 : index
      %c0_52 = arith.constant 0 : index
      %89 = vector.load %arg18[%c0_51, %c0_52] : memref<128x128xf32, #tpu.memory_space<vmem>>, vector<128x128xf32>
      %90 = arith.divf %89, %88 : vector<128x128xf32>
      %c0_53 = arith.constant 0 : index
      %c0_54 = arith.constant 0 : index
      %91 = vector.load %arg10[%c0_53, %c0_54] : memref<128x32xf32, #tpu.memory_space<vmem>>, vector<128x32xf32>
      %cst_55 = arith.constant dense<0.000000e+00> : vector<128x32xf32>
      %92 = tpu.matmul %90, %91, %cst_55 {dimension_numbers = #tpu.dot_dimension_numbers<[1], [0], [0], [1], [0, 0, 1, 1], [], []>} : vector<128x128xf32>, vector<128x32xf32>, vector<128x32xf32> -> vector<128x32xf32>
      %c0_56 = arith.constant 0 : index
      %c0_57 = arith.constant 0 : index
      %93 = vector.load %arg17[%c0_56, %c0_57] : memref<128x32xf32, #tpu.memory_space<vmem>>, vector<128x32xf32>
      %94 = arith.addf %92, %93 : vector<128x32xf32>
      %c0_58 = arith.constant 0 : index
      %c0_59 = arith.constant 0 : index
      %95 = vector.load %arg11[%c0_58, %c0_59] : memref<32x32xf32, #tpu.memory_space<vmem>>, vector<32x32xf32>
      %cst_60 = arith.constant dense<0.000000e+00> : vector<128x32xf32>
      %96 = tpu.matmul %94, %95, %cst_60 {dimension_numbers = #tpu.dot_dimension_numbers<[1], [0], [0], [1], [0, 0, 1, 1], [], []>} : vector<128x32xf32>, vector<32x32xf32>, vector<128x32xf32> -> vector<128x32xf32>
      %c0_61 = arith.constant 0 : index
      %c0_62 = arith.constant 0 : index
      %97 = vector.load %arg12[%c0_61, %c0_62] : memref<32x32xf32, #tpu.memory_space<vmem>>, vector<32x32xf32>
      %cst_63 = arith.constant dense<0.000000e+00> : vector<128x32xf32>
      %98 = tpu.matmul %94, %97, %cst_63 {dimension_numbers = #tpu.dot_dimension_numbers<[1], [0], [0], [1], [0, 0, 1, 1], [], []>} : vector<128x32xf32>, vector<32x32xf32>, vector<128x32xf32> -> vector<128x32xf32>
      %c0_64 = arith.constant 0 : index
      %c0_65 = arith.constant 0 : index
      %99 = vector.load %arg13[%c0_64, %c0_65] : memref<1x32xf32, #tpu.memory_space<vmem>>, vector<1x32xf32>
      %100 = vector.broadcast %99 : vector<1x32xf32> to vector<128x32xf32>
      %101 = arith.addf %98, %100 : vector<128x32xf32>
      %102 = tpu.concatenate %96, %101 in 0 : vector<128x32xf32>, vector<128x32xf32> -> vector<256x32xf32>
      %c0_66 = arith.constant 0 : index
      %c0_67 = arith.constant 0 : index
      %103 = vector.load %arg14[%c0_66, %c0_67] : memref<256x32xf32, #tpu.memory_space<vmem>>, vector<256x32xf32>
      tpu.vector_store %arg14[%c0_66, %c0_67], %102 {strides = array<i32>} : memref<256x32xf32, #tpu.memory_space<vmem>>, vector<256x32xf32>,
    } else {
    }
    return
  }
  func.func @transform_0(%arg0: i32) -> (i32, i32) {
    %c0_i32 = arith.constant 0 : i32
    %c0_i32_0 = arith.constant 0 : i32
    %c0_i32_1 = arith.constant 0 : i32
    return %c0_i32, %c0_i32_0 : i32, i32
  }
  func.func @transform_1(%arg0: i32) -> (i32, i32) {
    %c0_i32 = arith.constant 0 : i32
    %c0_i32_0 = arith.constant 0 : i32
    return %arg0, %c0_i32 : i32, i32
  }
  func.func @transform_2(%arg0: i32) -> (i32, i32) {
    %c0_i32 = arith.constant 0 : i32
    %c0_i32_0 = arith.constant 0 : i32
    return %arg0, %c0_i32 : i32, i32
  }
  func.func @transform_3(%arg0: i32) -> (i32, i32) {
    %c0_i32 = arith.constant 0 : i32
    %c0_i32_0 = arith.constant 0 : i32
    return %arg0, %c0_i32 : i32, i32
  }
  func.func @transform_4(%arg0: i32) -> (i32, i32) {
    %c0_i32 = arith.constant 0 : i32
    %c0_i32_0 = arith.constant 0 : i32
    return %c0_i32, %arg0 : i32, i32
  }
  func.func @transform_5(%arg0: i32) -> (i32, i32) {
    %c0_i32 = arith.constant 0 : i32
    %c0_i32_0 = arith.constant 0 : i32
    %c0_i32_1 = arith.constant 0 : i32
    return %c0_i32, %c0_i32_0 : i32, i32
  }
  func.func @transform_6(%arg0: i32) -> (i32, i32) {
    %c0_i32 = arith.constant 0 : i32
    %c0_i32_0 = arith.constant 0 : i32
    %c0_i32_1 = arith.constant 0 : i32
    return %c0_i32, %c0_i32_0 : i32, i32
  }
  func.func @transform_7(%arg0: i32) -> (i32, i32) {
    %c0_i32 = arith.constant 0 : i32
    %c0_i32_0 = arith.constant 0 : i32
    %c0_i32_1 = arith.constant 0 : i32
    return %c0_i32, %c0_i32_0 : i32, i32
  }
  func.func @transform_8(%arg0: i32) -> (i32, i32) {
    %c0_i32 = arith.constant 0 : i32
    %c0_i32_0 = arith.constant 0 : i32
    %c0_i32_1 = arith.constant 0 : i32
    return %c0_i32, %c0_i32_0 : i32, i32
  }
  func.func @transform_9(%arg0: i32) -> (i32, i32) {
    %c0_i32 = arith.constant 0 : i32
    %c0_i32_0 = arith.constant 0 : i32
    %c0_i32_1 = arith.constant 0 : i32
    return %c0_i32, %c0_i32_0 : i32, i32
  }
  func.func @transform_10(%arg0: i32) -> (i32, i32) {
    %c0_i32 = arith.constant 0 : i32
    %c0_i32_0 = arith.constant 0 : i32
    %c0_i32_1 = arith.constant 0 : i32
    return %c0_i32, %c0_i32_0 : i32, i32
  }
  func.func @transform_11(%arg0: i32) -> (i32, i32) {
    %c0_i32 = arith.constant 0 : i32
    %c0_i32_0 = arith.constant 0 : i32
    %c0_i32_1 = arith.constant 0 : i32
    return %c0_i32, %c0_i32_0 : i32, i32
  }
  func.func @transform_12(%arg0: i32) -> (i32, i32) {
    %c0_i32 = arith.constant 0 : i32
    %c0_i32_0 = arith.constant 0 : i32
    %c0_i32_1 = arith.constant 0 : i32
    return %c0_i32, %c0_i32_0 : i32, i32
  }
  func.func @transform_13(%arg0: i32) -> (i32, i32) {
    %c0_i32 = arith.constant 0 : i32
    %c0_i32_0 = arith.constant 0 : i32
    %c0_i32_1 = arith.constant 0 : i32
    return %c0_i32, %c0_i32_0 : i32, i32
  }
}

</mosaic_0001>

<llo_original>
// kernel: tpu_custom_call.1
$region0: #{tpu_custom_call.1}
  #allocation0 [shape = 'u32[]', space=smem, size = 0x4, offset = 0x4, fixed_abs, tag = 'smem constant byte address 0x4 - core index']
  #allocation1 [shape = 'u32[144,128]{1,0:T(1,128)}', space=vmem, size = 0x12000, scoped, tag = 'internal scratch']
  #allocation2 [shape = 'f32[128,128]{1,0:T(8,128)}', space=vmem, size = 0x10000, scoped, tag = 'scratch operand']
  #allocation3 [shape = 'f32[128,256]{1,0:T(8,128)}', space=vmem, size = 0x20000, scoped, tag = 'scratch operand']
  #allocation4 [shape = 'f32[128,32]{1,0:T(8,128)}', space=vmem, size = 0x10000, scoped, tag = 'scratch operand']
  #allocation5 [shape = 'f32[128,128]{1,0:T(8,128)}', space=vmem, size = 0x10000, scoped, tag = 'scratch operand']
  #allocation6 [shape = 'f32[128,4]{1,0:T(8,128)}', space=vmem, size = 0x10000, scoped, tag = 'scratch operand']
  #allocation7 [shape = 'f32[1,4]{1,0:T(1,128)}', space=vmem, size = 0x200, scoped, tag = 'scratch operand']
  %s0 = inlined_call_operand.vmem [shape: f32[128,4], index: 0, kind: input, shape index: {}]
  %s1 = inlined_call_operand.vmem [shape: f32[256,6], index: 1, kind: input, shape index: {}]
  %s2 = inlined_call_operand.vmem [shape: s32[256,1], index: 2, kind: input, shape index: {}]
  %s3 = inlined_call_operand.vmem [shape: s32[256,1], index: 3, kind: input, shape index: {}]
  %s4 = inlined_call_operand.vmem [shape: s32[1,256], index: 4, kind: input, shape index: {}]
  %s5 = inlined_call_operand.vmem [shape: f32[4,416], index: 5, kind: input, shape index: {}]
  %s6 = inlined_call_operand.vmem [shape: f32[1,416], index: 6, kind: input, shape index: {}]
  %s7 = inlined_call_operand.vmem [shape: f32[6,128], index: 7, kind: input, shape index: {}]
  %s8 = inlined_call_operand.vmem [shape: f32[128,4], index: 8, kind: input, shape index: {}]
  %s9 = inlined_call_operand.vmem [shape: f32[128,32], index: 9, kind: input, shape index: {}]
  %s10 = inlined_call_operand.vmem [shape: f32[32,32], index: 10, kind: input, shape index: {}]
  %s11 = inlined_call_operand.vmem [shape: f32[32,32], index: 11, kind: input, shape index: {}]
  %s12 = inlined_call_operand.vmem [shape: f32[1,32], index: 12, kind: input, shape index: {}]
  %s13 = inlined_call_operand.vmem [shape: f32[256,32], index: 13, kind: output, shape index: {}]
  %s14 = sld [smem:[#allocation0]]
  $region93: #{tpu_custom_call.1} parent=0
    _
  %s16 = ssub.s32 1, %s14
  %s17 = scalar_select 0, %s16, %s14
  loop: start=0, step=1, limit=4
  $region2: #{tpu_custom_call.1} parent=0 // loop_pre_header
    _
  $region3: #{tpu_custom_call.1} parent=0 // loop_header
    %s19 = sphi 0, %s23
    %p20 = scmp.ge.s32.totalorder %s19, 4
    %s27 = sphi 0, %s27
    %s29 = sphi 0, %s27
    %s30 = sphi 0, %s29
    %s44 = sphi 0, %s30
    %s50 = sphi 0, %s52
    %s53 = sphi 0, %s50
    %s54 = sphi 0, %s53
    %s70 = sphi 0, %s54
    %s76 = sphi 0, %s78
    %s79 = sphi 0, %s76
    %s80 = sphi 0, %s79
    %s96 = sphi 0, %s80
    %s102 = sphi 0, %s104
    %s105 = sphi 0, %s102
    %s106 = sphi 0, %s105
    %s122 = sphi 0, %s106
    %s128 = sphi 0, %s130
    %s131 = sphi 0, %s128
    %s132 = sphi 0, %s131
    %s148 = sphi 0, %s132
    %s152 = sphi 0, %s152
    %s154 = sphi 0, %s152
    %s155 = sphi 0, %s154
    %s169 = sphi 0, %s155
    %s173 = sphi 0, %s173
    %s175 = sphi 0, %s173
    %s176 = sphi 0, %s175
    %s190 = sphi 0, %s176
    %s194 = sphi 0, %s194
    %s196 = sphi 0, %s194
    %s197 = sphi 0, %s196
    %s211 = sphi 0, %s197
    %s215 = sphi 0, %s215
    %s217 = sphi 0, %s215
    %s218 = sphi 0, %s217
    %s232 = sphi 0, %s218
    %s236 = sphi 0, %s236
    %s238 = sphi 0, %s236
    %s239 = sphi 0, %s238
    %s253 = sphi 0, %s239
    %s257 = sphi 0, %s257
    %s259 = sphi 0, %s257
    %s260 = sphi 0, %s259
    %s274 = sphi 0, %s260
    %s278 = sphi 0, %s278
    %s280 = sphi 0, %s278
    %s281 = sphi 0, %s280
    %s295 = sphi 0, %s281
    %s299 = sphi 0, %s299
    %s301 = sphi 0, %s299
    %s302 = sphi 0, %s301
    %s316 = sphi 0, %s302
    %s320 = sphi 0, %s320
    %s322 = sphi 0, %s320
    %s323 = sphi 0, %s322
    %s337 = sphi 0, %s323
  $region4: #{tpu_custom_call.1} parent=0 // loop_header_branch
    %22 = sbr.rel (%p20) target = $region8
  $region5: #{tpu_custom_call.1} parent=0 // loop_body
    %s24 = ssub.s32 %s19, 1
    %s25 = ssub.s32 %s19, 2
    %s26 = sadd.s32 %s19, 1
    %s28 = sadd.s32 %s27, 1
    %p31 = scmp.eq.s32.totalorder %s19, 1
    %p32 = scmp.ne.s32.totalorder %s27, %s29
    %p33 = scmp.eq.s32.totalorder %s19, 0
    %p34 = por %p32, %p33
    %p35 = scmp.ne.s32.totalorder %s27, %s29
    %p36 = scmp.eq.s32.totalorder %s24, 1
    %p37 = por %p35, %p36
    %p38 = scmp.ne.s32.totalorder %s29, %s30
    %p39 = scmp.eq.s32.totalorder %s24, 0
    %p40 = por %p38, %p39
    %p41 = scmp.ne.s32.totalorder %s29, %s30
    %p42 = scmp.eq.s32.totalorder %s25, 1
    %p43 = por %p41, %p42
    %p45 = scmp.ne.s32.totalorder %s30, %s44
    %p46 = scmp.eq.s32.totalorder %s25, 0
    %p47 = por %p45, %p46
    %s48 = ssub.s32 %s19, %s26
    %p49 = scmp.eq.s32.totalorder %s48, 0
    %s51 = sadd.s32 %s50, 1
    %s52 = scalar_select %p49, %s50, %s51
    %p55 = pneg %p49
    %p56 = scmp.eq.s32.totalorder %s19, 1
    %p57 = por %p55, %p56
    %p58 = scmp.ne.s32.totalorder %s50, %s53
    %p59 = scmp.eq.s32.totalorder %s19, 0
    %p60 = por %p58, %p59
    %p61 = scmp.ne.s32.totalorder %s50, %s53
    %p62 = scmp.eq.s32.totalorder %s24, 1
    %p63 = por %p61, %p62
    %p64 = scmp.ne.s32.totalorder %s53, %s54
    %p65 = scmp.eq.s32.totalorder %s24, 0
    %p66 = por %p64, %p65
    %p67 = scmp.ne.s32.totalorder %s53, %s54
    %p68 = scmp.eq.s32.totalorder %s25, 1
    %p69 = por %p67, %p68
    %p71 = scmp.ne.s32.totalorder %s54, %s70
    %p72 = scmp.eq.s32.totalorder %s25, 0
    %p73 = por %p71, %p72
    %s74 = ssub.s32 %s19, %s26
    %p75 = scmp.eq.s32.totalorder %s74, 0
    %s77 = sadd.s32 %s76, 1
    %s78 = scalar_select %p75, %s76, %s77
    %p81 = pneg %p75
    %p82 = scmp.eq.s32.totalorder %s19, 1
    %p83 = por %p81, %p82
    %p84 = scmp.ne.s32.totalorder %s76, %s79
    %p85 = scmp.eq.s32.totalorder %s19, 0
    %p86 = por %p84, %p85
    %p87 = scmp.ne.s32.totalorder %s76, %s79
    %p88 = scmp.eq.s32.totalorder %s24, 1
    %p89 = por %p87, %p88
    %p90 = scmp.ne.s32.totalorder %s79, %s80
    %p91 = scmp.eq.s32.totalorder %s24, 0
    %p92 = por %p90, %p91
    %p93 = scmp.ne.s32.totalorder %s79, %s80
    %p94 = scmp.eq.s32.totalorder %s25, 1
    %p95 = por %p93, %p94
    %p97 = scmp.ne.s32.totalorder %s80, %s96
    %p98 = scmp.eq.s32.totalorder %s25, 0
    %p99 = por %p97, %p98
    %s100 = ssub.s32 %s19, %s26
    %p101 = scmp.eq.s32.totalorder %s100, 0
    %s103 = sadd.s32 %s102, 1
    %s104 = scalar_select %p101, %s102, %s103
    %p107 = pneg %p101
    %p108 = scmp.eq.s32.totalorder %s19, 1
    %p109 = por %p107, %p108
    %p110 = scmp.ne.s32.totalorder %s102, %s105
    %p111 = scmp.eq.s32.totalorder %s19, 0
    %p112 = por %p110, %p111
    %p113 = scmp.ne.s32.totalorder %s102, %s105
    %p114 = scmp.eq.s32.totalorder %s24, 1
    %p115 = por %p113, %p114
    %p116 = scmp.ne.s32.totalorder %s105, %s106
    %p117 = scmp.eq.s32.totalorder %s24, 0
    %p118 = por %p116, %p117
    %p119 = scmp.ne.s32.totalorder %s105, %s106
    %p120 = scmp.eq.s32.totalorder %s25, 1
    %p121 = por %p119, %p120
    %p123 = scmp.ne.s32.totalorder %s106, %s122
    %p124 = scmp.eq.s32.totalorder %s25, 0
    %p125 = por %p123, %p124
    %s126 = ssub.s32 %s19, %s26
    %p127 = scmp.eq.s32.totalorder %s126, 0
    %s129 = sadd.s32 %s128, 1
    %s130 = scalar_select %p127, %s128, %s129
    %p133 = pneg %p127
    %p134 = scmp.eq.s32.totalorder %s19, 1
    %p135 = por %p133, %p134
    %p136 = scmp.ne.s32.totalorder %s128, %s131
    %p137 = scmp.eq.s32.totalorder %s19, 0
    %p138 = por %p136, %p137
    %p139 = scmp.ne.s32.totalorder %s128, %s131
    %p140 = scmp.eq.s32.totalorder %s24, 1
    %p141 = por %p139, %p140
    %p142 = scmp.ne.s32.totalorder %s131, %s132
    %p143 = scmp.eq.s32.totalorder %s24, 0
    %p144 = por %p142, %p143
    %p145 = scmp.ne.s32.totalorder %s131, %s132
    %p146 = scmp.eq.s32.totalorder %s25, 1
    %p147 = por %p145, %p146
    %p149 = scmp.ne.s32.totalorder %s132, %s148
    %p150 = scmp.eq.s32.totalorder %s25, 0
    %p151 = por %p149, %p150
    %s153 = sadd.s32 %s152, 1
    %p156 = scmp.eq.s32.totalorder %s19, 1
    %p157 = scmp.ne.s32.totalorder %s152, %s154
    %p158 = scmp.eq.s32.totalorder %s19, 0
    %p159 = por %p157, %p158
    %p160 = scmp.ne.s32.totalorder %s152, %s154
    %p161 = scmp.eq.s32.totalorder %s24, 1
    %p162 = por %p160, %p161
    %p163 = scmp.ne.s32.totalorder %s154, %s155
    %p164 = scmp.eq.s32.totalorder %s24, 0
    %p165 = por %p163, %p164
    %p166 = scmp.ne.s32.totalorder %s154, %s155
    %p167 = scmp.eq.s32.totalorder %s25, 1
    %p168 = por %p166, %p167
    %p170 = scmp.ne.s32.totalorder %s155, %s169
    %p171 = scmp.eq.s32.totalorder %s25, 0
    %p172 = por %p170, %p171
    %s174 = sadd.s32 %s173, 1
    %p177 = scmp.eq.s32.totalorder %s19, 1
    %p178 = scmp.ne.s32.totalorder %s173, %s175
    %p179 = scmp.eq.s32.totalorder %s19, 0
    %p180 = por %p178, %p179
    %p181 = scmp.ne.s32.totalorder %s173, %s175
    %p182 = scmp.eq.s32.totalorder %s24, 1
    %p183 = por %p181, %p182
    %p184 = scmp.ne.s32.totalorder %s175, %s176
    %p185 = scmp.eq.s32.totalorder %s24, 0
    %p186 = por %p184, %p185
    %p187 = scmp.ne.s32.totalorder %s175, %s176
    %p188 = scmp.eq.s32.totalorder %s25, 1
    %p189 = por %p187, %p188
    %p191 = scmp.ne.s32.totalorder %s176, %s190
    %p192 = scmp.eq.s32.totalorder %s25, 0
    %p193 = por %p191, %p192
    %s195 = sadd.s32 %s194, 1
    %p198 = scmp.eq.s32.totalorder %s19, 1
    %p199 = scmp.ne.s32.totalorder %s194, %s196
    %p200 = scmp.eq.s32.totalorder %s19, 0
    %p201 = por %p199, %p200
    %p202 = scmp.ne.s32.totalorder %s194, %s196
    %p203 = scmp.eq.s32.totalorder %s24, 1
    %p204 = por %p202, %p203
    %p205 = scmp.ne.s32.totalorder %s196, %s197
    %p206 = scmp.eq.s32.totalorder %s24, 0
    %p207 = por %p205, %p206
    %p208 = scmp.ne.s32.totalorder %s196, %s197
    %p209 = scmp.eq.s32.totalorder %s25, 1
    %p210 = por %p208, %p209
    %p212 = scmp.ne.s32.totalorder %s197, %s211
    %p213 = scmp.eq.s32.totalorder %s25, 0
    %p214 = por %p212, %p213
    %s216 = sadd.s32 %s215, 1
    %p219 = scmp.eq.s32.totalorder %s19, 1
    %p220 = scmp.ne.s32.totalorder %s215, %s217
    %p221 = scmp.eq.s32.totalorder %s19, 0
    %p222 = por %p220, %p221
    %p223 = scmp.ne.s32.totalorder %s215, %s217
    %p224 = scmp.eq.s32.totalorder %s24, 1
    %p225 = por %p223, %p224
    %p226 = scmp.ne.s32.totalorder %s217, %s218
    %p227 = scmp.eq.s32.totalorder %s24, 0
    %p228 = por %p226, %p227
    %p229 = scmp.ne.s32.totalorder %s217, %s218
    %p230 = scmp.eq.s32.totalorder %s25, 1
    %p231 = por %p229, %p230
    %p233 = scmp.ne.s32.totalorder %s218, %s232
    %p234 = scmp.eq.s32.totalorder %s25, 0
    %p235 = por %p233, %p234
    %s237 = sadd.s32 %s236, 1
    %p240 = scmp.eq.s32.totalorder %s19, 1
    %p241 = scmp.ne.s32.totalorder %s236, %s238
    %p242 = scmp.eq.s32.totalorder %s19, 0
    %p243 = por %p241, %p242
    %p244 = scmp.ne.s32.totalorder %s236, %s238
    %p245 = scmp.eq.s32.totalorder %s24, 1
    %p246 = por %p244, %p245
    %p247 = scmp.ne.s32.totalorder %s238, %s239
    %p248 = scmp.eq.s32.totalorder %s24, 0
    %p249 = por %p247, %p248
    %p250 = scmp.ne.s32.totalorder %s238, %s239
    %p251 = scmp.eq.s32.totalorder %s25, 1
    %p252 = por %p250, %p251
    %p254 = scmp.ne.s32.totalorder %s239, %s253
    %p255 = scmp.eq.s32.totalorder %s25, 0
    %p256 = por %p254, %p255
    %s258 = sadd.s32 %s257, 1
    %p261 = scmp.eq.s32.totalorder %s19, 1
    %p262 = scmp.ne.s32.totalorder %s257, %s259
    %p263 = scmp.eq.s32.totalorder %s19, 0
    %p264 = por %p262, %p263
    %p265 = scmp.ne.s32.totalorder %s257, %s259
    %p266 = scmp.eq.s32.totalorder %s24, 1
    %p267 = por %p265, %p266
    %p268 = scmp.ne.s32.totalorder %s259, %s260
    %p269 = scmp.eq.s32.totalorder %s24, 0
    %p270 = por %p268, %p269
    %p271 = scmp.ne.s32.totalorder %s259, %s260
    %p272 = scmp.eq.s32.totalorder %s25, 1
    %p273 = por %p271, %p272
    %p275 = scmp.ne.s32.totalorder %s260, %s274
    %p276 = scmp.eq.s32.totalorder %s25, 0
    %p277 = por %p275, %p276
    %s279 = sadd.s32 %s278, 1
    %p282 = scmp.eq.s32.totalorder %s19, 1
    %p283 = scmp.ne.s32.totalorder %s278, %s280
    %p284 = scmp.eq.s32.totalorder %s19, 0
    %p285 = por %p283, %p284
    %p286 = scmp.ne.s32.totalorder %s278, %s280
    %p287 = scmp.eq.s32.totalorder %s24, 1
    %p288 = por %p286, %p287
    %p289 = scmp.ne.s32.totalorder %s280, %s281
    %p290 = scmp.eq.s32.totalorder %s24, 0
    %p291 = por %p289, %p290
    %p292 = scmp.ne.s32.totalorder %s280, %s281
    %p293 = scmp.eq.s32.totalorder %s25, 1
    %p294 = por %p292, %p293
    %p296 = scmp.ne.s32.totalorder %s281, %s295
    %p297 = scmp.eq.s32.totalorder %s25, 0
    %p298 = por %p296, %p297
    %s300 = sadd.s32 %s299, 1
    %p303 = scmp.eq.s32.totalorder %s19, 1
    %p304 = scmp.ne.s32.totalorder %s299, %s301
    %p305 = scmp.eq.s32.totalorder %s19, 0
    %p306 = por %p304, %p305
    %p307 = scmp.ne.s32.totalorder %s299, %s301
    %p308 = scmp.eq.s32.totalorder %s24, 1
    %p309 = por %p307, %p308
    %p310 = scmp.ne.s32.totalorder %s301, %s302
    %p311 = scmp.eq.s32.totalorder %s24, 0
    %p312 = por %p310, %p311
    %p313 = scmp.ne.s32.totalorder %s301, %s302
    %p314 = scmp.eq.s32.totalorder %s25, 1
    %p315 = por %p313, %p314
    %p317 = scmp.ne.s32.totalorder %s302, %s316
    %p318 = scmp.eq.s32.totalorder %s25, 0
    %p319 = por %p317, %p318
    %s321 = sadd.s32 %s320, 1
    %p324 = scmp.eq.s32.totalorder %s19, 1
    %p325 = scmp.ne.s32.totalorder %s320, %s322
    %p326 = scmp.eq.s32.totalorder %s19, 0
    %p327 = por %p325, %p326
    %p328 = scmp.ne.s32.totalorder %s320, %s322
    %p329 = scmp.eq.s32.totalorder %s24, 1
    %p330 = por %p328, %p329
    %p331 = scmp.ne.s32.totalorder %s322, %s323
    %p332 = scmp.eq.s32.totalorder %s24, 0
    %p333 = por %p331, %p332
    %p334 = scmp.ne.s32.totalorder %s322, %s323
    %p335 = scmp.eq.s32.totalorder %s25, 1
    %p336 = por %p334, %p335
    %p338 = scmp.ne.s32.totalorder %s323, %s337
    %p339 = scmp.eq.s32.totalorder %s25, 0
    %p340 = por %p338, %p339
    %p341 = scmp.le.s32.totalorder 1, %s19
    %p342 = scmp.lt.s32.totalorder %s19, 3
    %p343 = pnand %p341, %p342
    %p344 = pneg %p343
    // Predicated region
    $region9: #{tpu_custom_call.1} parent=5 // pred_check
      _
    $region10: #{tpu_custom_call.1} parent=5 // pred_check_branch
      %346 = sbr.rel (%p343) target = $region12
    $region11: #{tpu_custom_call.1} parent=5 // pred_region
      %s347 = ssub.s32 %s19, 1
      // Predicated region
      $region13: #{tpu_custom_call.1} parent=11 // pred_check
        %p348 = pneg %p40
      $region14: #{tpu_custom_call.1} parent=11 // pred_check_branch
        %350 = sbr.rel (%p348) target = $region16
      $region15: #{tpu_custom_call.1} parent=11 // pred_region
        _
      $region16: #{tpu_custom_call.1} parent=11 // pred_fallthru
        _
      // Predicated region
      $region17: #{tpu_custom_call.1} parent=11 // pred_check
        %p351 = pneg %p165
      $region18: #{tpu_custom_call.1} parent=11 // pred_check_branch
        %353 = sbr.rel (%p351) target = $region20
      $region19: #{tpu_custom_call.1} parent=11 // pred_region
        _
      $region20: #{tpu_custom_call.1} parent=11 // pred_fallthru
        _
      // Predicated region
      $region21: #{tpu_custom_call.1} parent=11 // pred_check
        %p354 = pneg %p186
      $region22: #{tpu_custom_call.1} parent=11 // pred_check_branch
        %356 = sbr.rel (%p354) target = $region24
      $region23: #{tpu_custom_call.1} parent=11 // pred_region
        _
      $region24: #{tpu_custom_call.1} parent=11 // pred_fallthru
        _
      // Predicated region
      $region25: #{tpu_custom_call.1} parent=11 // pred_check
        %p357 = pneg %p207
      $region26: #{tpu_custom_call.1} parent=11 // pred_check_branch
        %359 = sbr.rel (%p357) target = $region28
      $region27: #{tpu_custom_call.1} parent=11 // pred_region
        _
      $region28: #{tpu_custom_call.1} parent=11 // pred_fallthru
        _
      // Predicated region
      $region29: #{tpu_custom_call.1} parent=11 // pred_check
        %p360 = pneg %p228
      $region30: #{tpu_custom_call.1} parent=11 // pred_check_branch
        %362 = sbr.rel (%p360) target = $region32
      $region31: #{tpu_custom_call.1} parent=11 // pred_region
        _
      $region32: #{tpu_custom_call.1} parent=11 // pred_fallthru
        _
      // Predicated region
      $region33: #{tpu_custom_call.1} parent=11 // pred_check
        %p363 = pneg %p249
      $region34: #{tpu_custom_call.1} parent=11 // pred_check_branch
        %365 = sbr.rel (%p363) target = $region36
      $region35: #{tpu_custom_call.1} parent=11 // pred_region
        _
      $region36: #{tpu_custom_call.1} parent=11 // pred_fallthru
        _
      // Predicated region
      $region37: #{tpu_custom_call.1} parent=11 // pred_check
        %p366 = pneg %p270
      $region38: #{tpu_custom_call.1} parent=11 // pred_check_branch
        %368 = sbr.rel (%p366) target = $region40
      $region39: #{tpu_custom_call.1} parent=11 // pred_region
        _
      $region40: #{tpu_custom_call.1} parent=11 // pred_fallthru
        _
      // Predicated region
      $region41: #{tpu_custom_call.1} parent=11 // pred_check
        %p369 = pneg %p291
      $region42: #{tpu_custom_call.1} parent=11 // pred_check_branch
        %371 = sbr.rel (%p369) target = $region44
      $region43: #{tpu_custom_call.1} parent=11 // pred_region
        _
      $region44: #{tpu_custom_call.1} parent=11 // pred_fallthru
        _
      // Predicated region
      $region45: #{tpu_custom_call.1} parent=11 // pred_check
        %p372 = pneg %p312
      $region46: #{tpu_custom_call.1} parent=11 // pred_check_branch
        %374 = sbr.rel (%p372) target = $region48
      $region47: #{tpu_custom_call.1} parent=11 // pred_region
        _
      $region48: #{tpu_custom_call.1} parent=11 // pred_fallthru
        _
    $region12: #{tpu_custom_call.1} parent=5 // pred_fallthru
      _
    %p375 = scmp.lt.s32.totalorder %s19, 2
    // Predicated region
    $region49: #{tpu_custom_call.1} parent=5 // pred_check
      %p376 = pneg %p375
    $region50: #{tpu_custom_call.1} parent=5 // pred_check_branch
      %378 = sbr.rel (%p376) target = $region52
    $region51: #{tpu_custom_call.1} parent=5 // pred_region
      // Predicated region
      $region53: #{tpu_custom_call.1} parent=51 // pred_check
        %p379 = pneg %p60
      $region54: #{tpu_custom_call.1} parent=51 // pred_check_branch
        %381 = sbr.rel (%p379) target = $region56
      $region55: #{tpu_custom_call.1} parent=51 // pred_region
        %s382 = smul.u32 16, %s19
        %p383 = scmp.lt.s32.totalorder %s382, 31
        %s384 = scalar_select %p383, %s382, 31
        %s385 = smul.addr %s384, 8
        %s386 = scalar_lea.vmem %s1, %s385
        %s387 = smul.u32 16, %s19
      $region56: #{tpu_custom_call.1} parent=51 // pred_fallthru
        _
      // Predicated region
      $region57: #{tpu_custom_call.1} parent=51 // pred_check
        %p388 = pneg %p86
      $region58: #{tpu_custom_call.1} parent=51 // pred_check_branch
        %390 = sbr.rel (%p388) target = $region60
      $region59: #{tpu_custom_call.1} parent=51 // pred_region
        %s391 = smul.u32 16, %s19
        %p392 = scmp.lt.s32.totalorder %s391, 31
        %s393 = scalar_select %p392, %s391, 31
        %s394 = smul.addr %s393, 8
        %s395 = scalar_lea.vmem %s2, %s394
        %s396 = smul.u32 16, %s19
      $region60: #{tpu_custom_call.1} parent=51 // pred_fallthru
        _
      // Predicated region
      $region61: #{tpu_custom_call.1} parent=51 // pred_check
        %p397 = pneg %p112
      $region62: #{tpu_custom_call.1} parent=51 // pred_check_branch
        %399 = sbr.rel (%p397) target = $region64
      $region63: #{tpu_custom_call.1} parent=51 // pred_region
        %s400 = smul.u32 16, %s19
        %p401 = scmp.lt.s32.totalorder %s400, 31
        %s402 = scalar_select %p401, %s400, 31
        %s403 = smul.addr %s402, 8
        %s404 = scalar_lea.vmem %s3, %s403
        %s405 = smul.u32 16, %s19
      $region64: #{tpu_custom_call.1} parent=51 // pred_fallthru
        _
      // Predicated region
      $region65: #{tpu_custom_call.1} parent=51 // pred_check
        %p406 = pneg %p138
      $region66: #{tpu_custom_call.1} parent=51 // pred_check_branch
        %408 = sbr.rel (%p406) target = $region68
      $region67: #{tpu_custom_call.1} parent=51 // pred_region
        %p409 = scmp.lt.s32.totalorder %s19, 1
        %s410 = scalar_select %p409, %s19, 1
        %s411 = scalar_lea.vmem %s4, %s410
      $region68: #{tpu_custom_call.1} parent=51 // pred_fallthru
        _
    $region52: #{tpu_custom_call.1} parent=5 // pred_fallthru
      _
    %p412 = scmp.le.s32.totalorder 1, %s19
    %p413 = scmp.lt.s32.totalorder %s19, 3
    %p414 = pnand %p412, %p413
    %p415 = pneg %p414
    // Predicated region
    $region69: #{tpu_custom_call.1} parent=5 // pred_check
      _
    $region70: #{tpu_custom_call.1} parent=5 // pred_check_branch
      %417 = sbr.rel (%p414) target = $region72
    $region71: #{tpu_custom_call.1} parent=5 // pred_region
      %s418 = ssub.s32 %s19, 1
      %p419 = pneg %p40
      %p420 = pneg %p37
      %s421 = smul.u32 16, %s24
      %p422 = scmp.lt.s32.totalorder %s421, 31
      %s423 = scalar_select %p422, %s421, 31
      %s424 = smul.addr %s423, 8
      %s425 = scalar_lea.vmem %s1, %s424
      %p426 = pneg %p66
      %p427 = pneg %p63
      %s428 = smul.u32 16, %s24
      %p429 = scmp.lt.s32.totalorder %s428, 31
      %s430 = scalar_select %p429, %s428, 31
      %s431 = smul.addr %s430, 8
      %s432 = scalar_lea.vmem %s2, %s431
      %p433 = pneg %p92
      %p434 = pneg %p89
      %s435 = smul.u32 16, %s24
      %p436 = scmp.lt.s32.totalorder %s435, 31
      %s437 = scalar_select %p436, %s435, 31
      %s438 = smul.addr %s437, 8
      %s439 = scalar_lea.vmem %s3, %s438
      %p440 = pneg %p118
      %p441 = pneg %p115
      %p442 = scmp.lt.s32.totalorder %s24, 1
      %s443 = scalar_select %p442, %s24, 1
      %s444 = scalar_lea.vmem %s4, %s443
      %p445 = pneg %p144
      %p446 = pneg %p141
      %p447 = pneg %p165
      %p448 = pneg %p162
      %p449 = pneg %p186
      %p450 = pneg %p183
      %p451 = pneg %p207
      %p452 = pneg %p204
      %p453 = pneg %p228
      %p454 = pneg %p225
      %p455 = pneg %p249
      %p456 = pneg %p246
      %p457 = pneg %p270
      %p458 = pneg %p267
      %p459 = pneg %p291
      %p460 = pneg %p288
      %p461 = pneg %p312
      %p462 = pneg %p309
      %p463 = pneg %p333
      %p464 = pneg %p330
      %s465 = smul.u32 16, %s24
      %p466 = scmp.lt.s32.totalorder %s465, 31
      %s467 = scalar_select %p466, %s465, 31
      %s468 = smul.addr %s467, 8
      %s469 = scalar_lea.vmem %s1, %s468
      %s470 = smul.u32 16, %s24
      %s471 = smul.u32 16, %s24
      %p472 = scmp.lt.s32.totalorder %s471, 31
      %s473 = scalar_select %p472, %s471, 31
      %s474 = smul.addr %s473, 8
      %s475 = scalar_lea.vmem %s2, %s474
      %s476 = smul.u32 16, %s24
      %s477 = smul.u32 16, %s24
      %p478 = scmp.lt.s32.totalorder %s477, 31
      %s479 = scalar_select %p478, %s477, 31
      %s480 = smul.addr %s479, 8
      %s481 = scalar_lea.vmem %s3, %s480
      %s482 = smul.u32 16, %s24
      %p483 = scmp.lt.s32.totalorder %s24, 1
      %s484 = scalar_select %p483, %s24, 1
      %s485 = scalar_lea.vmem %s4, %s484
      %p486 = scmp.eq.s32.totalorder %s24, 0
      // Predicated region
      $region73: #{tpu_custom_call.1} parent=71 // pred_check
        %p487 = pneg %p486
      $region74: #{tpu_custom_call.1} parent=71 // pred_check_branch
        %489 = sbr.rel (%p487) target = $region76
      $region75: #{tpu_custom_call.1} parent=71 // pred_region
        %v490 = vld [vmem:[%s0] sm:$0xff]
        %v491 = vld [vmem:[%s0 + $0x8] sm:$0xff]
        %v492 = vld [vmem:[%s0 + $0x10] sm:$0xff]
        %v493 = vld [vmem:[%s0 + $0x18] sm:$0xff]
        %v494 = vld [vmem:[%s0 + $0x20] sm:$0xff]
        %v495 = vld [vmem:[%s0 + $0x28] sm:$0xff]
        %v496 = vld [vmem:[%s0 + $0x30] sm:$0xff]
        %v497 = vld [vmem:[%s0 + $0x38] sm:$0xff]
        %v498 = vld [vmem:[%s0 + $0x40] sm:$0xff]
        %v499 = vld [vmem:[%s0 + $0x48] sm:$0xff]
        %v500 = vld [vmem:[%s0 + $0x50] sm:$0xff]
        %v501 = vld [vmem:[%s0 + $0x58] sm:$0xff]
        %v502 = vld [vmem:[%s0 + $0x60] sm:$0xff]
        %v503 = vld [vmem:[%s0 + $0x68] sm:$0xff]
        %v504 = vld [vmem:[%s0 + $0x70] sm:$0xff]
        %v505 = vld [vmem:[%s0 + $0x78] sm:$0xff]
        %v506 = vld [vmem:[%s5] sm:$0xff]
        %v507 = vld [vmem:[%s5 + $0x8] sm:$0xff]
        %v508 = vld [vmem:[%s6] sm:$0xf]
        %v510 = vlaneseq
        %v511 = vshrl.u32 %v510, 7
        %v512 = vsub.s32 0, %v511
        %v513 = vrot.slane %v508, %v512
        %v514 = vlaneseq
        %v515 = vshrl.u32 %v514, 7
        %v516 = vsub.s32 1, %v515
        %v517 = vrot.slane %v508, %v516
        %v518 = vlaneseq
        %v519 = vshrl.u32 %v518, 7
        %v520 = vsub.s32 2, %v519
        %v521 = vrot.slane %v508, %v520
        %v522 = vlaneseq
        %v523 = vshrl.u32 %v522, 7
        %v524 = vsub.s32 3, %v523
        %v525 = vrot.slane %v508, %v524
        %v532 = vcombine.high %v506, %v506
        %v533 = vcombine.high %v507, %v507
        %vm534 = vcmask 31744
        %v536 = vsel %vm534, %v490, 0
        %v539 = vsel %vm534, %v491, 0
        %v542 = vsel %vm534, %v492, 0
        %v545 = vsel %vm534, %v493, 0
        %v548 = vsel %vm534, %v494, 0
        %v551 = vsel %vm534, %v495, 0
        %v554 = vsel %vm534, %v496, 0
        %v557 = vsel %vm534, %v497, 0
        %v560 = vsel %vm534, %v498, 0
        %v563 = vsel %vm534, %v499, 0
        %v566 = vsel %vm534, %v500, 0
        %v569 = vsel %vm534, %v501, 0
        %v572 = vsel %vm534, %v502, 0
        %v575 = vsel %vm534, %v503, 0
        %v578 = vsel %vm534, %v504, 0
        %v581 = vsel %vm534, %v505, 0
        %vm583 = vcmask 1043456
        %v584 = vsel %vm583, %v506, 0
        %v586 = vsel %vm583, %v532, 0
        %v588 = vsel %vm583, %v507, 0
        %v590 = vsel %vm583, %v533, 0
        %592 = vmatprep.subr.mxu0 %v586
        %593 = vmatpush1.msra.mxu0 %v584
        %594 = vmatprep.subr.mxu0 0.0
        %595 = vmatpush1.msra.mxu0 0.0
        %596 = vmatprep.subr.mxu0 0.0
        %597 = vmatpush1.msra.mxu0 0.0
        %598 = vmatprep.subr.mxu0 0.0
        %599 = vmatpush1.msra.mxu0 0.0
        %600 = vmatprep.subr.mxu0 0.0
        %601 = vmatpush1.msra.mxu0 0.0
        %602 = vmatprep.subr.mxu0 0.0
        %603 = vmatpush1.msra.mxu0 0.0
        %604 = vmatprep.subr.mxu0 0.0
        %605 = vmatpush1.msra.mxu0 0.0
        %606 = vmatprep.subr.mxu0 0.0
        %607 = vmatpush1.msra.mxu0 0.0
        %608 = vmatprep.subr.mxu0 0.0
        %609 = vmatpush1.msra.mxu0 0.0
        %610 = vmatprep.subr.mxu0 0.0
        %611 = vmatpush1.msra.mxu0 0.0
        %612 = vmatprep.subr.mxu0 0.0
        %613 = vmatpush1.msra.mxu0 0.0
        %614 = vmatprep.subr.mxu0 0.0
        %615 = vmatpush1.msra.mxu0 0.0
        %616 = vmatprep.subr.mxu0 0.0
        %617 = vmatpush1.msra.mxu0 0.0
        %618 = vmatprep.subr.mxu0 0.0
        %619 = vmatpush1.msra.mxu0 0.0
        %620 = vmatprep.subr.mxu0 0.0
        %621 = vmatpush1.msra.mxu0 0.0
        %622 = vmatprep.subr.mxu0 0.0
        %623 = vmatpush1.msra.mxu0 0.0
        %624 = vmatprep.subr.mxu0 0.0
        %625 = vmatpush1.msra.mxu0 0.0
        %626 = vmatprep.subr.mxu0 0.0
        %627 = vmatpush1.msra.mxu0 0.0
        %628 = vmatprep.subr.mxu0 0.0
        %629 = vmatpush1.msra.mxu0 0.0
        %630 = vmatprep.subr.mxu0 0.0
        %631 = vmatpush1.msra.mxu0 0.0
        %632 = vmatprep.subr.mxu0 0.0
        %633 = vmatpush1.msra.mxu0 0.0
        %634 = vmatprep.subr.mxu0 0.0
        %635 = vmatpush1.msra.mxu0 0.0
        %636 = vmatprep.subr.mxu0 0.0
        %637 = vmatpush1.msra.mxu0 0.0
        %638 = vmatprep.subr.mxu0 0.0
        %639 = vmatpush1.msra.mxu0 0.0
        %640 = vmatprep.subr.mxu0 0.0
        %641 = vmatpush1.msra.mxu0 0.0
        %642 = vmatprep.subr.mxu0 0.0
        %643 = vmatpush1.msra.mxu0 0.0
        %644 = vmatprep.subr.mxu0 0.0
        %645 = vmatpush1.msra.mxu0 0.0
        %646 = vmatprep.subr.mxu0 0.0
        %647 = vmatpush1.msra.mxu0 0.0
        %648 = vmatprep.subr.mxu0 0.0
        %649 = vmatpush1.msra.mxu0 0.0
        %650 = vmatprep.subr.mxu0 0.0
        %651 = vmatpush1.msra.mxu0 0.0
        %652 = vmatprep.subr.mxu0 0.0
        %653 = vmatpush1.msra.mxu0 0.0
        %654 = vmatprep.subr.mxu0 0.0
        %655 = vmatpush1.msra.mxu0 0.0
        %656 = vmatprep.mubr.f32.mxu0 0.0
        %657 = vmatmul.mubr.f32.gmra.mrb[0].mxu0 %v536
        %v658 = vpop.f32.mrb[0].mxu0
        %v659 = vadd.f32 %v513, %v658
        %v660 = vpop.f32.mrb[0].mxu0
        %v661 = vadd.f32 %v517, %v660
        %662 = vmatprep.mubr.f32.mxu0 0.0
        %663 = vmatmul.mubr.f32.gmra.mrb[0].mxu0 %v539
        %v664 = vpop.f32.mrb[0].mxu0
        %v665 = vadd.f32 %v513, %v664
        %v666 = vpop.f32.mrb[0].mxu0
        %v667 = vadd.f32 %v517, %v666
        %668 = vmatprep.mubr.f32.mxu0 0.0
        %669 = vmatmul.mubr.f32.gmra.mrb[0].mxu0 %v542
        %v670 = vpop.f32.mrb[0].mxu0
        %v671 = vadd.f32 %v513, %v670
        %v672 = vpop.f32.mrb[0].mxu0
        %v673 = vadd.f32 %v517, %v672
        %674 = vmatprep.mubr.f32.mxu0 0.0
        %675 = vmatmul.mubr.f32.gmra.mrb[0].mxu0 %v545
        %v676 = vpop.f32.mrb[0].mxu0
        %v677 = vadd.f32 %v513, %v676
        %v678 = vpop.f32.mrb[0].mxu0
        %v679 = vadd.f32 %v517, %v678
        %680 = vmatprep.mubr.f32.mxu0 0.0
        %681 = vmatmul.mubr.f32.gmra.mrb[0].mxu0 %v548
        %v682 = vpop.f32.mrb[0].mxu0
        %v683 = vadd.f32 %v513, %v682
        %v684 = vpop.f32.mrb[0].mxu0
        %v685 = vadd.f32 %v517, %v684
        %686 = vmatprep.mubr.f32.mxu0 0.0
        %687 = vmatmul.mubr.f32.gmra.mrb[0].mxu0 %v551
        %v688 = vpop.f32.mrb[0].mxu0
        %v689 = vadd.f32 %v513, %v688
        %v690 = vpop.f32.mrb[0].mxu0
        %v691 = vadd.f32 %v517, %v690
        %692 = vmatprep.mubr.f32.mxu0 0.0
        %693 = vmatmul.mubr.f32.gmra.mrb[0].mxu0 %v554
        %v694 = vpop.f32.mrb[0].mxu0
        %v695 = vadd.f32 %v513, %v694
        %v696 = vpop.f32.mrb[0].mxu0
        %v697 = vadd.f32 %v517, %v696
        %698 = vmatprep.mubr.f32.mxu0 0.0
        %699 = vmatmul.mubr.f32.gmra.mrb[0].mxu0 %v557
        %v700 = vpop.f32.mrb[0].mxu0
        %v701 = vadd.f32 %v513, %v700
        %v702 = vpop.f32.mrb[0].mxu0
        %v703 = vadd.f32 %v517, %v702
        %704 = vmatprep.mubr.f32.mxu0 0.0
        %705 = vmatmul.mubr.f32.gmra.mrb[0].mxu0 %v560
        %v706 = vpop.f32.mrb[0].mxu0
        %v707 = vadd.f32 %v513, %v706
        %v708 = vpop.f32.mrb[0].mxu0
        %v709 = vadd.f32 %v517, %v708
        %710 = vmatprep.mubr.f32.mxu0 0.0
        %711 = vmatmul.mubr.f32.gmra.mrb[0].mxu0 %v563
        %v712 = vpop.f32.mrb[0].mxu0
        %v713 = vadd.f32 %v513, %v712
        %v714 = vpop.f32.mrb[0].mxu0
        %v715 = vadd.f32 %v517, %v714
        %716 = vmatprep.mubr.f32.mxu0 0.0
        %717 = vmatmul.mubr.f32.gmra.mrb[0].mxu0 %v566
        %v718 = vpop.f32.mrb[0].mxu0
        %v719 = vadd.f32 %v513, %v718
        %v720 = vpop.f32.mrb[0].mxu0
        %v721 = vadd.f32 %v517, %v720
        %722 = vmatprep.mubr.f32.mxu0 0.0
        %723 = vmatmul.mubr.f32.gmra.mrb[0].mxu0 %v569
        %v724 = vpop.f32.mrb[0].mxu0
        %v725 = vadd.f32 %v513, %v724
        %v726 = vpop.f32.mrb[0].mxu0
        %v727 = vadd.f32 %v517, %v726
        %728 = vmatprep.mubr.f32.mxu0 0.0
        %729 = vmatmul.mubr.f32.gmra.mrb[0].mxu0 %v572
        %v730 = vpop.f32.mrb[0].mxu0
        %v731 = vadd.f32 %v513, %v730
        %v732 = vpop.f32.mrb[0].mxu0
        %v733 = vadd.f32 %v517, %v732
        %734 = vmatprep.mubr.f32.mxu0 0.0
        %735 = vmatmul.mubr.f32.gmra.mrb[0].mxu0 %v575
        %v736 = vpop.f32.mrb[0].mxu0
        %v737 = vadd.f32 %v513, %v736
        %v738 = vpop.f32.mrb[0].mxu0
        %v739 = vadd.f32 %v517, %v738
        %740 = vmatprep.mubr.f32.mxu0 0.0
        %741 = vmatmul.mubr.f32.gmra.mrb[0].mxu0 %v578
        %v742 = vpop.f32.mrb[0].mxu0
        %v743 = vadd.f32 %v513, %v742
        %v744 = vpop.f32.mrb[0].mxu0
        %v745 = vadd.f32 %v517, %v744
        %746 = vmatprep.mubr.f32.mxu0 0.0
        %747 = vmatmul.mubr.f32.gmra.mrb[0].mxu0 %v581
        %v748 = vpop.f32.mrb[0].mxu0
        %v749 = vadd.f32 %v513, %v748
        %v750 = vpop.f32.mrb[0].mxu0
        %v751 = vadd.f32 %v517, %v750
        %752 = vdwg.mxu0
        %753 = vmatprep.subr.mxu0 %v590
        %754 = vmatpush1.msra.mxu0 %v588
        %755 = vmatprep.subr.mxu0 0.0
        %756 = vmatpush1.msra.mxu0 0.0
        %757 = vmatprep.subr.mxu0 0.0
        %758 = vmatpush1.msra.mxu0 0.0
        %759 = vmatprep.subr.mxu0 0.0
        %760 = vmatpush1.msra.mxu0 0.0
        %761 = vmatprep.subr.mxu0 0.0
        %762 = vmatpush1.msra.mxu0 0.0
        %763 = vmatprep.subr.mxu0 0.0
        %764 = vmatpush1.msra.mxu0 0.0
        %765 = vmatprep.subr.mxu0 0.0
        %766 = vmatpush1.msra.mxu0 0.0
        %767 = vmatprep.subr.mxu0 0.0
        %768 = vmatpush1.msra.mxu0 0.0
        %769 = vmatprep.subr.mxu0 0.0
        %770 = vmatpush1.msra.mxu0 0.0
        %771 = vmatprep.subr.mxu0 0.0
        %772 = vmatpush1.msra.mxu0 0.0
        %773 = vmatprep.subr.mxu0 0.0
        %774 = vmatpush1.msra.mxu0 0.0
        %775 = vmatprep.subr.mxu0 0.0
        %776 = vmatpush1.msra.mxu0 0.0
        %777 = vmatprep.subr.mxu0 0.0
        %778 = vmatpush1.msra.mxu0 0.0
        %779 = vmatprep.subr.mxu0 0.0
        %780 = vmatpush1.msra.mxu0 0.0
        %781 = vmatprep.subr.mxu0 0.0
        %782 = vmatpush1.msra.mxu0 0.0
        %783 = vmatprep.subr.mxu0 0.0
        %784 = vmatpush1.msra.mxu0 0.0
        %785 = vmatprep.subr.mxu0 0.0
        %786 = vmatpush1.msra.mxu0 0.0
        %787 = vmatprep.subr.mxu0 0.0
        %788 = vmatpush1.msra.mxu0 0.0
        %789 = vmatprep.subr.mxu0 0.0
        %790 = vmatpush1.msra.mxu0 0.0
        %791 = vmatprep.subr.mxu0 0.0
        %792 = vmatpush1.msra.mxu0 0.0
        %793 = vmatprep.subr.mxu0 0.0
        %794 = vmatpush1.msra.mxu0 0.0
        %795 = vmatprep.subr.mxu0 0.0
        %796 = vmatpush1.msra.mxu0 0.0
        %797 = vmatprep.subr.mxu0 0.0
        %798 = vmatpush1.msra.mxu0 0.0
        %799 = vmatprep.subr.mxu0 0.0
        %800 = vmatpush1.msra.mxu0 0.0
        %801 = vmatprep.subr.mxu0 0.0
        %802 = vmatpush1.msra.mxu0 0.0
        %803 = vmatprep.subr.mxu0 0.0
        %804 = vmatpush1.msra.mxu0 0.0
        %805 = vmatprep.subr.mxu0 0.0
        %806 = vmatpush1.msra.mxu0 0.0
        %807 = vmatprep.subr.mxu0 0.0
        %808 = vmatpush1.msra.mxu0 0.0
        %809 = vmatprep.subr.mxu0 0.0
        %810 = vmatpush1.msra.mxu0 0.0
        %811 = vmatprep.subr.mxu0 0.0
        %812 = vmatpush1.msra.mxu0 0.0
        %813 = vmatprep.subr.mxu0 0.0
        %814 = vmatpush1.msra.mxu0 0.0
        %815 = vmatprep.subr.mxu0 0.0
        %816 = vmatpush1.msra.mxu0 0.0
        %817 = vmatprep.mubr.f32.mxu0 0.0
        %818 = vmatmul.mubr.f32.gmra.mrb[0].mxu0 %v536
        %v819 = vpop.f32.mrb[0].mxu0
        %v820 = vadd.f32 %v521, %v819
        %v821 = vpop.f32.mrb[0].mxu0
        %v822 = vadd.f32 %v525, %v821
        %823 = vmatprep.mubr.f32.mxu0 0.0
        %824 = vmatmul.mubr.f32.gmra.mrb[0].mxu0 %v539
        %v825 = vpop.f32.mrb[0].mxu0
        %v826 = vadd.f32 %v521, %v825
        %v827 = vpop.f32.mrb[0].mxu0
        %v828 = vadd.f32 %v525, %v827
        %829 = vmatprep.mubr.f32.mxu0 0.0
        %830 = vmatmul.mubr.f32.gmra.mrb[0].mxu0 %v542
        %v831 = vpop.f32.mrb[0].mxu0
        %v832 = vadd.f32 %v521, %v831
        %v833 = vpop.f32.mrb[0].mxu0
        %v834 = vadd.f32 %v525, %v833
        %835 = vmatprep.mubr.f32.mxu0 0.0
        %836 = vmatmul.mubr.f32.gmra.mrb[0].mxu0 %v545
        %v837 = vpop.f32.mrb[0].mxu0
        %v838 = vadd.f32 %v521, %v837
        %v839 = vpop.f32.mrb[0].mxu0
        %v840 = vadd.f32 %v525, %v839
        %841 = vmatprep.mubr.f32.mxu0 0.0
        %842 = vmatmul.mubr.f32.gmra.mrb[0].mxu0 %v548
        %v843 = vpop.f32.mrb[0].mxu0
        %v844 = vadd.f32 %v521, %v843
        %v845 = vpop.f32.mrb[0].mxu0
        %v846 = vadd.f32 %v525, %v845
        %847 = vmatprep.mubr.f32.mxu0 0.0
        %848 = vmatmul.mubr.f32.gmra.mrb[0].mxu0 %v551
        %v849 = vpop.f32.mrb[0].mxu0
        %v850 = vadd.f32 %v521, %v849
        %v851 = vpop.f32.mrb[0].mxu0
        %v852 = vadd.f32 %v525, %v851
        %853 = vmatprep.mubr.f32.mxu0 0.0
        %854 = vmatmul.mubr.f32.gmra.mrb[0].mxu0 %v554
        %v855 = vpop.f32.mrb[0].mxu0
        %v856 = vadd.f32 %v521, %v855
        %v857 = vpop.f32.mrb[0].mxu0
        %v858 = vadd.f32 %v525, %v857
        %859 = vmatprep.mubr.f32.mxu0 0.0
        %860 = vmatmul.mubr.f32.gmra.mrb[0].mxu0 %v557
        %v861 = vpop.f32.mrb[0].mxu0
        %v862 = vadd.f32 %v521, %v861
        %v863 = vpop.f32.mrb[0].mxu0
        %v864 = vadd.f32 %v525, %v863
        %865 = vmatprep.mubr.f32.mxu0 0.0
        %866 = vmatmul.mubr.f32.gmra.mrb[0].mxu0 %v560
        %v867 = vpop.f32.mrb[0].mxu0
        %v868 = vadd.f32 %v521, %v867
        %v869 = vpop.f32.mrb[0].mxu0
        %v870 = vadd.f32 %v525, %v869
        %871 = vmatprep.mubr.f32.mxu0 0.0
        %872 = vmatmul.mubr.f32.gmra.mrb[0].mxu0 %v563
        %v873 = vpop.f32.mrb[0].mxu0
        %v874 = vadd.f32 %v521, %v873
        %v875 = vpop.f32.mrb[0].mxu0
        %v876 = vadd.f32 %v525, %v875
        %877 = vmatprep.mubr.f32.mxu0 0.0
        %878 = vmatmul.mubr.f32.gmra.mrb[0].mxu0 %v566
        %v879 = vpop.f32.mrb[0].mxu0
        %v880 = vadd.f32 %v521, %v879
        %v881 = vpop.f32.mrb[0].mxu0
        %v882 = vadd.f32 %v525, %v881
        %883 = vmatprep.mubr.f32.mxu0 0.0
        %884 = vmatmul.mubr.f32.gmra.mrb[0].mxu0 %v569
        %v885 = vpop.f32.mrb[0].mxu0
        %v886 = vadd.f32 %v521, %v885
        %v887 = vpop.f32.mrb[0].mxu0
        %v888 = vadd.f32 %v525, %v887
        %889 = vmatprep.mubr.f32.mxu0 0.0
        %890 = vmatmul.mubr.f32.gmra.mrb[0].mxu0 %v572
        %v891 = vpop.f32.mrb[0].mxu0
        %v892 = vadd.f32 %v521, %v891
        %v893 = vpop.f32.mrb[0].mxu0
        %v894 = vadd.f32 %v525, %v893
        %895 = vmatprep.mubr.f32.mxu0 0.0
        %896 = vmatmul.mubr.f32.gmra.mrb[0].mxu0 %v575
        %v897 = vpop.f32.mrb[0].mxu0
        %v898 = vadd.f32 %v521, %v897
        %v899 = vpop.f32.mrb[0].mxu0
        %v900 = vadd.f32 %v525, %v899
        %901 = vmatprep.mubr.f32.mxu0 0.0
        %902 = vmatmul.mubr.f32.gmra.mrb[0].mxu0 %v578
        %v903 = vpop.f32.mrb[0].mxu0
        %v904 = vadd.f32 %v521, %v903
        %v905 = vpop.f32.mrb[0].mxu0
        %v906 = vadd.f32 %v525, %v905
        %907 = vmatprep.mubr.f32.mxu0 0.0
        %908 = vmatmul.mubr.f32.gmra.mrb[0].mxu0 %v581
        %v909 = vpop.f32.mrb[0].mxu0
        %v910 = vadd.f32 %v521, %v909
        %v911 = vpop.f32.mrb[0].mxu0
        %v912 = vadd.f32 %v525, %v911
        %913 = vdwg.mxu0
        %914 = vst [vmem:[#allocation2] sm:$0xff] %v659
        %915 = vst [vmem:[#allocation2 + $0x8] sm:$0xff] %v665
        %916 = vst [vmem:[#allocation2 + $0x10] sm:$0xff] %v671
        %917 = vst [vmem:[#allocation2 + $0x18] sm:$0xff] %v677
        %918 = vst [vmem:[#allocation2 + $0x20] sm:$0xff] %v683
        %919 = vst [vmem:[#allocation2 + $0x28] sm:$0xff] %v689
        %920 = vst [vmem:[#allocation2 + $0x30] sm:$0xff] %v695
        %921 = vst [vmem:[#allocation2 + $0x38] sm:$0xff] %v701
        %922 = vst [vmem:[#allocation2 + $0x40] sm:$0xff] %v707
        %923 = vst [vmem:[#allocation2 + $0x48] sm:$0xff] %v713
        %924 = vst [vmem:[#allocation2 + $0x50] sm:$0xff] %v719
        %925 = vst [vmem:[#allocation2 + $0x58] sm:$0xff] %v725
        %926 = vst [vmem:[#allocation2 + $0x60] sm:$0xff] %v731
        %927 = vst [vmem:[#allocation2 + $0x68] sm:$0xff] %v737
        %928 = vst [vmem:[#allocation2 + $0x70] sm:$0xff] %v743
        %929 = vst [vmem:[#allocation2 + $0x78] sm:$0xff] %v749
        %930 = vst [vmem:[#allocation3] sm:$0xff] %v661
        %931 = vst [vmem:[#allocation3 + $0x8] sm:$0xff] %v820
        %932 = vst [vmem:[#allocation3 + $0x10] sm:$0xff] %v667
        %933 = vst [vmem:[#allocation3 + $0x18] sm:$0xff] %v826
        %934 = vst [vmem:[#allocation3 + $0x20] sm:$0xff] %v673
        %935 = vst [vmem:[#allocation3 + $0x28] sm:$0xff] %v832
        %936 = vst [vmem:[#allocation3 + $0x30] sm:$0xff] %v679
        %937 = vst [vmem:[#allocation3 + $0x38] sm:$0xff] %v838
        %938 = vst [vmem:[#allocation3 + $0x40] sm:$0xff] %v685
        %939 = vst [vmem:[#allocation3 + $0x48] sm:$0xff] %v844
        %940 = vst [vmem:[#allocation3 + $0x50] sm:$0xff] %v691
        %941 = vst [vmem:[#allocation3 + $0x58] sm:$0xff] %v850
        %942 = vst [vmem:[#allocation3 + $0x60] sm:$0xff] %v697
        %943 = vst [vmem:[#allocation3 + $0x68] sm:$0xff] %v856
        %944 = vst [vmem:[#allocation3 + $0x70] sm:$0xff] %v703
        %945 = vst [vmem:[#allocation3 + $0x78] sm:$0xff] %v862
        %946 = vst [vmem:[#allocation3 + $0x80] sm:$0xff] %v709
        %947 = vst [vmem:[#allocation3 + $0x88] sm:$0xff] %v868
        %948 = vst [vmem:[#allocation3 + $0x90] sm:$0xff] %v715
        %949 = vst [vmem:[#allocation3 + $0x98] sm:$0xff] %v874
        %950 = vst [vmem:[#allocation3 + $0xa0] sm:$0xff] %v721
        %951 = vst [vmem:[#allocation3 + $0xa8] sm:$0xff] %v880
        %952 = vst [vmem:[#allocation3 + $0xb0] sm:$0xff] %v727
        %953 = vst [vmem:[#allocation3 + $0xb8] sm:$0xff] %v886
        %954 = vst [vmem:[#allocation3 + $0xc0] sm:$0xff] %v733
        %955 = vst [vmem:[#allocation3 + $0xc8] sm:$0xff] %v892
        %956 = vst [vmem:[#allocation3 + $0xd0] sm:$0xff] %v739
        %957 = vst [vmem:[#allocation3 + $0xd8] sm:$0xff] %v898
        %958 = vst [vmem:[#allocation3 + $0xe0] sm:$0xff] %v745
        %959 = vst [vmem:[#allocation3 + $0xe8] sm:$0xff] %v904
        %960 = vst [vmem:[#allocation3 + $0xf0] sm:$0xff] %v751
        %961 = vst [vmem:[#allocation3 + $0xf8] sm:$0xff] %v910
        %vm962 = vcmask 261120
        %963 = vst.msk [vmem:[#allocation4] sm:$0xff] %vm962, %v822
        %964 = vst.msk [vmem:[#allocation4 + $0x8] sm:$0xff] %vm962, %v828
        %965 = vst.msk [vmem:[#allocation4 + $0x10] sm:$0xff] %vm962, %v834
        %966 = vst.msk [vmem:[#allocation4 + $0x18] sm:$0xff] %vm962, %v840
        %967 = vst.msk [vmem:[#allocation4 + $0x20] sm:$0xff] %vm962, %v846
        %968 = vst.msk [vmem:[#allocation4 + $0x28] sm:$0xff] %vm962, %v852
        %969 = vst.msk [vmem:[#allocation4 + $0x30] sm:$0xff] %vm962, %v858
        %970 = vst.msk [vmem:[#allocation4 + $0x38] sm:$0xff] %vm962, %v864
        %971 = vst.msk [vmem:[#allocation4 + $0x40] sm:$0xff] %vm962, %v870
        %972 = vst.msk [vmem:[#allocation4 + $0x48] sm:$0xff] %vm962, %v876
        %973 = vst.msk [vmem:[#allocation4 + $0x50] sm:$0xff] %vm962, %v882
        %974 = vst.msk [vmem:[#allocation4 + $0x58] sm:$0xff] %vm962, %v888
        %975 = vst.msk [vmem:[#allocation4 + $0x60] sm:$0xff] %vm962, %v894
        %976 = vst.msk [vmem:[#allocation4 + $0x68] sm:$0xff] %vm962, %v900
        %977 = vst.msk [vmem:[#allocation4 + $0x70] sm:$0xff] %vm962, %v906
        %978 = vst.msk [vmem:[#allocation4 + $0x78] sm:$0xff] %vm962, %v912
        %979 = vst [vmem:[#allocation5] sm:$0xff] 0.0
        %980 = vst [vmem:[#allocation5 + $0x8] sm:$0xff] 0.0
        %981 = vst [vmem:[#allocation5 + $0x10] sm:$0xff] 0.0
        %982 = vst [vmem:[#allocation5 + $0x18] sm:$0xff] 0.0
        %983 = vst [vmem:[#allocation5 + $0x20] sm:$0xff] 0.0
        %984 = vst [vmem:[#allocation5 + $0x28] sm:$0xff] 0.0
        %985 = vst [vmem:[#allocation5 + $0x30] sm:$0xff] 0.0
        %986 = vst [vmem:[#allocation5 + $0x38] sm:$0xff] 0.0
        %987 = vst [vmem:[#allocation5 + $0x40] sm:$0xff] 0.0
        %988 = vst [vmem:[#allocation5 + $0x48] sm:$0xff] 0.0
        %989 = vst [vmem:[#allocation5 + $0x50] sm:$0xff] 0.0
        %990 = vst [vmem:[#allocation5 + $0x58] sm:$0xff] 0.0
        %991 = vst [vmem:[#allocation5 + $0x60] sm:$0xff] 0.0
        %992 = vst [vmem:[#allocation5 + $0x68] sm:$0xff] 0.0
        %993 = vst [vmem:[#allocation5 + $0x70] sm:$0xff] 0.0
        %994 = vst [vmem:[#allocation5 + $0x78] sm:$0xff] 0.0
        %995 = vst.msk [vmem:[#allocation6] sm:$0xff] %vm534, 0.0
        %996 = vst.msk [vmem:[#allocation6 + $0x8] sm:$0xff] %vm534, 0.0
        %997 = vst.msk [vmem:[#allocation6 + $0x10] sm:$0xff] %vm534, 0.0
        %998 = vst.msk [vmem:[#allocation6 + $0x18] sm:$0xff] %vm534, 0.0
        %999 = vst.msk [vmem:[#allocation6 + $0x20] sm:$0xff] %vm534, 0.0
        %1000 = vst.msk [vmem:[#allocation6 + $0x28] sm:$0xff] %vm534, 0.0
        %1001 = vst.msk [vmem:[#allocation6 + $0x30] sm:$0xff] %vm534, 0.0
        %1002 = vst.msk [vmem:[#allocation6 + $0x38] sm:$0xff] %vm534, 0.0
        %1003 = vst.msk [vmem:[#allocation6 + $0x40] sm:$0xff] %vm534, 0.0
        %1004 = vst.msk [vmem:[#allocation6 + $0x48] sm:$0xff] %vm534, 0.0
        %1005 = vst.msk [vmem:[#allocation6 + $0x50] sm:$0xff] %vm534, 0.0
        %1006 = vst.msk [vmem:[#allocation6 + $0x58] sm:$0xff] %vm534, 0.0
        %1007 = vst.msk [vmem:[#allocation6 + $0x60] sm:$0xff] %vm534, 0.0
        %1008 = vst.msk [vmem:[#allocation6 + $0x68] sm:$0xff] %vm534, 0.0
        %1009 = vst.msk [vmem:[#allocation6 + $0x70] sm:$0xff] %vm534, 0.0
        %1010 = vst.msk [vmem:[#allocation6 + $0x78] sm:$0xff] %vm534, 0.0
        %vm1011 = vcmask 24576
        %1012 = vst.msk [vmem:[#allocation7] sm:$0x1] %vm1011, -1e+30
      $region76: #{tpu_custom_call.1} parent=71 // pred_fallthru
        _
      %v1013 = vlaneseq
      %v1014 = vand.u32 %v1013, 127
      %v1015 = vlaneseq
      %v1016 = vshrl.u32 %v1015, 7
      %v1017 = vadd.s32 %v1016, 8
      %v1018 = vadd.s32 %v1016, 16
      %v1019 = vadd.s32 %v1016, 24
      %v1020 = vadd.s32 %v1016, 32
      %v1021 = vadd.s32 %v1016, 40
      %v1022 = vadd.s32 %v1016, 48
      %v1023 = vadd.s32 %v1016, 56
      %v1024 = vadd.s32 %v1016, 64
      %v1025 = vadd.s32 %v1016, 72
      %v1026 = vadd.s32 %v1016, 80
      %v1027 = vadd.s32 %v1016, 88
      %v1028 = vadd.s32 %v1016, 96
      %v1029 = vadd.s32 %v1016, 104
      %v1030 = vadd.s32 %v1016, 112
      %v1031 = vadd.s32 %v1016, 120
      %v1032 = vld [vmem:[%s475] sm:$0xff]
      %v1033 = vld [vmem:[%s475 + $0x8] sm:$0xff]
      %v1034 = vld [vmem:[%s475 + $0x10] sm:$0xff]
      %v1035 = vld [vmem:[%s475 + $0x18] sm:$0xff]
      %v1036 = vld [vmem:[%s475 + $0x20] sm:$0xff]
      %v1037 = vld [vmem:[%s475 + $0x28] sm:$0xff]
      %v1038 = vld [vmem:[%s475 + $0x30] sm:$0xff]
      %v1039 = vld [vmem:[%s475 + $0x38] sm:$0xff]
      %v1040 = vld [vmem:[%s475 + $0x40] sm:$0xff]
      %v1041 = vld [vmem:[%s475 + $0x48] sm:$0xff]
      %v1042 = vld [vmem:[%s475 + $0x50] sm:$0xff]
      %v1043 = vld [vmem:[%s475 + $0x58] sm:$0xff]
      %v1044 = vld [vmem:[%s475 + $0x60] sm:$0xff]
      %v1045 = vld [vmem:[%s475 + $0x68] sm:$0xff]
      %v1046 = vld [vmem:[%s475 + $0x70] sm:$0xff]
      %v1047 = vld [vmem:[%s475 + $0x78] sm:$0xff]
      %1048 = vset.pattern.permute.xlu0 0
      %1049 = vperm.xlu0 %1048, %v1032
      %v1050 = vpop.permute.xlu0 %1049
      %1051 = vset.pattern.permute.xlu0 0
      %1052 = vperm.xlu0 %1051, %v1033
      %v1053 = vpop.permute.xlu0 %1052
      %1054 = vset.pattern.permute.xlu0 0
      %1055 = vperm.xlu0 %1054, %v1034
      %v1056 = vpop.permute.xlu0 %1055
      %1057 = vset.pattern.permute.xlu0 0
      %1058 = vperm.xlu0 %1057, %v1035
      %v1059 = vpop.permute.xlu0 %1058
      %1060 = vset.pattern.permute.xlu0 0
      %1061 = vperm.xlu0 %1060, %v1036
      %v1062 = vpop.permute.xlu0 %1061
      %1063 = vset.pattern.permute.xlu0 0
      %1064 = vperm.xlu0 %1063, %v1037
      %v1065 = vpop.permute.xlu0 %1064
      %1066 = vset.pattern.permute.xlu0 0
      %1067 = vperm.xlu0 %1066, %v1038
      %v1068 = vpop.permute.xlu0 %1067
      %1069 = vset.pattern.permute.xlu0 0
      %1070 = vperm.xlu0 %1069, %v1039
      %v1071 = vpop.permute.xlu0 %1070
      %1072 = vset.pattern.permute.xlu0 0
      %1073 = vperm.xlu0 %1072, %v1040
      %v1074 = vpop.permute.xlu0 %1073
      %1075 = vset.pattern.permute.xlu0 0
      %1076 = vperm.xlu0 %1075, %v1041
      %v1077 = vpop.permute.xlu0 %1076
      %1078 = vset.pattern.permute.xlu0 0
      %1079 = vperm.xlu0 %1078, %v1042
      %v1080 = vpop.permute.xlu0 %1079
      %1081 = vset.pattern.permute.xlu0 0
      %1082 = vperm.xlu0 %1081, %v1043
      %v1083 = vpop.permute.xlu0 %1082
      %1084 = vset.pattern.permute.xlu0 0
      %1085 = vperm.xlu0 %1084, %v1044
      %v1086 = vpop.permute.xlu0 %1085
      %1087 = vset.pattern.permute.xlu0 0
      %1088 = vperm.xlu0 %1087, %v1045
      %v1089 = vpop.permute.xlu0 %1088
      %1090 = vset.pattern.permute.xlu0 0
      %1091 = vperm.xlu0 %1090, %v1046
      %v1092 = vpop.permute.xlu0 %1091
      %1093 = vset.pattern.permute.xlu0 0
      %1094 = vperm.xlu0 %1093, %v1047
      %v1095 = vpop.permute.xlu0 %1094
      %vm1096 = vcmp.eq.s32.totalorder %v1050, %v1014
      %vm1097 = vcmp.eq.s32.totalorder %v1053, %v1014
      %vm1098 = vcmp.eq.s32.totalorder %v1056, %v1014
      %vm1099 = vcmp.eq.s32.totalorder %v1059, %v1014
      %vm1100 = vcmp.eq.s32.totalorder %v1062, %v1014
      %vm1101 = vcmp.eq.s32.totalorder %v1065, %v1014
      %vm1102 = vcmp.eq.s32.totalorder %v1068, %v1014
      %vm1103 = vcmp.eq.s32.totalorder %v1071, %v1014
      %vm1104 = vcmp.eq.s32.totalorder %v1074, %v1014
      %vm1105 = vcmp.eq.s32.totalorder %v1077, %v1014
      %vm1106 = vcmp.eq.s32.totalorder %v1080, %v1014
      %vm1107 = vcmp.eq.s32.totalorder %v1083, %v1014
      %vm1108 = vcmp.eq.s32.totalorder %v1086, %v1014
      %vm1109 = vcmp.eq.s32.totalorder %v1089, %v1014
      %vm1110 = vcmp.eq.s32.totalorder %v1092, %v1014
      %vm1111 = vcmp.eq.s32.totalorder %v1095, %v1014
      %v1112 = vsel %vm1096, 1, 0
      %v1113 = vsel %vm1097, 1, 0
      %v1114 = vsel %vm1098, 1, 0
      %v1115 = vsel %vm1099, 1, 0
      %v1116 = vsel %vm1100, 1, 0
      %v1117 = vsel %vm1101, 1, 0
      %v1118 = vsel %vm1102, 1, 0
      %v1119 = vsel %vm1103, 1, 0
      %v1120 = vsel %vm1104, 1, 0
      %v1121 = vsel %vm1105, 1, 0
      %v1122 = vsel %vm1106, 1, 0
      %v1123 = vsel %vm1107, 1, 0
      %v1124 = vsel %vm1108, 1, 0
      %v1125 = vsel %vm1109, 1, 0
      %v1126 = vsel %vm1110, 1, 0
      %v1127 = vsel %vm1111, 1, 0
      %v1128 = vcvt.s32.f32 %v1112
      %v1129 = vcvt.s32.f32 %v1113
      %v1130 = vcvt.s32.f32 %v1114
      %v1131 = vcvt.s32.f32 %v1115
      %v1132 = vcvt.s32.f32 %v1116
      %v1133 = vcvt.s32.f32 %v1117
      %v1134 = vcvt.s32.f32 %v1118
      %v1135 = vcvt.s32.f32 %v1119
      %v1136 = vcvt.s32.f32 %v1120
      %v1137 = vcvt.s32.f32 %v1121
      %v1138 = vcvt.s32.f32 %v1122
      %v1139 = vcvt.s32.f32 %v1123
      %v1140 = vcvt.s32.f32 %v1124
      %v1141 = vcvt.s32.f32 %v1125
      %v1142 = vcvt.s32.f32 %v1126
      %v1143 = vcvt.s32.f32 %v1127
      %v1144 = vld [vmem:[%s481] sm:$0xff]
      %v1145 = vld [vmem:[%s481 + $0x8] sm:$0xff]
      %v1146 = vld [vmem:[%s481 + $0x10] sm:$0xff]
      %v1147 = vld [vmem:[%s481 + $0x18] sm:$0xff]
      %v1148 = vld [vmem:[%s481 + $0x20] sm:$0xff]
      %v1149 = vld [vmem:[%s481 + $0x28] sm:$0xff]
      %v1150 = vld [vmem:[%s481 + $0x30] sm:$0xff]
      %v1151 = vld [vmem:[%s481 + $0x38] sm:$0xff]
      %v1152 = vld [vmem:[%s481 + $0x40] sm:$0xff]
      %v1153 = vld [vmem:[%s481 + $0x48] sm:$0xff]
      %v1154 = vld [vmem:[%s481 + $0x50] sm:$0xff]
      %v1155 = vld [vmem:[%s481 + $0x58] sm:$0xff]
      %v1156 = vld [vmem:[%s481 + $0x60] sm:$0xff]
      %v1157 = vld [vmem:[%s481 + $0x68] sm:$0xff]
      %v1158 = vld [vmem:[%s481 + $0x70] sm:$0xff]
      %v1159 = vld [vmem:[%s481 + $0x78] sm:$0xff]
      %1160 = vset.pattern.permute.xlu0 0
      %1161 = vperm.xlu0 %1160, %v1144
      %v1162 = vpop.permute.xlu0 %1161
      %1163 = vset.pattern.permute.xlu0 0
      %1164 = vperm.xlu0 %1163, %v1145
      %v1165 = vpop.permute.xlu0 %1164
      %1166 = vset.pattern.permute.xlu0 0
      %1167 = vperm.xlu0 %1166, %v1146
      %v1168 = vpop.permute.xlu0 %1167
      %1169 = vset.pattern.permute.xlu0 0
      %1170 = vperm.xlu0 %1169, %v1147
      %v1171 = vpop.permute.xlu0 %1170
      %1172 = vset.pattern.permute.xlu0 0
      %1173 = vperm.xlu0 %1172, %v1148
      %v1174 = vpop.permute.xlu0 %1173
      %1175 = vset.pattern.permute.xlu0 0
      %1176 = vperm.xlu0 %1175, %v1149
      %v1177 = vpop.permute.xlu0 %1176
      %1178 = vset.pattern.permute.xlu0 0
      %1179 = vperm.xlu0 %1178, %v1150
      %v1180 = vpop.permute.xlu0 %1179
      %1181 = vset.pattern.permute.xlu0 0
      %1182 = vperm.xlu0 %1181, %v1151
      %v1183 = vpop.permute.xlu0 %1182
      %1184 = vset.pattern.permute.xlu0 0
      %1185 = vperm.xlu0 %1184, %v1152
      %v1186 = vpop.permute.xlu0 %1185
      %1187 = vset.pattern.permute.xlu0 0
      %1188 = vperm.xlu0 %1187, %v1153
      %v1189 = vpop.permute.xlu0 %1188
      %1190 = vset.pattern.permute.xlu0 0
      %1191 = vperm.xlu0 %1190, %v1154
      %v1192 = vpop.permute.xlu0 %1191
      %1193 = vset.pattern.permute.xlu0 0
      %1194 = vperm.xlu0 %1193, %v1155
      %v1195 = vpop.permute.xlu0 %1194
      %1196 = vset.pattern.permute.xlu0 0
      %1197 = vperm.xlu0 %1196, %v1156
      %v1198 = vpop.permute.xlu0 %1197
      %1199 = vset.pattern.permute.xlu0 0
      %1200 = vperm.xlu0 %1199, %v1157
      %v1201 = vpop.permute.xlu0 %1200
      %1202 = vset.pattern.permute.xlu0 0
      %1203 = vperm.xlu0 %1202, %v1158
      %v1204 = vpop.permute.xlu0 %1203
      %1205 = vset.pattern.permute.xlu0 0
      %1206 = vperm.xlu0 %1205, %v1159
      %v1207 = vpop.permute.xlu0 %1206
      %vm1208 = vcmp.eq.s32.totalorder %v1162, %v1014
      %vm1209 = vcmp.eq.s32.totalorder %v1165, %v1014
      %vm1210 = vcmp.eq.s32.totalorder %v1168, %v1014
      %vm1211 = vcmp.eq.s32.totalorder %v1171, %v1014
      %vm1212 = vcmp.eq.s32.totalorder %v1174, %v1014
      %vm1213 = vcmp.eq.s32.totalorder %v1177, %v1014
      %vm1214 = vcmp.eq.s32.totalorder %v1180, %v1014
      %vm1215 = vcmp.eq.s32.totalorder %v1183, %v1014
      %vm1216 = vcmp.eq.s32.totalorder %v1186, %v1014
      %vm1217 = vcmp.eq.s32.totalorder %v1189, %v1014
      %vm1218 = vcmp.eq.s32.totalorder %v1192, %v1014
      %vm1219 = vcmp.eq.s32.totalorder %v1195, %v1014
      %vm1220 = vcmp.eq.s32.totalorder %v1198, %v1014
      %vm1221 = vcmp.eq.s32.totalorder %v1201, %v1014
      %vm1222 = vcmp.eq.s32.totalorder %v1204, %v1014
      %vm1223 = vcmp.eq.s32.totalorder %v1207, %v1014
      %v1224 = vsel %vm1208, 1, 0
      %v1225 = vsel %vm1209, 1, 0
      %v1226 = vsel %vm1210, 1, 0
      %v1227 = vsel %vm1211, 1, 0
      %v1228 = vsel %vm1212, 1, 0
      %v1229 = vsel %vm1213, 1, 0
      %v1230 = vsel %vm1214, 1, 0
      %v1231 = vsel %vm1215, 1, 0
      %v1232 = vsel %vm1216, 1, 0
      %v1233 = vsel %vm1217, 1, 0
      %v1234 = vsel %vm1218, 1, 0
      %v1235 = vsel %vm1219, 1, 0
      %v1236 = vsel %vm1220, 1, 0
      %v1237 = vsel %vm1221, 1, 0
      %v1238 = vsel %vm1222, 1, 0
      %v1239 = vsel %vm1223, 1, 0
      %v1240 = vcvt.s32.f32 %v1224
      %v1241 = vcvt.s32.f32 %v1225
      %v1242 = vcvt.s32.f32 %v1226
      %v1243 = vcvt.s32.f32 %v1227
      %v1244 = vcvt.s32.f32 %v1228
      %v1245 = vcvt.s32.f32 %v1229
      %v1246 = vcvt.s32.f32 %v1230
      %v1247 = vcvt.s32.f32 %v1231
      %v1248 = vcvt.s32.f32 %v1232
      %v1249 = vcvt.s32.f32 %v1233
      %v1250 = vcvt.s32.f32 %v1234
      %v1251 = vcvt.s32.f32 %v1235
      %v1252 = vcvt.s32.f32 %v1236
      %v1253 = vcvt.s32.f32 %v1237
      %v1254 = vcvt.s32.f32 %v1238
      %v1255 = vcvt.s32.f32 %v1239
      %v1256 = vld [vmem:[%s485] sm:$0x1]
      %v1257 = vlaneseq
      %v1258 = vshrl.u32 %v1257, 7
      %v1259 = vsub.s32 0, %v1258
      %v1260 = vrot.slane %v1256, %v1259
      %vm1261 = vcmp.eq.s32.totalorder %v1016, %v1260
      %vm1262 = vcmp.eq.s32.totalorder %v1017, %v1260
      %vm1263 = vcmp.eq.s32.totalorder %v1018, %v1260
      %vm1264 = vcmp.eq.s32.totalorder %v1019, %v1260
      %vm1265 = vcmp.eq.s32.totalorder %v1020, %v1260
      %vm1266 = vcmp.eq.s32.totalorder %v1021, %v1260
      %vm1267 = vcmp.eq.s32.totalorder %v1022, %v1260
      %vm1268 = vcmp.eq.s32.totalorder %v1023, %v1260
      %vm1269 = vcmp.eq.s32.totalorder %v1024, %v1260
      %vm1270 = vcmp.eq.s32.totalorder %v1025, %v1260
      %vm1271 = vcmp.eq.s32.totalorder %v1026, %v1260
      %vm1272 = vcmp.eq.s32.totalorder %v1027, %v1260
      %vm1273 = vcmp.eq.s32.totalorder %v1028, %v1260
      %vm1274 = vcmp.eq.s32.totalorder %v1029, %v1260
      %vm1275 = vcmp.eq.s32.totalorder %v1030, %v1260
      %vm1276 = vcmp.eq.s32.totalorder %v1031, %v1260
      %v1277 = vsel %vm1261, 1, 0
      %v1278 = vsel %vm1262, 1, 0
      %v1279 = vsel %vm1263, 1, 0
      %v1280 = vsel %vm1264, 1, 0
      %v1281 = vsel %vm1265, 1, 0
      %v1282 = vsel %vm1266, 1, 0
      %v1283 = vsel %vm1267, 1, 0
      %v1284 = vsel %vm1268, 1, 0
      %v1285 = vsel %vm1269, 1, 0
      %v1286 = vsel %vm1270, 1, 0
      %v1287 = vsel %vm1271, 1, 0
      %v1288 = vsel %vm1272, 1, 0
      %v1289 = vsel %vm1273, 1, 0
      %v1290 = vsel %vm1274, 1, 0
      %v1291 = vsel %vm1275, 1, 0
      %v1292 = vsel %vm1276, 1, 0
      %v1293 = vcvt.s32.f32 %v1277
      %v1294 = vcvt.s32.f32 %v1278
      %v1295 = vcvt.s32.f32 %v1279
      %v1296 = vcvt.s32.f32 %v1280
      %v1297 = vcvt.s32.f32 %v1281
      %v1298 = vcvt.s32.f32 %v1282
      %v1299 = vcvt.s32.f32 %v1283
      %v1300 = vcvt.s32.f32 %v1284
      %v1301 = vcvt.s32.f32 %v1285
      %v1302 = vcvt.s32.f32 %v1286
      %v1303 = vcvt.s32.f32 %v1287
      %v1304 = vcvt.s32.f32 %v1288
      %v1305 = vcvt.s32.f32 %v1289
      %v1306 = vcvt.s32.f32 %v1290
      %v1307 = vcvt.s32.f32 %v1291
      %v1308 = vcvt.s32.f32 %v1292
      %v1309 = vld [vmem:[%s469] sm:$0xff]
      %v1310 = vld [vmem:[%s469 + $0x8] sm:$0xff]
      %v1311 = vld [vmem:[%s469 + $0x10] sm:$0xff]
      %v1312 = vld [vmem:[%s469 + $0x18] sm:$0xff]
      %v1313 = vld [vmem:[%s469 + $0x20] sm:$0xff]
      %v1314 = vld [vmem:[%s469 + $0x28] sm:$0xff]
      %v1315 = vld [vmem:[%s469 + $0x30] sm:$0xff]
      %v1316 = vld [vmem:[%s469 + $0x38] sm:$0xff]
      %v1317 = vld [vmem:[%s469 + $0x40] sm:$0xff]
      %v1318 = vld [vmem:[%s469 + $0x48] sm:$0xff]
      %v1319 = vld [vmem:[%s469 + $0x50] sm:$0xff]
      %v1320 = vld [vmem:[%s469 + $0x58] sm:$0xff]
      %v1321 = vld [vmem:[%s469 + $0x60] sm:$0xff]
      %v1322 = vld [vmem:[%s469 + $0x68] sm:$0xff]
      %v1323 = vld [vmem:[%s469 + $0x70] sm:$0xff]
      %v1324 = vld [vmem:[%s469 + $0x78] sm:$0xff]
      %v1325 = vld [vmem:[%s7] sm:$0x3f]
      %vm1326 = vcmask 48128
      %v1328 = vsel %vm1326, %v1309, 0
      %v1331 = vsel %vm1326, %v1310, 0
      %v1334 = vsel %vm1326, %v1311, 0
      %v1337 = vsel %vm1326, %v1312, 0
      %v1340 = vsel %vm1326, %v1313, 0
      %v1343 = vsel %vm1326, %v1314, 0
      %v1346 = vsel %vm1326, %v1315, 0
      %v1349 = vsel %vm1326, %v1316, 0
      %v1352 = vsel %vm1326, %v1317, 0
      %v1355 = vsel %vm1326, %v1318, 0
      %v1358 = vsel %vm1326, %v1319, 0
      %v1361 = vsel %vm1326, %v1320, 0
      %v1364 = vsel %vm1326, %v1321, 0
      %v1367 = vsel %vm1326, %v1322, 0
      %v1370 = vsel %vm1326, %v1323, 0
      %v1373 = vsel %vm1326, %v1324, 0
      %vm1375 = vcmask 1045504
      %v1377 = vsel %vm1375, %v1325, 0
      %1379 = vmatprep.subr.mxu0 0.0
      %1380 = vmatpush1.msra.mxu0 %v1377
      %1381 = vmatprep.subr.mxu0 0.0
      %1382 = vmatpush1.msra.mxu0 0.0
      %1383 = vmatprep.subr.mxu0 0.0
      %1384 = vmatpush1.msra.mxu0 0.0
      %1385 = vmatprep.subr.mxu0 0.0
      %1386 = vmatpush1.msra.mxu0 0.0
      %1387 = vmatprep.subr.mxu0 0.0
      %1388 = vmatpush1.msra.mxu0 0.0
      %1389 = vmatprep.subr.mxu0 0.0
      %1390 = vmatpush1.msra.mxu0 0.0
      %1391 = vmatprep.subr.mxu0 0.0
      %1392 = vmatpush1.msra.mxu0 0.0
      %1393 = vmatprep.subr.mxu0 0.0
      %1394 = vmatpush1.msra.mxu0 0.0
      %1395 = vmatprep.subr.mxu0 0.0
      %1396 = vmatpush1.msra.mxu0 0.0
      %1397 = vmatprep.subr.mxu0 0.0
      %1398 = vmatpush1.msra.mxu0 0.0
      %1399 = vmatprep.subr.mxu0 0.0
      %1400 = vmatpush1.msra.mxu0 0.0
      %1401 = vmatprep.subr.mxu0 0.0
      %1402 = vmatpush1.msra.mxu0 0.0
      %1403 = vmatprep.subr.mxu0 0.0
      %1404 = vmatpush1.msra.mxu0 0.0
      %1405 = vmatprep.subr.mxu0 0.0
      %1406 = vmatpush1.msra.mxu0 0.0
      %1407 = vmatprep.subr.mxu0 0.0
      %1408 = vmatpush1.msra.mxu0 0.0
      %1409 = vmatprep.subr.mxu0 0.0
      %1410 = vmatpush1.msra.mxu0 0.0
      %1411 = vmatprep.subr.mxu0 0.0
      %1412 = vmatpush1.msra.mxu0 0.0
      %1413 = vmatprep.subr.mxu0 0.0
      %1414 = vmatpush1.msra.mxu0 0.0
      %1415 = vmatprep.subr.mxu0 0.0
      %1416 = vmatpush1.msra.mxu0 0.0
      %1417 = vmatprep.subr.mxu0 0.0
      %1418 = vmatpush1.msra.mxu0 0.0
      %1419 = vmatprep.subr.mxu0 0.0
      %1420 = vmatpush1.msra.mxu0 0.0
      %1421 = vmatprep.subr.mxu0 0.0
      %1422 = vmatpush1.msra.mxu0 0.0
      %1423 = vmatprep.subr.mxu0 0.0
      %1424 = vmatpush1.msra.mxu0 0.0
      %1425 = vmatprep.subr.mxu0 0.0
      %1426 = vmatpush1.msra.mxu0 0.0
      %1427 = vmatprep.subr.mxu0 0.0
      %1428 = vmatpush1.msra.mxu0 0.0
      %1429 = vmatprep.subr.mxu0 0.0
      %1430 = vmatpush1.msra.mxu0 0.0
      %1431 = vmatprep.subr.mxu0 0.0
      %1432 = vmatpush1.msra.mxu0 0.0
      %1433 = vmatprep.subr.mxu0 0.0
      %1434 = vmatpush1.msra.mxu0 0.0
      %1435 = vmatprep.subr.mxu0 0.0
      %1436 = vmatpush1.msra.mxu0 0.0
      %1437 = vmatprep.subr.mxu0 0.0
      %1438 = vmatpush1.msra.mxu0 0.0
      %1439 = vmatprep.subr.mxu0 0.0
      %1440 = vmatpush1.msra.mxu0 0.0
      %1441 = vmatprep.subr.mxu0 0.0
      %1442 = vmatpush1.msra.mxu0 0.0
      %1443 = vmatprep.mubr.f32.mxu0 0.0
      %1444 = vmatmul.mubr.f32.gmra.mrb[0].mxu0 %v1328
      %v1445 = vpop.f32.mrb[0].mxu0
      %v1446 = vadd.f32 0.0, %v1445
      %v1447 = vpop.f32.mrb[0].mxu0
      %1448 = vmatprep.mubr.f32.mxu0 0.0
      %1449 = vmatmul.mubr.f32.gmra.mrb[0].mxu0 %v1331
      %v1450 = vpop.f32.mrb[0].mxu0
      %v1451 = vadd.f32 0.0, %v1450
      %v1452 = vpop.f32.mrb[0].mxu0
      %1453 = vmatprep.mubr.f32.mxu0 0.0
      %1454 = vmatmul.mubr.f32.gmra.mrb[0].mxu0 %v1334
      %v1455 = vpop.f32.mrb[0].mxu0
      %v1456 = vadd.f32 0.0, %v1455
      %v1457 = vpop.f32.mrb[0].mxu0
      %1458 = vmatprep.mubr.f32.mxu0 0.0
      %1459 = vmatmul.mubr.f32.gmra.mrb[0].mxu0 %v1337
      %v1460 = vpop.f32.mrb[0].mxu0
      %v1461 = vadd.f32 0.0, %v1460
      %v1462 = vpop.f32.mrb[0].mxu0
      %1463 = vmatprep.mubr.f32.mxu0 0.0
      %1464 = vmatmul.mubr.f32.gmra.mrb[0].mxu0 %v1340
      %v1465 = vpop.f32.mrb[0].mxu0
      %v1466 = vadd.f32 0.0, %v1465
      %v1467 = vpop.f32.mrb[0].mxu0
      %1468 = vmatprep.mubr.f32.mxu0 0.0
      %1469 = vmatmul.mubr.f32.gmra.mrb[0].mxu0 %v1343
      %v1470 = vpop.f32.mrb[0].mxu0
      %v1471 = vadd.f32 0.0, %v1470
      %v1472 = vpop.f32.mrb[0].mxu0
      %1473 = vmatprep.mubr.f32.mxu0 0.0
      %1474 = vmatmul.mubr.f32.gmra.mrb[0].mxu0 %v1346
      %v1475 = vpop.f32.mrb[0].mxu0
      %v1476 = vadd.f32 0.0, %v1475
      %v1477 = vpop.f32.mrb[0].mxu0
      %1478 = vmatprep.mubr.f32.mxu0 0.0
      %1479 = vmatmul.mubr.f32.gmra.mrb[0].mxu0 %v1349
      %v1480 = vpop.f32.mrb[0].mxu0
      %v1481 = vadd.f32 0.0, %v1480
      %v1482 = vpop.f32.mrb[0].mxu0
      %1483 = vmatprep.mubr.f32.mxu0 0.0
      %1484 = vmatmul.mubr.f32.gmra.mrb[0].mxu0 %v1352
      %v1485 = vpop.f32.mrb[0].mxu0
      %v1486 = vadd.f32 0.0, %v1485
      %v1487 = vpop.f32.mrb[0].mxu0
      %1488 = vmatprep.mubr.f32.mxu0 0.0
      %1489 = vmatmul.mubr.f32.gmra.mrb[0].mxu0 %v1355
      %v1490 = vpop.f32.mrb[0].mxu0
      %v1491 = vadd.f32 0.0, %v1490
      %v1492 = vpop.f32.mrb[0].mxu0
      %1493 = vmatprep.mubr.f32.mxu0 0.0
      %1494 = vmatmul.mubr.f32.gmra.mrb[0].mxu0 %v1358
      %v1495 = vpop.f32.mrb[0].mxu0
      %v1496 = vadd.f32 0.0, %v1495
      %v1497 = vpop.f32.mrb[0].mxu0
      %1498 = vmatprep.mubr.f32.mxu0 0.0
      %1499 = vmatmul.mubr.f32.gmra.mrb[0].mxu0 %v1361
      %v1500 = vpop.f32.mrb[0].mxu0
      %v1501 = vadd.f32 0.0, %v1500
      %v1502 = vpop.f32.mrb[0].mxu0
      %1503 = vmatprep.mubr.f32.mxu0 0.0
      %1504 = vmatmul.mubr.f32.gmra.mrb[0].mxu0 %v1364
      %v1505 = vpop.f32.mrb[0].mxu0
      %v1506 = vadd.f32 0.0, %v1505
      %v1507 = vpop.f32.mrb[0].mxu0
      %1508 = vmatprep.mubr.f32.mxu0 0.0
      %1509 = vmatmul.mubr.f32.gmra.mrb[0].mxu0 %v1367
      %v1510 = vpop.f32.mrb[0].mxu0
      %v1511 = vadd.f32 0.0, %v1510
      %v1512 = vpop.f32.mrb[0].mxu0
      %1513 = vmatprep.mubr.f32.mxu0 0.0
      %1514 = vmatmul.mubr.f32.gmra.mrb[0].mxu0 %v1370
      %v1515 = vpop.f32.mrb[0].mxu0
      %v1516 = vadd.f32 0.0, %v1515
      %v1517 = vpop.f32.mrb[0].mxu0
      %1518 = vmatprep.mubr.f32.mxu0 0.0
      %1519 = vmatmul.mubr.f32.gmra.mrb[0].mxu0 %v1373
      %v1520 = vpop.f32.mrb[0].mxu0
      %v1521 = vadd.f32 0.0, %v1520
      %v1522 = vpop.f32.mrb[0].mxu0
      %1523 = vdwg.mxu0
      %v1524 = vld [vmem:[#allocation2] sm:$0xff]
      %v1525 = vld [vmem:[#allocation2 + $0x8] sm:$0xff]
      %v1526 = vld [vmem:[#allocation2 + $0x10] sm:$0xff]
      %v1527 = vld [vmem:[#allocation2 + $0x18] sm:$0xff]
      %v1528 = vld [vmem:[#allocation2 + $0x20] sm:$0xff]
      %v1529 = vld [vmem:[#allocation2 + $0x28] sm:$0xff]
      %v1530 = vld [vmem:[#allocation2 + $0x30] sm:$0xff]
      %v1531 = vld [vmem:[#allocation2 + $0x38] sm:$0xff]
      %v1532 = vld [vmem:[#allocation2 + $0x40] sm:$0xff]
      %v1533 = vld [vmem:[#allocation2 + $0x48] sm:$0xff]
      %v1534 = vld [vmem:[#allocation2 + $0x50] sm:$0xff]
      %v1535 = vld [vmem:[#allocation2 + $0x58] sm:$0xff]
      %v1536 = vld [vmem:[#allocation2 + $0x60] sm:$0xff]
      %v1537 = vld [vmem:[#allocation2 + $0x68] sm:$0xff]
      %v1538 = vld [vmem:[#allocation2 + $0x70] sm:$0xff]
      %v1539 = vld [vmem:[#allocation2 + $0x78] sm:$0xff]
      %1540 = vmatprep.subr.mxu0 0.0
      %1541 = vmatpush1.msra.mxu0 %v1524
      %1542 = vmatprep.subr.mxu0 0.0
      %1543 = vmatpush1.msra.mxu0 %v1525
      %1544 = vmatprep.subr.mxu0 0.0
      %1545 = vmatpush1.msra.mxu0 %v1526
      %1546 = vmatprep.subr.mxu0 0.0
      %1547 = vmatpush1.msra.mxu0 %v1527
      %1548 = vmatprep.subr.mxu0 0.0
      %1549 = vmatpush1.msra.mxu0 %v1528
      %1550 = vmatprep.subr.mxu0 0.0
      %1551 = vmatpush1.msra.mxu0 %v1529
      %1552 = vmatprep.subr.mxu0 0.0
      %1553 = vmatpush1.msra.mxu0 %v1530
      %1554 = vmatprep.subr.mxu0 0.0
      %1555 = vmatpush1.msra.mxu0 %v1531
      %1556 = vmatprep.subr.mxu0 0.0
      %1557 = vmatpush1.msra.mxu0 %v1532
      %1558 = vmatprep.subr.mxu0 0.0
      %1559 = vmatpush1.msra.mxu0 %v1533
      %1560 = vmatprep.subr.mxu0 0.0
      %1561 = vmatpush1.msra.mxu0 %v1534
      %1562 = vmatprep.subr.mxu0 0.0
      %1563 = vmatpush1.msra.mxu0 %v1535
      %1564 = vmatprep.subr.mxu0 0.0
      %1565 = vmatpush1.msra.mxu0 %v1536
      %1566 = vmatprep.subr.mxu0 0.0
      %1567 = vmatpush1.msra.mxu0 %v1537
      %1568 = vmatprep.subr.mxu0 0.0
      %1569 = vmatpush1.msra.mxu0 %v1538
      %1570 = vmatprep.subr.mxu0 0.0
      %1571 = vmatpush1.msra.mxu0 %v1539
      %1572 = vmatprep.subr.mxu0 0.0
      %1573 = vmatpush1.msra.mxu0 0.0
      %1574 = vmatprep.subr.mxu0 0.0
      %1575 = vmatpush1.msra.mxu0 0.0
      %1576 = vmatprep.subr.mxu0 0.0
      %1577 = vmatpush1.msra.mxu0 0.0
      %1578 = vmatprep.subr.mxu0 0.0
      %1579 = vmatpush1.msra.mxu0 0.0
      %1580 = vmatprep.subr.mxu0 0.0
      %1581 = vmatpush1.msra.mxu0 0.0
      %1582 = vmatprep.subr.mxu0 0.0
      %1583 = vmatpush1.msra.mxu0 0.0
      %1584 = vmatprep.subr.mxu0 0.0
      %1585 = vmatpush1.msra.mxu0 0.0
      %1586 = vmatprep.subr.mxu0 0.0
      %1587 = vmatpush1.msra.mxu0 0.0
      %1588 = vmatprep.subr.mxu0 0.0
      %1589 = vmatpush1.msra.mxu0 0.0
      %1590 = vmatprep.subr.mxu0 0.0
      %1591 = vmatpush1.msra.mxu0 0.0
      %1592 = vmatprep.subr.mxu0 0.0
      %1593 = vmatpush1.msra.mxu0 0.0
      %1594 = vmatprep.subr.mxu0 0.0
      %1595 = vmatpush1.msra.mxu0 0.0
      %1596 = vmatprep.subr.mxu0 0.0
      %1597 = vmatpush1.msra.mxu0 0.0
      %1598 = vmatprep.subr.mxu0 0.0
      %1599 = vmatpush1.msra.mxu0 0.0
      %1600 = vmatprep.subr.mxu0 0.0
      %1601 = vmatpush1.msra.mxu0 0.0
      %1602 = vmatprep.subr.mxu0 0.0
      %1603 = vmatpush1.msra.mxu0 0.0
      %1604 = vmatprep.mubr.f32.mxu0 0.0
      %1605 = vmatmul.mubr.f32.gmra.mrb[0].mxu0 %v1240
      %v1606 = vpop.f32.mrb[0].mxu0
      %v1607 = vadd.f32 0.0, %v1606
      %v1608 = vpop.f32.mrb[0].mxu0
      %1609 = vmatprep.mubr.f32.mxu0 0.0
      %1610 = vmatmul.mubr.f32.gmra.mrb[0].mxu0 %v1241
      %v1611 = vpop.f32.mrb[0].mxu0
      %v1612 = vadd.f32 0.0, %v1611
      %v1613 = vpop.f32.mrb[0].mxu0
      %1614 = vmatprep.mubr.f32.mxu0 0.0
      %1615 = vmatmul.mubr.f32.gmra.mrb[0].mxu0 %v1242
      %v1616 = vpop.f32.mrb[0].mxu0
      %v1617 = vadd.f32 0.0, %v1616
      %v1618 = vpop.f32.mrb[0].mxu0
      %1619 = vmatprep.mubr.f32.mxu0 0.0
      %1620 = vmatmul.mubr.f32.gmra.mrb[0].mxu0 %v1243
      %v1621 = vpop.f32.mrb[0].mxu0
      %v1622 = vadd.f32 0.0, %v1621
      %v1623 = vpop.f32.mrb[0].mxu0
      %1624 = vmatprep.mubr.f32.mxu0 0.0
      %1625 = vmatmul.mubr.f32.gmra.mrb[0].mxu0 %v1244
      %v1626 = vpop.f32.mrb[0].mxu0
      %v1627 = vadd.f32 0.0, %v1626
      %v1628 = vpop.f32.mrb[0].mxu0
      %1629 = vmatprep.mubr.f32.mxu0 0.0
      %1630 = vmatmul.mubr.f32.gmra.mrb[0].mxu0 %v1245
      %v1631 = vpop.f32.mrb[0].mxu0
      %v1632 = vadd.f32 0.0, %v1631
      %v1633 = vpop.f32.mrb[0].mxu0
      %1634 = vmatprep.mubr.f32.mxu0 0.0
      %1635 = vmatmul.mubr.f32.gmra.mrb[0].mxu0 %v1246
      %v1636 = vpop.f32.mrb[0].mxu0
      %v1637 = vadd.f32 0.0, %v1636
      %v1638 = vpop.f32.mrb[0].mxu0
      %1639 = vmatprep.mubr.f32.mxu0 0.0
      %1640 = vmatmul.mubr.f32.gmra.mrb[0].mxu0 %v1247
      %v1641 = vpop.f32.mrb[0].mxu0
      %v1642 = vadd.f32 0.0, %v1641
      %v1643 = vpop.f32.mrb[0].mxu0
      %1644 = vmatprep.mubr.f32.mxu0 0.0
      %1645 = vmatmul.mubr.f32.gmra.mrb[0].mxu0 %v1248
      %v1646 = vpop.f32.mrb[0].mxu0
      %v1647 = vadd.f32 0.0, %v1646
      %v1648 = vpop.f32.mrb[0].mxu0
      %1649 = vmatprep.mubr.f32.mxu0 0.0
      %1650 = vmatmul.mubr.f32.gmra.mrb[0].mxu0 %v1249
      %v1651 = vpop.f32.mrb[0].mxu0
      %v1652 = vadd.f32 0.0, %v1651
      %v1653 = vpop.f32.mrb[0].mxu0
      %1654 = vmatprep.mubr.f32.mxu0 0.0
      %1655 = vmatmul.mubr.f32.gmra.mrb[0].mxu0 %v1250
      %v1656 = vpop.f32.mrb[0].mxu0
      %v1657 = vadd.f32 0.0, %v1656
      %v1658 = vpop.f32.mrb[0].mxu0
      %1659 = vmatprep.mubr.f32.mxu0 0.0
      %1660 = vmatmul.mubr.f32.gmra.mrb[0].mxu0 %v1251
      %v1661 = vpop.f32.mrb[0].mxu0
      %v1662 = vadd.f32 0.0, %v1661
      %v1663 = vpop.f32.mrb[0].mxu0
      %1664 = vmatprep.mubr.f32.mxu0 0.0
      %1665 = vmatmul.mubr.f32.gmra.mrb[0].mxu0 %v1252
      %v1666 = vpop.f32.mrb[0].mxu0
      %v1667 = vadd.f32 0.0, %v1666
      %v1668 = vpop.f32.mrb[0].mxu0
      %1669 = vmatprep.mubr.f32.mxu0 0.0
      %1670 = vmatmul.mubr.f32.gmra.mrb[0].mxu0 %v1253
      %v1671 = vpop.f32.mrb[0].mxu0
      %v1672 = vadd.f32 0.0, %v1671
      %v1673 = vpop.f32.mrb[0].mxu0
      %1674 = vmatprep.mubr.f32.mxu0 0.0
      %1675 = vmatmul.mubr.f32.gmra.mrb[0].mxu0 %v1254
      %v1676 = vpop.f32.mrb[0].mxu0
      %v1677 = vadd.f32 0.0, %v1676
      %v1678 = vpop.f32.mrb[0].mxu0
      %1679 = vmatprep.mubr.f32.mxu0 0.0
      %1680 = vmatmul.mubr.f32.gmra.mrb[0].mxu0 %v1255
      %v1681 = vpop.f32.mrb[0].mxu0
      %v1682 = vadd.f32 0.0, %v1681
      %v1683 = vpop.f32.mrb[0].mxu0
      %1684 = vdwg.mxu0
      %v1685 = vld [vmem:[#allocation3] sm:$0xff]
      %v1686 = vld [vmem:[#allocation3 + $0x8] sm:$0xff]
      %v1687 = vld [vmem:[#allocation3 + $0x10] sm:$0xff]
      %v1688 = vld [vmem:[#allocation3 + $0x18] sm:$0xff]
      %v1689 = vld [vmem:[#allocation3 + $0x20] sm:$0xff]
      %v1690 = vld [vmem:[#allocation3 + $0x28] sm:$0xff]
      %v1691 = vld [vmem:[#allocation3 + $0x30] sm:$0xff]
      %v1692 = vld [vmem:[#allocation3 + $0x38] sm:$0xff]
      %v1693 = vld [vmem:[#allocation3 + $0x40] sm:$0xff]
      %v1694 = vld [vmem:[#allocation3 + $0x48] sm:$0xff]
      %v1695 = vld [vmem:[#allocation3 + $0x50] sm:$0xff]
      %v1696 = vld [vmem:[#allocation3 + $0x58] sm:$0xff]
      %v1697 = vld [vmem:[#allocation3 + $0x60] sm:$0xff]
      %v1698 = vld [vmem:[#allocation3 + $0x68] sm:$0xff]
      %v1699 = vld [vmem:[#allocation3 + $0x70] sm:$0xff]
      %v1700 = vld [vmem:[#allocation3 + $0x78] sm:$0xff]
      %v1701 = vld [vmem:[#allocation3 + $0x80] sm:$0xff]
      %v1702 = vld [vmem:[#allocation3 + $0x88] sm:$0xff]
      %v1703 = vld [vmem:[#allocation3 + $0x90] sm:$0xff]
      %v1704 = vld [vmem:[#allocation3 + $0x98] sm:$0xff]
      %v1705 = vld [vmem:[#allocation3 + $0xa0] sm:$0xff]
      %v1706 = vld [vmem:[#allocation3 + $0xa8] sm:$0xff]
      %v1707 = vld [vmem:[#allocation3 + $0xb0] sm:$0xff]
      %v1708 = vld [vmem:[#allocation3 + $0xb8] sm:$0xff]
      %v1709 = vld [vmem:[#allocation3 + $0xc0] sm:$0xff]
      %v1710 = vld [vmem:[#allocation3 + $0xc8] sm:$0xff]
      %v1711 = vld [vmem:[#allocation3 + $0xd0] sm:$0xff]
      %v1712 = vld [vmem:[#allocation3 + $0xd8] sm:$0xff]
      %v1713 = vld [vmem:[#allocation3 + $0xe0] sm:$0xff]
      %v1714 = vld [vmem:[#allocation3 + $0xe8] sm:$0xff]
      %v1715 = vld [vmem:[#allocation3 + $0xf0] sm:$0xff]
      %v1716 = vld [vmem:[#allocation3 + $0xf8] sm:$0xff]
      %1717 = vmatprep.subr.mxu0 %v1686
      %1718 = vmatpush1.msra.mxu0 %v1685
      %1719 = vmatprep.subr.mxu0 %v1688
      %1720 = vmatpush1.msra.mxu0 %v1687
      %1721 = vmatprep.subr.mxu0 %v1690
      %1722 = vmatpush1.msra.mxu0 %v1689
      %1723 = vmatprep.subr.mxu0 %v1692
      %1724 = vmatpush1.msra.mxu0 %v1691
      %1725 = vmatprep.subr.mxu0 %v1694
      %1726 = vmatpush1.msra.mxu0 %v1693
      %1727 = vmatprep.subr.mxu0 %v1696
      %1728 = vmatpush1.msra.mxu0 %v1695
      %1729 = vmatprep.subr.mxu0 %v1698
      %1730 = vmatpush1.msra.mxu0 %v1697
      %1731 = vmatprep.subr.mxu0 %v1700
      %1732 = vmatpush1.msra.mxu0 %v1699
      %1733 = vmatprep.subr.mxu0 %v1702
      %1734 = vmatpush1.msra.mxu0 %v1701
      %1735 = vmatprep.subr.mxu0 %v1704
      %1736 = vmatpush1.msra.mxu0 %v1703
      %1737 = vmatprep.subr.mxu0 %v1706
      %1738 = vmatpush1.msra.mxu0 %v1705
      %1739 = vmatprep.subr.mxu0 %v1708
      %1740 = vmatpush1.msra.mxu0 %v1707
      %1741 = vmatprep.subr.mxu0 %v1710
      %1742 = vmatpush1.msra.mxu0 %v1709
      %1743 = vmatprep.subr.mxu0 %v1712
      %1744 = vmatpush1.msra.mxu0 %v1711
      %1745 = vmatprep.subr.mxu0 %v1714
      %1746 = vmatpush1.msra.mxu0 %v1713
      %1747 = vmatprep.subr.mxu0 %v1716
      %1748 = vmatpush1.msra.mxu0 %v1715
      %1749 = vmatprep.subr.mxu0 0.0
      %1750 = vmatpush1.msra.mxu0 0.0
      %1751 = vmatprep.subr.mxu0 0.0
      %1752 = vmatpush1.msra.mxu0 0.0
      %1753 = vmatprep.subr.mxu0 0.0
      %1754 = vmatpush1.msra.mxu0 0.0
      %1755 = vmatprep.subr.mxu0 0.0
      %1756 = vmatpush1.msra.mxu0 0.0
      %1757 = vmatprep.subr.mxu0 0.0
      %1758 = vmatpush1.msra.mxu0 0.0
      %1759 = vmatprep.subr.mxu0 0.0
      %1760 = vmatpush1.msra.mxu0 0.0
      %1761 = vmatprep.subr.mxu0 0.0
      %1762 = vmatpush1.msra.mxu0 0.0
      %1763 = vmatprep.subr.mxu0 0.0
      %1764 = vmatpush1.msra.mxu0 0.0
      %1765 = vmatprep.subr.mxu0 0.0
      %1766 = vmatpush1.msra.mxu0 0.0
      %1767 = vmatprep.subr.mxu0 0.0
      %1768 = vmatpush1.msra.mxu0 0.0
      %1769 = vmatprep.subr.mxu0 0.0
      %1770 = vmatpush1.msra.mxu0 0.0
      %1771 = vmatprep.subr.mxu0 0.0
      %1772 = vmatpush1.msra.mxu0 0.0
      %1773 = vmatprep.subr.mxu0 0.0
      %1774 = vmatpush1.msra.mxu0 0.0
      %1775 = vmatprep.subr.mxu0 0.0
      %1776 = vmatpush1.msra.mxu0 0.0
      %1777 = vmatprep.subr.mxu0 0.0
      %1778 = vmatpush1.msra.mxu0 0.0
      %1779 = vmatprep.subr.mxu0 0.0
      %1780 = vmatpush1.msra.mxu0 0.0
      %1781 = vmatprep.mubr.f32.mxu0 0.0
      %1782 = vmatmul.mubr.f32.gmra.mrb[0].mxu0 %v1128
      %v1783 = vpop.f32.mrb[0].mxu0
      %v1784 = vadd.f32 0.0, %v1783
      %v1785 = vpop.f32.mrb[0].mxu0
      %v1786 = vadd.f32 0.0, %v1785
      %1787 = vmatprep.mubr.f32.mxu0 0.0
      %1788 = vmatmul.mubr.f32.gmra.mrb[0].mxu0 %v1129
      %v1789 = vpop.f32.mrb[0].mxu0
      %v1790 = vadd.f32 0.0, %v1789
      %v1791 = vpop.f32.mrb[0].mxu0
      %v1792 = vadd.f32 0.0, %v1791
      %1793 = vmatprep.mubr.f32.mxu0 0.0
      %1794 = vmatmul.mubr.f32.gmra.mrb[0].mxu0 %v1130
      %v1795 = vpop.f32.mrb[0].mxu0
      %v1796 = vadd.f32 0.0, %v1795
      %v1797 = vpop.f32.mrb[0].mxu0
      %v1798 = vadd.f32 0.0, %v1797
      %1799 = vmatprep.mubr.f32.mxu0 0.0
      %1800 = vmatmul.mubr.f32.gmra.mrb[0].mxu0 %v1131
      %v1801 = vpop.f32.mrb[0].mxu0
      %v1802 = vadd.f32 0.0, %v1801
      %v1803 = vpop.f32.mrb[0].mxu0
      %v1804 = vadd.f32 0.0, %v1803
      %1805 = vmatprep.mubr.f32.mxu0 0.0
      %1806 = vmatmul.mubr.f32.gmra.mrb[0].mxu0 %v1132
      %v1807 = vpop.f32.mrb[0].mxu0
      %v1808 = vadd.f32 0.0, %v1807
      %v1809 = vpop.f32.mrb[0].mxu0
      %v1810 = vadd.f32 0.0, %v1809
      %1811 = vmatprep.mubr.f32.mxu0 0.0
      %1812 = vmatmul.mubr.f32.gmra.mrb[0].mxu0 %v1133
      %v1813 = vpop.f32.mrb[0].mxu0
      %v1814 = vadd.f32 0.0, %v1813
      %v1815 = vpop.f32.mrb[0].mxu0
      %v1816 = vadd.f32 0.0, %v1815
      %1817 = vmatprep.mubr.f32.mxu0 0.0
      %1818 = vmatmul.mubr.f32.gmra.mrb[0].mxu0 %v1134
      %v1819 = vpop.f32.mrb[0].mxu0
      %v1820 = vadd.f32 0.0, %v1819
      %v1821 = vpop.f32.mrb[0].mxu0
      %v1822 = vadd.f32 0.0, %v1821
      %1823 = vmatprep.mubr.f32.mxu0 0.0
      %1824 = vmatmul.mubr.f32.gmra.mrb[0].mxu0 %v1135
      %v1825 = vpop.f32.mrb[0].mxu0
      %v1826 = vadd.f32 0.0, %v1825
      %v1827 = vpop.f32.mrb[0].mxu0
      %v1828 = vadd.f32 0.0, %v1827
      %1829 = vmatprep.mubr.f32.mxu0 0.0
      %1830 = vmatmul.mubr.f32.gmra.mrb[0].mxu0 %v1136
      %v1831 = vpop.f32.mrb[0].mxu0
      %v1832 = vadd.f32 0.0, %v1831
      %v1833 = vpop.f32.mrb[0].mxu0
      %v1834 = vadd.f32 0.0, %v1833
      %1835 = vmatprep.mubr.f32.mxu0 0.0
      %1836 = vmatmul.mubr.f32.gmra.mrb[0].mxu0 %v1137
      %v1837 = vpop.f32.mrb[0].mxu0
      %v1838 = vadd.f32 0.0, %v1837
      %v1839 = vpop.f32.mrb[0].mxu0
      %v1840 = vadd.f32 0.0, %v1839
      %1841 = vmatprep.mubr.f32.mxu0 0.0
      %1842 = vmatmul.mubr.f32.gmra.mrb[0].mxu0 %v1138
      %v1843 = vpop.f32.mrb[0].mxu0
      %v1844 = vadd.f32 0.0, %v1843
      %v1845 = vpop.f32.mrb[0].mxu0
      %v1846 = vadd.f32 0.0, %v1845
      %1847 = vmatprep.mubr.f32.mxu0 0.0
      %1848 = vmatmul.mubr.f32.gmra.mrb[0].mxu0 %v1139
      %v1849 = vpop.f32.mrb[0].mxu0
      %v1850 = vadd.f32 0.0, %v1849
      %v1851 = vpop.f32.mrb[0].mxu0
      %v1852 = vadd.f32 0.0, %v1851
      %1853 = vmatprep.mubr.f32.mxu0 0.0
      %1854 = vmatmul.mubr.f32.gmra.mrb[0].mxu0 %v1140
      %v1855 = vpop.f32.mrb[0].mxu0
      %v1856 = vadd.f32 0.0, %v1855
      %v1857 = vpop.f32.mrb[0].mxu0
      %v1858 = vadd.f32 0.0, %v1857
      %1859 = vmatprep.mubr.f32.mxu0 0.0
      %1860 = vmatmul.mubr.f32.gmra.mrb[0].mxu0 %v1141
      %v1861 = vpop.f32.mrb[0].mxu0
      %v1862 = vadd.f32 0.0, %v1861
      %v1863 = vpop.f32.mrb[0].mxu0
      %v1864 = vadd.f32 0.0, %v1863
      %1865 = vmatprep.mubr.f32.mxu0 0.0
      %1866 = vmatmul.mubr.f32.gmra.mrb[0].mxu0 %v1142
      %v1867 = vpop.f32.mrb[0].mxu0
      %v1868 = vadd.f32 0.0, %v1867
      %v1869 = vpop.f32.mrb[0].mxu0
      %v1870 = vadd.f32 0.0, %v1869
      %1871 = vmatprep.mubr.f32.mxu0 0.0
      %1872 = vmatmul.mubr.f32.gmra.mrb[0].mxu0 %v1143
      %v1873 = vpop.f32.mrb[0].mxu0
      %v1874 = vadd.f32 0.0, %v1873
      %v1875 = vpop.f32.mrb[0].mxu0
      %v1876 = vadd.f32 0.0, %v1875
      %1877 = vdwg.mxu0
      %v1878 = vadd.f32 %v1784, %v1446
      %v1879 = vadd.f32 %v1790, %v1451
      %v1880 = vadd.f32 %v1796, %v1456
      %v1881 = vadd.f32 %v1802, %v1461
      %v1882 = vadd.f32 %v1808, %v1466
      %v1883 = vadd.f32 %v1814, %v1471
      %v1884 = vadd.f32 %v1820, %v1476
      %v1885 = vadd.f32 %v1826, %v1481
      %v1886 = vadd.f32 %v1832, %v1486
      %v1887 = vadd.f32 %v1838, %v1491
      %v1888 = vadd.f32 %v1844, %v1496
      %v1889 = vadd.f32 %v1850, %v1501
      %v1890 = vadd.f32 %v1856, %v1506
      %v1891 = vadd.f32 %v1862, %v1511
      %v1892 = vadd.f32 %v1868, %v1516
      %v1893 = vadd.f32 %v1874, %v1521
      %v1894 = vadd.f32 %v1786, %v1446
      %v1895 = vadd.f32 %v1792, %v1451
      %v1896 = vadd.f32 %v1798, %v1456
      %v1897 = vadd.f32 %v1804, %v1461
      %v1898 = vadd.f32 %v1810, %v1466
      %v1899 = vadd.f32 %v1816, %v1471
      %v1900 = vadd.f32 %v1822, %v1476
      %v1901 = vadd.f32 %v1828, %v1481
      %v1902 = vadd.f32 %v1834, %v1486
      %v1903 = vadd.f32 %v1840, %v1491
      %v1904 = vadd.f32 %v1846, %v1496
      %v1905 = vadd.f32 %v1852, %v1501
      %v1906 = vadd.f32 %v1858, %v1506
      %v1907 = vadd.f32 %v1864, %v1511
      %v1908 = vadd.f32 %v1870, %v1516
      %v1909 = vadd.f32 %v1876, %v1521
      %v1910 = vmul.f32 %v1607, %v1878
      %v1911 = vmul.f32 %v1612, %v1879
      %v1912 = vmul.f32 %v1617, %v1880
      %v1913 = vmul.f32 %v1622, %v1881
      %v1914 = vmul.f32 %v1627, %v1882
      %v1915 = vmul.f32 %v1632, %v1883
      %v1916 = vmul.f32 %v1637, %v1884
      %v1917 = vmul.f32 %v1642, %v1885
      %v1918 = vmul.f32 %v1647, %v1886
      %v1919 = vmul.f32 %v1652, %v1887
      %v1920 = vmul.f32 %v1657, %v1888
      %v1921 = vmul.f32 %v1662, %v1889
      %v1922 = vmul.f32 %v1667, %v1890
      %v1923 = vmul.f32 %v1672, %v1891
      %v1924 = vmul.f32 %v1677, %v1892
      %v1925 = vmul.f32 %v1682, %v1893
      %v1926 = vld [vmem:[%s8] sm:$0xff]
      %v1927 = vld [vmem:[%s8 + $0x8] sm:$0xff]
      %v1928 = vld [vmem:[%s8 + $0x10] sm:$0xff]
      %v1929 = vld [vmem:[%s8 + $0x18] sm:$0xff]
      %v1930 = vld [vmem:[%s8 + $0x20] sm:$0xff]
      %v1931 = vld [vmem:[%s8 + $0x28] sm:$0xff]
      %v1932 = vld [vmem:[%s8 + $0x30] sm:$0xff]
      %v1933 = vld [vmem:[%s8 + $0x38] sm:$0xff]
      %v1934 = vld [vmem:[%s8 + $0x40] sm:$0xff]
      %v1935 = vld [vmem:[%s8 + $0x48] sm:$0xff]
      %v1936 = vld [vmem:[%s8 + $0x50] sm:$0xff]
      %v1937 = vld [vmem:[%s8 + $0x58] sm:$0xff]
      %v1938 = vld [vmem:[%s8 + $0x60] sm:$0xff]
      %v1939 = vld [vmem:[%s8 + $0x68] sm:$0xff]
      %v1940 = vld [vmem:[%s8 + $0x70] sm:$0xff]
      %v1941 = vld [vmem:[%s8 + $0x78] sm:$0xff]
      %1942 = vmatprep.subr.mxu0 0.0
      %1943 = vmatpush1.msra.mxu0 %v1926
      %1944 = vmatprep.subr.mxu0 0.0
      %1945 = vmatpush1.msra.mxu0 %v1927
      %1946 = vmatprep.subr.mxu0 0.0
      %1947 = vmatpush1.msra.mxu0 %v1928
      %1948 = vmatprep.subr.mxu0 0.0
      %1949 = vmatpush1.msra.mxu0 %v1929
      %1950 = vmatprep.subr.mxu0 0.0
      %1951 = vmatpush1.msra.mxu0 %v1930
      %1952 = vmatprep.subr.mxu0 0.0
      %1953 = vmatpush1.msra.mxu0 %v1931
      %1954 = vmatprep.subr.mxu0 0.0
      %1955 = vmatpush1.msra.mxu0 %v1932
      %1956 = vmatprep.subr.mxu0 0.0
      %1957 = vmatpush1.msra.mxu0 %v1933
      %1958 = vmatprep.subr.mxu0 0.0
      %1959 = vmatpush1.msra.mxu0 %v1934
      %1960 = vmatprep.subr.mxu0 0.0
      %1961 = vmatpush1.msra.mxu0 %v1935
      %1962 = vmatprep.subr.mxu0 0.0
      %1963 = vmatpush1.msra.mxu0 %v1936
      %1964 = vmatprep.subr.mxu0 0.0
      %1965 = vmatpush1.msra.mxu0 %v1937
      %1966 = vmatprep.subr.mxu0 0.0
      %1967 = vmatpush1.msra.mxu0 %v1938
      %1968 = vmatprep.subr.mxu0 0.0
      %1969 = vmatpush1.msra.mxu0 %v1939
      %1970 = vmatprep.subr.mxu0 0.0
      %1971 = vmatpush1.msra.mxu0 %v1940
      %1972 = vmatprep.subr.mxu0 0.0
      %1973 = vmatpush1.msra.mxu0 %v1941
      %1974 = vmatprep.subr.mxu0 0.0
      %1975 = vmatpush1.msra.mxu0 0.0
      %1976 = vmatprep.subr.mxu0 0.0
      %1977 = vmatpush1.msra.mxu0 0.0
      %1978 = vmatprep.subr.mxu0 0.0
      %1979 = vmatpush1.msra.mxu0 0.0
      %1980 = vmatprep.subr.mxu0 0.0
      %1981 = vmatpush1.msra.mxu0 0.0
      %1982 = vmatprep.subr.mxu0 0.0
      %1983 = vmatpush1.msra.mxu0 0.0
      %1984 = vmatprep.subr.mxu0 0.0
      %1985 = vmatpush1.msra.mxu0 0.0
      %1986 = vmatprep.subr.mxu0 0.0
      %1987 = vmatpush1.msra.mxu0 0.0
      %1988 = vmatprep.subr.mxu0 0.0
      %1989 = vmatpush1.msra.mxu0 0.0
      %1990 = vmatprep.subr.mxu0 0.0
      %1991 = vmatpush1.msra.mxu0 0.0
      %1992 = vmatprep.subr.mxu0 0.0
      %1993 = vmatpush1.msra.mxu0 0.0
      %1994 = vmatprep.subr.mxu0 0.0
      %1995 = vmatpush1.msra.mxu0 0.0
      %1996 = vmatprep.subr.mxu0 0.0
      %1997 = vmatpush1.msra.mxu0 0.0
      %1998 = vmatprep.subr.mxu0 0.0
      %1999 = vmatpush1.msra.mxu0 0.0
      %2000 = vmatprep.subr.mxu0 0.0
      %2001 = vmatpush1.msra.mxu0 0.0
      %2002 = vmatprep.subr.mxu0 0.0
      %2003 = vmatpush1.msra.mxu0 0.0
      %2004 = vmatprep.subr.mxu0 0.0
      %2005 = vmatpush1.msra.mxu0 0.0
      %2006 = vmatprep.mubr.f32.mxu0 0.0
      %2007 = vmatmul.mubr.f32.gmra.mrb[0].mxu0 %v1910
      %v2008 = vpop.f32.mrb[0].mxu0
      %v2009 = vadd.f32 0.0, %v2008
      %v2010 = vpop.f32.mrb[0].mxu0
      %2011 = vmatprep.mubr.f32.mxu0 0.0
      %2012 = vmatmul.mubr.f32.gmra.mrb[0].mxu0 %v1911
      %v2013 = vpop.f32.mrb[0].mxu0
      %v2014 = vadd.f32 0.0, %v2013
      %v2015 = vpop.f32.mrb[0].mxu0
      %2016 = vmatprep.mubr.f32.mxu0 0.0
      %2017 = vmatmul.mubr.f32.gmra.mrb[0].mxu0 %v1912
      %v2018 = vpop.f32.mrb[0].mxu0
      %v2019 = vadd.f32 0.0, %v2018
      %v2020 = vpop.f32.mrb[0].mxu0
      %2021 = vmatprep.mubr.f32.mxu0 0.0
      %2022 = vmatmul.mubr.f32.gmra.mrb[0].mxu0 %v1913
      %v2023 = vpop.f32.mrb[0].mxu0
      %v2024 = vadd.f32 0.0, %v2023
      %v2025 = vpop.f32.mrb[0].mxu0
      %2026 = vmatprep.mubr.f32.mxu0 0.0
      %2027 = vmatmul.mubr.f32.gmra.mrb[0].mxu0 %v1914
      %v2028 = vpop.f32.mrb[0].mxu0
      %v2029 = vadd.f32 0.0, %v2028
      %v2030 = vpop.f32.mrb[0].mxu0
      %2031 = vmatprep.mubr.f32.mxu0 0.0
      %2032 = vmatmul.mubr.f32.gmra.mrb[0].mxu0 %v1915
      %v2033 = vpop.f32.mrb[0].mxu0
      %v2034 = vadd.f32 0.0, %v2033
      %v2035 = vpop.f32.mrb[0].mxu0
      %2036 = vmatprep.mubr.f32.mxu0 0.0
      %2037 = vmatmul.mubr.f32.gmra.mrb[0].mxu0 %v1916
      %v2038 = vpop.f32.mrb[0].mxu0
      %v2039 = vadd.f32 0.0, %v2038
      %v2040 = vpop.f32.mrb[0].mxu0
      %2041 = vmatprep.mubr.f32.mxu0 0.0
      %2042 = vmatmul.mubr.f32.gmra.mrb[0].mxu0 %v1917
      %v2043 = vpop.f32.mrb[0].mxu0
      %v2044 = vadd.f32 0.0, %v2043
      %v2045 = vpop.f32.mrb[0].mxu0
      %2046 = vmatprep.mubr.f32.mxu0 0.0
      %2047 = vmatmul.mubr.f32.gmra.mrb[0].mxu0 %v1918
      %v2048 = vpop.f32.mrb[0].mxu0
      %v2049 = vadd.f32 0.0, %v2048
      %v2050 = vpop.f32.mrb[0].mxu0
      %2051 = vmatprep.mubr.f32.mxu0 0.0
      %2052 = vmatmul.mubr.f32.gmra.mrb[0].mxu0 %v1919
      %v2053 = vpop.f32.mrb[0].mxu0
      %v2054 = vadd.f32 0.0, %v2053
      %v2055 = vpop.f32.mrb[0].mxu0
      %2056 = vmatprep.mubr.f32.mxu0 0.0
      %2057 = vmatmul.mubr.f32.gmra.mrb[0].mxu0 %v1920
      %v2058 = vpop.f32.mrb[0].mxu0
      %v2059 = vadd.f32 0.0, %v2058
      %v2060 = vpop.f32.mrb[0].mxu0
      %2061 = vmatprep.mubr.f32.mxu0 0.0
      %2062 = vmatmul.mubr.f32.gmra.mrb[0].mxu0 %v1921
      %v2063 = vpop.f32.mrb[0].mxu0
      %v2064 = vadd.f32 0.0, %v2063
      %v2065 = vpop.f32.mrb[0].mxu0
      %2066 = vmatprep.mubr.f32.mxu0 0.0
      %2067 = vmatmul.mubr.f32.gmra.mrb[0].mxu0 %v1922
      %v2068 = vpop.f32.mrb[0].mxu0
      %v2069 = vadd.f32 0.0, %v2068
      %v2070 = vpop.f32.mrb[0].mxu0
      %2071 = vmatprep.mubr.f32.mxu0 0.0
      %2072 = vmatmul.mubr.f32.gmra.mrb[0].mxu0 %v1923
      %v2073 = vpop.f32.mrb[0].mxu0
      %v2074 = vadd.f32 0.0, %v2073
      %v2075 = vpop.f32.mrb[0].mxu0
      %2076 = vmatprep.mubr.f32.mxu0 0.0
      %2077 = vmatmul.mubr.f32.gmra.mrb[0].mxu0 %v1924
      %v2078 = vpop.f32.mrb[0].mxu0
      %v2079 = vadd.f32 0.0, %v2078
      %v2080 = vpop.f32.mrb[0].mxu0
      %2081 = vmatprep.mubr.f32.mxu0 0.0
      %2082 = vmatmul.mubr.f32.gmra.mrb[0].mxu0 %v1925
      %v2083 = vpop.f32.mrb[0].mxu0
      %v2084 = vadd.f32 0.0, %v2083
      %v2085 = vpop.f32.mrb[0].mxu0
      %2086 = vdwg.mxu0
      %s2087 = smul.u32 %s24, 128
      %v2088 = vstv %s2087
      %v2089 = vadd.s32 %v2088, %v1016
      %v2090 = vadd.s32 %v2088, %v1017
      %v2091 = vadd.s32 %v2088, %v1018
      %v2092 = vadd.s32 %v2088, %v1019
      %v2093 = vadd.s32 %v2088, %v1020
      %v2094 = vadd.s32 %v2088, %v1021
      %v2095 = vadd.s32 %v2088, %v1022
      %v2096 = vadd.s32 %v2088, %v1023
      %v2097 = vadd.s32 %v2088, %v1024
      %v2098 = vadd.s32 %v2088, %v1025
      %v2099 = vadd.s32 %v2088, %v1026
      %v2100 = vadd.s32 %v2088, %v1027
      %v2101 = vadd.s32 %v2088, %v1028
      %v2102 = vadd.s32 %v2088, %v1029
      %v2103 = vadd.s32 %v2088, %v1030
      %v2104 = vadd.s32 %v2088, %v1031
      %vm2105 = vcmp.lt.s32.totalorder %v2089, 200
      %vm2106 = vcmp.lt.s32.totalorder %v2090, 200
      %vm2107 = vcmp.lt.s32.totalorder %v2091, 200
      %vm2108 = vcmp.lt.s32.totalorder %v2092, 200
      %vm2109 = vcmp.lt.s32.totalorder %v2093, 200
      %vm2110 = vcmp.lt.s32.totalorder %v2094, 200
      %vm2111 = vcmp.lt.s32.totalorder %v2095, 200
      %vm2112 = vcmp.lt.s32.totalorder %v2096, 200
      %vm2113 = vcmp.lt.s32.totalorder %v2097, 200
      %vm2114 = vcmp.lt.s32.totalorder %v2098, 200
      %vm2115 = vcmp.lt.s32.totalorder %v2099, 200
      %vm2116 = vcmp.lt.s32.totalorder %v2100, 200
      %vm2117 = vcmp.lt.s32.totalorder %v2101, 200
      %vm2118 = vcmp.lt.s32.totalorder %v2102, 200
      %vm2119 = vcmp.lt.s32.totalorder %v2103, 200
      %vm2120 = vcmp.lt.s32.totalorder %v2104, 200
      %v2121 = vsel %vm2105, 1, 0
      %v2122 = vsel %vm2106, 1, 0
      %v2123 = vsel %vm2107, 1, 0
      %v2124 = vsel %vm2108, 1, 0
      %v2125 = vsel %vm2109, 1, 0
      %v2126 = vsel %vm2110, 1, 0
      %v2127 = vsel %vm2111, 1, 0
      %v2128 = vsel %vm2112, 1, 0
      %v2129 = vsel %vm2113, 1, 0
      %v2130 = vsel %vm2114, 1, 0
      %v2131 = vsel %vm2115, 1, 0
      %v2132 = vsel %vm2116, 1, 0
      %v2133 = vsel %vm2117, 1, 0
      %v2134 = vsel %vm2118, 1, 0
      %v2135 = vsel %vm2119, 1, 0
      %v2136 = vsel %vm2120, 1, 0
      %vm2137 = vcmp.eq.s32.totalorder %v2121, 1
      %vm2138 = vcmp.eq.s32.totalorder %v2122, 1
      %vm2139 = vcmp.eq.s32.totalorder %v2123, 1
      %vm2140 = vcmp.eq.s32.totalorder %v2124, 1
      %vm2141 = vcmp.eq.s32.totalorder %v2125, 1
      %vm2142 = vcmp.eq.s32.totalorder %v2126, 1
      %vm2143 = vcmp.eq.s32.totalorder %v2127, 1
      %vm2144 = vcmp.eq.s32.totalorder %v2128, 1
      %vm2145 = vcmp.eq.s32.totalorder %v2129, 1
      %vm2146 = vcmp.eq.s32.totalorder %v2130, 1
      %vm2147 = vcmp.eq.s32.totalorder %v2131, 1
      %vm2148 = vcmp.eq.s32.totalorder %v2132, 1
      %vm2149 = vcmp.eq.s32.totalorder %v2133, 1
      %vm2150 = vcmp.eq.s32.totalorder %v2134, 1
      %vm2151 = vcmp.eq.s32.totalorder %v2135, 1
      %vm2152 = vcmp.eq.s32.totalorder %v2136, 1
      %v2153 = vsel %vm2137, %v2009, -1e+30
      %v2154 = vsel %vm2138, %v2014, -1e+30
      %v2155 = vsel %vm2139, %v2019, -1e+30
      %v2156 = vsel %vm2140, %v2024, -1e+30
      %v2157 = vsel %vm2141, %v2029, -1e+30
      %v2158 = vsel %vm2142, %v2034, -1e+30
      %v2159 = vsel %vm2143, %v2039, -1e+30
      %v2160 = vsel %vm2144, %v2044, -1e+30
      %v2161 = vsel %vm2145, %v2049, -1e+30
      %v2162 = vsel %vm2146, %v2054, -1e+30
      %v2163 = vsel %vm2147, %v2059, -1e+30
      %v2164 = vsel %vm2148, %v2064, -1e+30
      %v2165 = vsel %vm2149, %v2069, -1e+30
      %v2166 = vsel %vm2150, %v2074, -1e+30
      %v2167 = vsel %vm2151, %v2079, -1e+30
      %v2168 = vsel %vm2152, %v2084, -1e+30
      %v2169 = vld [vmem:[#allocation7] sm:$0x1]
      %vm2170 = vcmask 31744
      %v2171 = vsel %vm2170, %v2153, -inf
      %v2172 = vsel %vm2170, %v2154, -inf
      %v2173 = vsel %vm2170, %v2155, -inf
      %v2174 = vsel %vm2170, %v2156, -inf
      %v2175 = vsel %vm2170, %v2157, -inf
      %v2176 = vmax.f32 %v2171, %v2175
      %v2177 = vsel %vm2170, %v2158, -inf
      %v2178 = vmax.f32 %v2172, %v2177
      %v2179 = vsel %vm2170, %v2159, -inf
      %v2180 = vmax.f32 %v2173, %v2179
      %v2181 = vsel %vm2170, %v2160, -inf
      %v2182 = vmax.f32 %v2174, %v2181
      %v2183 = vsel %vm2170, %v2161, -inf
      %v2184 = vmax.f32 %v2176, %v2183
      %v2185 = vsel %vm2170, %v2162, -inf
      %v2186 = vmax.f32 %v2178, %v2185
      %v2187 = vsel %vm2170, %v2163, -inf
      %v2188 = vmax.f32 %v2180, %v2187
      %v2189 = vsel %vm2170, %v2164, -inf
      %v2190 = vmax.f32 %v2182, %v2189
      %v2191 = vsel %vm2170, %v2165, -inf
      %v2192 = vmax.f32 %v2184, %v2191
      %v2193 = vsel %vm2170, %v2166, -inf
      %v2194 = vmax.f32 %v2186, %v2193
      %v2195 = vsel %vm2170, %v2167, -inf
      %v2196 = vmax.f32 %v2188, %v2195
      %v2197 = vsel %vm2170, %v2168, -inf
      %v2198 = vmax.f32 %v2190, %v2197
      %v2199 = vmax.f32 %v2192, %v2194
      %v2200 = vmax.f32 %v2196, %v2198
      %v2201 = vmax.f32 %v2199, %v2200
      %v2202 = vrot.slane %v2201, 4
      %v2203 = vmax.f32 %v2201, %v2202
      %v2204 = vrot.slane %v2203, 2
      %v2205 = vmax.f32 %v2203, %v2204
      %v2206 = vrot.slane %v2205, 1
      %v2207 = vmax.f32 %v2205, %v2206
      %v2208 = vmax.f32 %v2169, %v2207
      %v2209 = vsub.f32 %v2169, %v2208
      %v2210 = vmul.f32 %v2209, 1.442695
      %v2211 = vpow.pop %v2210
      %v2213 = vlaneseq
      %v2214 = vshrl.u32 %v2213, 7
      %v2215 = vsub.s32 0, %v2214
      %v2216 = vrot.slane %v2208, %v2215
      %v2218 = vsub.f32 %v2153, %v2216
      %v2219 = vsub.f32 %v2154, %v2216
      %v2220 = vsub.f32 %v2155, %v2216
      %v2221 = vsub.f32 %v2156, %v2216
      %v2222 = vsub.f32 %v2157, %v2216
      %v2223 = vsub.f32 %v2158, %v2216
      %v2224 = vsub.f32 %v2159, %v2216
      %v2225 = vsub.f32 %v2160, %v2216
      %v2226 = vsub.f32 %v2161, %v2216
      %v2227 = vsub.f32 %v2162, %v2216
      %v2228 = vsub.f32 %v2163, %v2216
      %v2229 = vsub.f32 %v2164, %v2216
      %v2230 = vsub.f32 %v2165, %v2216
      %v2231 = vsub.f32 %v2166, %v2216
      %v2232 = vsub.f32 %v2167, %v2216
      %v2233 = vsub.f32 %v2168, %v2216
      %v2234 = vmul.f32 %v2218, 1.442695
      %v2235 = vpow.pop %v2234
      %v2236 = vmul.f32 %v2219, 1.442695
      %v2237 = vpow.pop %v2236
      %v2238 = vmul.f32 %v2220, 1.442695
      %v2239 = vpow.pop %v2238
      %v2240 = vmul.f32 %v2221, 1.442695
      %v2241 = vpow.pop %v2240
      %v2242 = vmul.f32 %v2222, 1.442695
      %v2243 = vpow.pop %v2242
      %v2244 = vmul.f32 %v2223, 1.442695
      %v2245 = vpow.pop %v2244
      %v2246 = vmul.f32 %v2224, 1.442695
      %v2247 = vpow.pop %v2246
      %v2248 = vmul.f32 %v2225, 1.442695
      %v2249 = vpow.pop %v2248
      %v2250 = vmul.f32 %v2226, 1.442695
      %v2251 = vpow.pop %v2250
      %v2252 = vmul.f32 %v2227, 1.442695
      %v2253 = vpow.pop %v2252
      %v2254 = vmul.f32 %v2228, 1.442695
      %v2255 = vpow.pop %v2254
      %v2256 = vmul.f32 %v2229, 1.442695
      %v2257 = vpow.pop %v2256
      %v2258 = vmul.f32 %v2230, 1.442695
      %v2259 = vpow.pop %v2258
      %v2260 = vmul.f32 %v2231, 1.442695
      %v2261 = vpow.pop %v2260
      %v2262 = vmul.f32 %v2232, 1.442695
      %v2263 = vpow.pop %v2262
      %v2264 = vmul.f32 %v2233, 1.442695
      %v2265 = vpow.pop %v2264
      %v2266 = vcvt.s32.f32 %v2121
      %v2267 = vcvt.s32.f32 %v2122
      %v2268 = vcvt.s32.f32 %v2123
      %v2269 = vcvt.s32.f32 %v2124
      %v2270 = vcvt.s32.f32 %v2125
      %v2271 = vcvt.s32.f32 %v2126
      %v2272 = vcvt.s32.f32 %v2127
      %v2273 = vcvt.s32.f32 %v2128
      %v2274 = vcvt.s32.f32 %v2129
      %v2275 = vcvt.s32.f32 %v2130
      %v2276 = vcvt.s32.f32 %v2131
      %v2277 = vcvt.s32.f32 %v2132
      %v2278 = vcvt.s32.f32 %v2133
      %v2279 = vcvt.s32.f32 %v2134
      %v2280 = vcvt.s32.f32 %v2135
      %v2281 = vcvt.s32.f32 %v2136
      %v2282 = vmul.f32 %v2235, %v2266
      %v2283 = vmul.f32 %v2237, %v2267
      %v2284 = vmul.f32 %v2239, %v2268
      %v2285 = vmul.f32 %v2241, %v2269
      %v2286 = vmul.f32 %v2243, %v2270
      %v2287 = vmul.f32 %v2245, %v2271
      %v2288 = vmul.f32 %v2247, %v2272
      %v2289 = vmul.f32 %v2249, %v2273
      %v2290 = vmul.f32 %v2251, %v2274
      %v2291 = vmul.f32 %v2253, %v2275
      %v2292 = vmul.f32 %v2255, %v2276
      %v2293 = vmul.f32 %v2257, %v2277
      %v2294 = vmul.f32 %v2259, %v2278
      %v2295 = vmul.f32 %v2261, %v2279
      %v2296 = vmul.f32 %v2263, %v2280
      %v2297 = vmul.f32 %v2265, %v2281
      %v2299 = vsel %vm2170, %v2282, 0
      %v2302 = vsel %vm2170, %v2283, 0
      %v2305 = vsel %vm2170, %v2284, 0
      %v2308 = vsel %vm2170, %v2285, 0
      %v2311 = vsel %vm2170, %v2286, 0
      %v2314 = vsel %vm2170, %v2287, 0
      %v2317 = vsel %vm2170, %v2288, 0
      %v2320 = vsel %vm2170, %v2289, 0
      %v2323 = vsel %vm2170, %v2290, 0
      %v2326 = vsel %vm2170, %v2291, 0
      %v2329 = vsel %vm2170, %v2292, 0
      %v2332 = vsel %vm2170, %v2293, 0
      %v2335 = vsel %vm2170, %v2294, 0
      %v2338 = vsel %vm2170, %v2295, 0
      %v2341 = vsel %vm2170, %v2296, 0
      %v2344 = vsel %vm2170, %v2297, 0
      %v2347 = vsel %vm2170, %v1926, 0
      %v2350 = vsel %vm2170, %v1927, 0
      %v2353 = vsel %vm2170, %v1928, 0
      %v2356 = vsel %vm2170, %v1929, 0
      %v2359 = vsel %vm2170, %v1930, 0
      %v2362 = vsel %vm2170, %v1931, 0
      %v2365 = vsel %vm2170, %v1932, 0
      %v2368 = vsel %vm2170, %v1933, 0
      %v2371 = vsel %vm2170, %v1934, 0
      %v2374 = vsel %vm2170, %v1935, 0
      %v2377 = vsel %vm2170, %v1936, 0
      %v2380 = vsel %vm2170, %v1937, 0
      %v2383 = vsel %vm2170, %v1938, 0
      %v2386 = vsel %vm2170, %v1939, 0
      %v2389 = vsel %vm2170, %v1940, 0
      %v2392 = vsel %vm2170, %v1941, 0
      %2394 = vmatprep.subr.mxu0 0.0
      %2395 = vmatpush1.xpose.msra.mxu0 %v2347
      %2396 = vmatprep.subr.mxu0 0.0
      %2397 = vmatpush1.xpose.msra.mxu0 %v2350
      %2398 = vmatprep.subr.mxu0 0.0
      %2399 = vmatpush1.xpose.msra.mxu0 %v2353
      %2400 = vmatprep.subr.mxu0 0.0
      %2401 = vmatpush1.xpose.msra.mxu0 %v2356
      %2402 = vmatprep.subr.mxu0 0.0
      %2403 = vmatpush1.xpose.msra.mxu0 %v2359
      %2404 = vmatprep.subr.mxu0 0.0
      %2405 = vmatpush1.xpose.msra.mxu0 %v2362
      %2406 = vmatprep.subr.mxu0 0.0
      %2407 = vmatpush1.xpose.msra.mxu0 %v2365
      %2408 = vmatprep.subr.mxu0 0.0
      %2409 = vmatpush1.xpose.msra.mxu0 %v2368
      %2410 = vmatprep.subr.mxu0 0.0
      %2411 = vmatpush1.xpose.msra.mxu0 %v2371
      %2412 = vmatprep.subr.mxu0 0.0
      %2413 = vmatpush1.xpose.msra.mxu0 %v2374
      %2414 = vmatprep.subr.mxu0 0.0
      %2415 = vmatpush1.xpose.msra.mxu0 %v2377
      %2416 = vmatprep.subr.mxu0 0.0
      %2417 = vmatpush1.xpose.msra.mxu0 %v2380
      %2418 = vmatprep.subr.mxu0 0.0
      %2419 = vmatpush1.xpose.msra.mxu0 %v2383
      %2420 = vmatprep.subr.mxu0 0.0
      %2421 = vmatpush1.xpose.msra.mxu0 %v2386
      %2422 = vmatprep.subr.mxu0 0.0
      %2423 = vmatpush1.xpose.msra.mxu0 %v2389
      %2424 = vmatprep.subr.mxu0 0.0
      %2425 = vmatpush1.xpose.msra.mxu0 %v2392
      %2426 = vmatprep.subr.mxu0 0.0
      %2427 = vmatpush1.xpose.msra.mxu0 0.0
      %2428 = vmatprep.subr.mxu0 0.0
      %2429 = vmatpush1.xpose.msra.mxu0 0.0
      %2430 = vmatprep.subr.mxu0 0.0
      %2431 = vmatpush1.xpose.msra.mxu0 0.0
      %2432 = vmatprep.subr.mxu0 0.0
      %2433 = vmatpush1.xpose.msra.mxu0 0.0
      %2434 = vmatprep.subr.mxu0 0.0
      %2435 = vmatpush1.xpose.msra.mxu0 0.0
      %2436 = vmatprep.subr.mxu0 0.0
      %2437 = vmatpush1.xpose.msra.mxu0 0.0
      %2438 = vmatprep.subr.mxu0 0.0
      %2439 = vmatpush1.xpose.msra.mxu0 0.0
      %2440 = vmatprep.subr.mxu0 0.0
      %2441 = vmatpush1.xpose.msra.mxu0 0.0
      %2442 = vmatprep.subr.mxu0 0.0
      %2443 = vmatpush1.xpose.msra.mxu0 0.0
      %2444 = vmatprep.subr.mxu0 0.0
      %2445 = vmatpush1.xpose.msra.mxu0 0.0
      %2446 = vmatprep.subr.mxu0 0.0
      %2447 = vmatpush1.xpose.msra.mxu0 0.0
      %2448 = vmatprep.subr.mxu0 0.0
      %2449 = vmatpush1.xpose.msra.mxu0 0.0
      %2450 = vmatprep.subr.mxu0 0.0
      %2451 = vmatpush1.xpose.msra.mxu0 0.0
      %2452 = vmatprep.subr.mxu0 0.0
      %2453 = vmatpush1.xpose.msra.mxu0 0.0
      %2454 = vmatprep.subr.mxu0 0.0
      %2455 = vmatpush1.xpose.msra.mxu0 0.0
      %2456 = vmatprep.subr.mxu0 0.0
      %2457 = vmatpush1.xpose.msra.mxu0 0.0
      %2458 = vmatprep.mubr.f32.mxu0 0.0
      %2459 = vmatmul.mubr.f32.gmra.mrb[0].mxu0 %v2299
      %v2460 = vpop.f32.mrb[0].mxu0
      %v2461 = vadd.f32 0.0, %v2460
      %v2462 = vpop.f32.mrb[0].mxu0
      %2463 = vmatprep.mubr.f32.mxu0 0.0
      %2464 = vmatmul.mubr.f32.gmra.mrb[0].mxu0 %v2302
      %v2465 = vpop.f32.mrb[0].mxu0
      %v2466 = vadd.f32 0.0, %v2465
      %v2467 = vpop.f32.mrb[0].mxu0
      %2468 = vmatprep.mubr.f32.mxu0 0.0
      %2469 = vmatmul.mubr.f32.gmra.mrb[0].mxu0 %v2305
      %v2470 = vpop.f32.mrb[0].mxu0
      %v2471 = vadd.f32 0.0, %v2470
      %v2472 = vpop.f32.mrb[0].mxu0
      %2473 = vmatprep.mubr.f32.mxu0 0.0
      %2474 = vmatmul.mubr.f32.gmra.mrb[0].mxu0 %v2308
      %v2475 = vpop.f32.mrb[0].mxu0
      %v2476 = vadd.f32 0.0, %v2475
      %v2477 = vpop.f32.mrb[0].mxu0
      %2478 = vmatprep.mubr.f32.mxu0 0.0
      %2479 = vmatmul.mubr.f32.gmra.mrb[0].mxu0 %v2311
      %v2480 = vpop.f32.mrb[0].mxu0
      %v2481 = vadd.f32 0.0, %v2480
      %v2482 = vpop.f32.mrb[0].mxu0
      %2483 = vmatprep.mubr.f32.mxu0 0.0
      %2484 = vmatmul.mubr.f32.gmra.mrb[0].mxu0 %v2314
      %v2485 = vpop.f32.mrb[0].mxu0
      %v2486 = vadd.f32 0.0, %v2485
      %v2487 = vpop.f32.mrb[0].mxu0
      %2488 = vmatprep.mubr.f32.mxu0 0.0
      %2489 = vmatmul.mubr.f32.gmra.mrb[0].mxu0 %v2317
      %v2490 = vpop.f32.mrb[0].mxu0
      %v2491 = vadd.f32 0.0, %v2490
      %v2492 = vpop.f32.mrb[0].mxu0
      %2493 = vmatprep.mubr.f32.mxu0 0.0
      %2494 = vmatmul.mubr.f32.gmra.mrb[0].mxu0 %v2320
      %v2495 = vpop.f32.mrb[0].mxu0
      %v2496 = vadd.f32 0.0, %v2495
      %v2497 = vpop.f32.mrb[0].mxu0
      %2498 = vmatprep.mubr.f32.mxu0 0.0
      %2499 = vmatmul.mubr.f32.gmra.mrb[0].mxu0 %v2323
      %v2500 = vpop.f32.mrb[0].mxu0
      %v2501 = vadd.f32 0.0, %v2500
      %v2502 = vpop.f32.mrb[0].mxu0
      %2503 = vmatprep.mubr.f32.mxu0 0.0
      %2504 = vmatmul.mubr.f32.gmra.mrb[0].mxu0 %v2326
      %v2505 = vpop.f32.mrb[0].mxu0
      %v2506 = vadd.f32 0.0, %v2505
      %v2507 = vpop.f32.mrb[0].mxu0
      %2508 = vmatprep.mubr.f32.mxu0 0.0
      %2509 = vmatmul.mubr.f32.gmra.mrb[0].mxu0 %v2329
      %v2510 = vpop.f32.mrb[0].mxu0
      %v2511 = vadd.f32 0.0, %v2510
      %v2512 = vpop.f32.mrb[0].mxu0
      %2513 = vmatprep.mubr.f32.mxu0 0.0
      %2514 = vmatmul.mubr.f32.gmra.mrb[0].mxu0 %v2332
      %v2515 = vpop.f32.mrb[0].mxu0
      %v2516 = vadd.f32 0.0, %v2515
      %v2517 = vpop.f32.mrb[0].mxu0
      %2518 = vmatprep.mubr.f32.mxu0 0.0
      %2519 = vmatmul.mubr.f32.gmra.mrb[0].mxu0 %v2335
      %v2520 = vpop.f32.mrb[0].mxu0
      %v2521 = vadd.f32 0.0, %v2520
      %v2522 = vpop.f32.mrb[0].mxu0
      %2523 = vmatprep.mubr.f32.mxu0 0.0
      %2524 = vmatmul.mubr.f32.gmra.mrb[0].mxu0 %v2338
      %v2525 = vpop.f32.mrb[0].mxu0
      %v2526 = vadd.f32 0.0, %v2525
      %v2527 = vpop.f32.mrb[0].mxu0
      %2528 = vmatprep.mubr.f32.mxu0 0.0
      %2529 = vmatmul.mubr.f32.gmra.mrb[0].mxu0 %v2341
      %v2530 = vpop.f32.mrb[0].mxu0
      %v2531 = vadd.f32 0.0, %v2530
      %v2532 = vpop.f32.mrb[0].mxu0
      %2533 = vmatprep.mubr.f32.mxu0 0.0
      %2534 = vmatmul.mubr.f32.gmra.mrb[0].mxu0 %v2344
      %v2535 = vpop.f32.mrb[0].mxu0
      %v2536 = vadd.f32 0.0, %v2535
      %v2537 = vpop.f32.mrb[0].mxu0
      %2538 = vdwg.mxu0
      %v2539 = vld [vmem:[#allocation5] sm:$0xff]
      %v2540 = vld [vmem:[#allocation5 + $0x8] sm:$0xff]
      %v2541 = vld [vmem:[#allocation5 + $0x10] sm:$0xff]
      %v2542 = vld [vmem:[#allocation5 + $0x18] sm:$0xff]
      %v2543 = vld [vmem:[#allocation5 + $0x20] sm:$0xff]
      %v2544 = vld [vmem:[#allocation5 + $0x28] sm:$0xff]
      %v2545 = vld [vmem:[#allocation5 + $0x30] sm:$0xff]
      %v2546 = vld [vmem:[#allocation5 + $0x38] sm:$0xff]
      %v2547 = vld [vmem:[#allocation5 + $0x40] sm:$0xff]
      %v2548 = vld [vmem:[#allocation5 + $0x48] sm:$0xff]
      %v2549 = vld [vmem:[#allocation5 + $0x50] sm:$0xff]
      %v2550 = vld [vmem:[#allocation5 + $0x58] sm:$0xff]
      %v2551 = vld [vmem:[#allocation5 + $0x60] sm:$0xff]
      %v2552 = vld [vmem:[#allocation5 + $0x68] sm:$0xff]
      %v2553 = vld [vmem:[#allocation5 + $0x70] sm:$0xff]
      %v2554 = vld [vmem:[#allocation5 + $0x78] sm:$0xff]
      %v2556 = vsel %vm2170, %v2211, 0
      %2558 = vmatprep.subr.mxu0 0.0
      %2559 = vmatpush1.xpose.msra.mxu0 %v2347
      %2560 = vmatprep.subr.mxu0 0.0
      %2561 = vmatpush1.xpose.msra.mxu0 %v2350
      %2562 = vmatprep.subr.mxu0 0.0
      %2563 = vmatpush1.xpose.msra.mxu0 %v2353
      %2564 = vmatprep.subr.mxu0 0.0
      %2565 = vmatpush1.xpose.msra.mxu0 %v2356
      %2566 = vmatprep.subr.mxu0 0.0
      %2567 = vmatpush1.xpose.msra.mxu0 %v2359
      %2568 = vmatprep.subr.mxu0 0.0
      %2569 = vmatpush1.xpose.msra.mxu0 %v2362
      %2570 = vmatprep.subr.mxu0 0.0
      %2571 = vmatpush1.xpose.msra.mxu0 %v2365
      %2572 = vmatprep.subr.mxu0 0.0
      %2573 = vmatpush1.xpose.msra.mxu0 %v2368
      %2574 = vmatprep.subr.mxu0 0.0
      %2575 = vmatpush1.xpose.msra.mxu0 %v2371
      %2576 = vmatprep.subr.mxu0 0.0
      %2577 = vmatpush1.xpose.msra.mxu0 %v2374
      %2578 = vmatprep.subr.mxu0 0.0
      %2579 = vmatpush1.xpose.msra.mxu0 %v2377
      %2580 = vmatprep.subr.mxu0 0.0
      %2581 = vmatpush1.xpose.msra.mxu0 %v2380
      %2582 = vmatprep.subr.mxu0 0.0
      %2583 = vmatpush1.xpose.msra.mxu0 %v2383
      %2584 = vmatprep.subr.mxu0 0.0
      %2585 = vmatpush1.xpose.msra.mxu0 %v2386
      %2586 = vmatprep.subr.mxu0 0.0
      %2587 = vmatpush1.xpose.msra.mxu0 %v2389
      %2588 = vmatprep.subr.mxu0 0.0
      %2589 = vmatpush1.xpose.msra.mxu0 %v2392
      %2590 = vmatprep.subr.mxu0 0.0
      %2591 = vmatpush1.xpose.msra.mxu0 0.0
      %2592 = vmatprep.subr.mxu0 0.0
      %2593 = vmatpush1.xpose.msra.mxu0 0.0
      %2594 = vmatprep.subr.mxu0 0.0
      %2595 = vmatpush1.xpose.msra.mxu0 0.0
      %2596 = vmatprep.subr.mxu0 0.0
      %2597 = vmatpush1.xpose.msra.mxu0 0.0
      %2598 = vmatprep.subr.mxu0 0.0
      %2599 = vmatpush1.xpose.msra.mxu0 0.0
      %2600 = vmatprep.subr.mxu0 0.0
      %2601 = vmatpush1.xpose.msra.mxu0 0.0
      %2602 = vmatprep.subr.mxu0 0.0
      %2603 = vmatpush1.xpose.msra.mxu0 0.0
      %2604 = vmatprep.subr.mxu0 0.0
      %2605 = vmatpush1.xpose.msra.mxu0 0.0
      %2606 = vmatprep.subr.mxu0 0.0
      %2607 = vmatpush1.xpose.msra.mxu0 0.0
      %2608 = vmatprep.subr.mxu0 0.0
      %2609 = vmatpush1.xpose.msra.mxu0 0.0
      %2610 = vmatprep.subr.mxu0 0.0
      %2611 = vmatpush1.xpose.msra.mxu0 0.0
      %2612 = vmatprep.subr.mxu0 0.0
      %2613 = vmatpush1.xpose.msra.mxu0 0.0
      %2614 = vmatprep.subr.mxu0 0.0
      %2615 = vmatpush1.xpose.msra.mxu0 0.0
      %2616 = vmatprep.subr.mxu0 0.0
      %2617 = vmatpush1.xpose.msra.mxu0 0.0
      %2618 = vmatprep.subr.mxu0 0.0
      %2619 = vmatpush1.xpose.msra.mxu0 0.0
      %2620 = vmatprep.subr.mxu0 0.0
      %2621 = vmatpush1.xpose.msra.mxu0 0.0
      %2622 = vmatprep.mubr.f32.mxu0 0.0
      %2623 = vmatmul.mubr.f32.gmra.mrb[0].mxu0 %v2556
      %v2624 = vpop.f32.mrb[0].mxu0
      %v2625 = vadd.f32 0.0, %v2624
      %v2626 = vpop.f32.mrb[0].mxu0
      %2627 = vdwg.mxu0
      %v2628 = vlaneseq
      %v2629 = vshrl.u32 %v2628, 7
      %v2630 = vsub.s32 0, %v2629
      %v2631 = vrot.slane %v2625, %v2630
      %v2632 = vmul.f32 %v2539, %v2631
      %v2633 = vmul.f32 %v2540, %v2631
      %v2634 = vmul.f32 %v2541, %v2631
      %v2635 = vmul.f32 %v2542, %v2631
      %v2636 = vmul.f32 %v2543, %v2631
      %v2637 = vmul.f32 %v2544, %v2631
      %v2638 = vmul.f32 %v2545, %v2631
      %v2639 = vmul.f32 %v2546, %v2631
      %v2640 = vmul.f32 %v2547, %v2631
      %v2641 = vmul.f32 %v2548, %v2631
      %v2642 = vmul.f32 %v2549, %v2631
      %v2643 = vmul.f32 %v2550, %v2631
      %v2644 = vmul.f32 %v2551, %v2631
      %v2645 = vmul.f32 %v2552, %v2631
      %v2646 = vmul.f32 %v2553, %v2631
      %v2647 = vmul.f32 %v2554, %v2631
      %v2648 = vmul.f32 %v2461, %v1894
      %v2649 = vmul.f32 %v2466, %v1895
      %v2650 = vmul.f32 %v2471, %v1896
      %v2651 = vmul.f32 %v2476, %v1897
      %v2652 = vmul.f32 %v2481, %v1898
      %v2653 = vmul.f32 %v2486, %v1899
      %v2654 = vmul.f32 %v2491, %v1900
      %v2655 = vmul.f32 %v2496, %v1901
      %v2656 = vmul.f32 %v2501, %v1902
      %v2657 = vmul.f32 %v2506, %v1903
      %v2658 = vmul.f32 %v2511, %v1904
      %v2659 = vmul.f32 %v2516, %v1905
      %v2660 = vmul.f32 %v2521, %v1906
      %v2661 = vmul.f32 %v2526, %v1907
      %v2662 = vmul.f32 %v2531, %v1908
      %v2663 = vmul.f32 %v2536, %v1909
      %2664 = vmatprep.subr.mxu0 0.0
      %2665 = vmatpush1.msra.mxu0 %v2648
      %2666 = vmatprep.subr.mxu0 0.0
      %2667 = vmatpush1.msra.mxu0 %v2649
      %2668 = vmatprep.subr.mxu0 0.0
      %2669 = vmatpush1.msra.mxu0 %v2650
      %2670 = vmatprep.subr.mxu0 0.0
      %2671 = vmatpush1.msra.mxu0 %v2651
      %2672 = vmatprep.subr.mxu0 0.0
      %2673 = vmatpush1.msra.mxu0 %v2652
      %2674 = vmatprep.subr.mxu0 0.0
      %2675 = vmatpush1.msra.mxu0 %v2653
      %2676 = vmatprep.subr.mxu0 0.0
      %2677 = vmatpush1.msra.mxu0 %v2654
      %2678 = vmatprep.subr.mxu0 0.0
      %2679 = vmatpush1.msra.mxu0 %v2655
      %2680 = vmatprep.subr.mxu0 0.0
      %2681 = vmatpush1.msra.mxu0 %v2656
      %2682 = vmatprep.subr.mxu0 0.0
      %2683 = vmatpush1.msra.mxu0 %v2657
      %2684 = vmatprep.subr.mxu0 0.0
      %2685 = vmatpush1.msra.mxu0 %v2658
      %2686 = vmatprep.subr.mxu0 0.0
      %2687 = vmatpush1.msra.mxu0 %v2659
      %2688 = vmatprep.subr.mxu0 0.0
      %2689 = vmatpush1.msra.mxu0 %v2660
      %2690 = vmatprep.subr.mxu0 0.0
      %2691 = vmatpush1.msra.mxu0 %v2661
      %2692 = vmatprep.subr.mxu0 0.0
      %2693 = vmatpush1.msra.mxu0 %v2662
      %2694 = vmatprep.subr.mxu0 0.0
      %2695 = vmatpush1.msra.mxu0 %v2663
      %2696 = vmatprep.subr.mxu0 0.0
      %2697 = vmatpush1.msra.mxu0 0.0
      %2698 = vmatprep.subr.mxu0 0.0
      %2699 = vmatpush1.msra.mxu0 0.0
      %2700 = vmatprep.subr.mxu0 0.0
      %2701 = vmatpush1.msra.mxu0 0.0
      %2702 = vmatprep.subr.mxu0 0.0
      %2703 = vmatpush1.msra.mxu0 0.0
      %2704 = vmatprep.subr.mxu0 0.0
      %2705 = vmatpush1.msra.mxu0 0.0
      %2706 = vmatprep.subr.mxu0 0.0
      %2707 = vmatpush1.msra.mxu0 0.0
      %2708 = vmatprep.subr.mxu0 0.0
      %2709 = vmatpush1.msra.mxu0 0.0
      %2710 = vmatprep.subr.mxu0 0.0
      %2711 = vmatpush1.msra.mxu0 0.0
      %2712 = vmatprep.subr.mxu0 0.0
      %2713 = vmatpush1.msra.mxu0 0.0
      %2714 = vmatprep.subr.mxu0 0.0
      %2715 = vmatpush1.msra.mxu0 0.0
      %2716 = vmatprep.subr.mxu0 0.0
      %2717 = vmatpush1.msra.mxu0 0.0
      %2718 = vmatprep.subr.mxu0 0.0
      %2719 = vmatpush1.msra.mxu0 0.0
      %2720 = vmatprep.subr.mxu0 0.0
      %2721 = vmatpush1.msra.mxu0 0.0
      %2722 = vmatprep.subr.mxu0 0.0
      %2723 = vmatpush1.msra.mxu0 0.0
      %2724 = vmatprep.subr.mxu0 0.0
      %2725 = vmatpush1.msra.mxu0 0.0
      %2726 = vmatprep.subr.mxu0 0.0
      %2727 = vmatpush1.msra.mxu0 0.0
      %2728 = vmatprep.mubr.f32.mxu0 0.0
      %2729 = vmatmul.mubr.f32.gmra.mrb[0].mxu0 %v1293
      %v2730 = vpop.f32.mrb[0].mxu0
      %v2731 = vadd.f32 0.0, %v2730
      %v2732 = vpop.f32.mrb[0].mxu0
      %2733 = vmatprep.mubr.f32.mxu0 0.0
      %2734 = vmatmul.mubr.f32.gmra.mrb[0].mxu0 %v1294
      %v2735 = vpop.f32.mrb[0].mxu0
      %v2736 = vadd.f32 0.0, %v2735
      %v2737 = vpop.f32.mrb[0].mxu0
      %2738 = vmatprep.mubr.f32.mxu0 0.0
      %2739 = vmatmul.mubr.f32.gmra.mrb[0].mxu0 %v1295
      %v2740 = vpop.f32.mrb[0].mxu0
      %v2741 = vadd.f32 0.0, %v2740
      %v2742 = vpop.f32.mrb[0].mxu0
      %2743 = vmatprep.mubr.f32.mxu0 0.0
      %2744 = vmatmul.mubr.f32.gmra.mrb[0].mxu0 %v1296
      %v2745 = vpop.f32.mrb[0].mxu0
      %v2746 = vadd.f32 0.0, %v2745
      %v2747 = vpop.f32.mrb[0].mxu0
      %2748 = vmatprep.mubr.f32.mxu0 0.0
      %2749 = vmatmul.mubr.f32.gmra.mrb[0].mxu0 %v1297
      %v2750 = vpop.f32.mrb[0].mxu0
      %v2751 = vadd.f32 0.0, %v2750
      %v2752 = vpop.f32.mrb[0].mxu0
      %2753 = vmatprep.mubr.f32.mxu0 0.0
      %2754 = vmatmul.mubr.f32.gmra.mrb[0].mxu0 %v1298
      %v2755 = vpop.f32.mrb[0].mxu0
      %v2756 = vadd.f32 0.0, %v2755
      %v2757 = vpop.f32.mrb[0].mxu0
      %2758 = vmatprep.mubr.f32.mxu0 0.0
      %2759 = vmatmul.mubr.f32.gmra.mrb[0].mxu0 %v1299
      %v2760 = vpop.f32.mrb[0].mxu0
      %v2761 = vadd.f32 0.0, %v2760
      %v2762 = vpop.f32.mrb[0].mxu0
      %2763 = vmatprep.mubr.f32.mxu0 0.0
      %2764 = vmatmul.mubr.f32.gmra.mrb[0].mxu0 %v1300
      %v2765 = vpop.f32.mrb[0].mxu0
      %v2766 = vadd.f32 0.0, %v2765
      %v2767 = vpop.f32.mrb[0].mxu0
      %2768 = vmatprep.mubr.f32.mxu0 0.0
      %2769 = vmatmul.mubr.f32.gmra.mrb[0].mxu0 %v1301
      %v2770 = vpop.f32.mrb[0].mxu0
      %v2771 = vadd.f32 0.0, %v2770
      %v2772 = vpop.f32.mrb[0].mxu0
      %2773 = vmatprep.mubr.f32.mxu0 0.0
      %2774 = vmatmul.mubr.f32.gmra.mrb[0].mxu0 %v1302
      %v2775 = vpop.f32.mrb[0].mxu0
      %v2776 = vadd.f32 0.0, %v2775
      %v2777 = vpop.f32.mrb[0].mxu0
      %2778 = vmatprep.mubr.f32.mxu0 0.0
      %2779 = vmatmul.mubr.f32.gmra.mrb[0].mxu0 %v1303
      %v2780 = vpop.f32.mrb[0].mxu0
      %v2781 = vadd.f32 0.0, %v2780
      %v2782 = vpop.f32.mrb[0].mxu0
      %2783 = vmatprep.mubr.f32.mxu0 0.0
      %2784 = vmatmul.mubr.f32.gmra.mrb[0].mxu0 %v1304
      %v2785 = vpop.f32.mrb[0].mxu0
      %v2786 = vadd.f32 0.0, %v2785
      %v2787 = vpop.f32.mrb[0].mxu0
      %2788 = vmatprep.mubr.f32.mxu0 0.0
      %2789 = vmatmul.mubr.f32.gmra.mrb[0].mxu0 %v1305
      %v2790 = vpop.f32.mrb[0].mxu0
      %v2791 = vadd.f32 0.0, %v2790
      %v2792 = vpop.f32.mrb[0].mxu0
      %2793 = vmatprep.mubr.f32.mxu0 0.0
      %2794 = vmatmul.mubr.f32.gmra.mrb[0].mxu0 %v1306
      %v2795 = vpop.f32.mrb[0].mxu0
      %v2796 = vadd.f32 0.0, %v2795
      %v2797 = vpop.f32.mrb[0].mxu0
      %2798 = vmatprep.mubr.f32.mxu0 0.0
      %2799 = vmatmul.mubr.f32.gmra.mrb[0].mxu0 %v1307
      %v2800 = vpop.f32.mrb[0].mxu0
      %v2801 = vadd.f32 0.0, %v2800
      %v2802 = vpop.f32.mrb[0].mxu0
      %2803 = vmatprep.mubr.f32.mxu0 0.0
      %2804 = vmatmul.mubr.f32.gmra.mrb[0].mxu0 %v1308
      %v2805 = vpop.f32.mrb[0].mxu0
      %v2806 = vadd.f32 0.0, %v2805
      %v2807 = vpop.f32.mrb[0].mxu0
      %2808 = vdwg.mxu0
      %v2809 = vadd.f32 %v2632, %v2731
      %v2810 = vadd.f32 %v2633, %v2736
      %v2811 = vadd.f32 %v2634, %v2741
      %v2812 = vadd.f32 %v2635, %v2746
      %v2813 = vadd.f32 %v2636, %v2751
      %v2814 = vadd.f32 %v2637, %v2756
      %v2815 = vadd.f32 %v2638, %v2761
      %v2816 = vadd.f32 %v2639, %v2766
      %v2817 = vadd.f32 %v2640, %v2771
      %v2818 = vadd.f32 %v2641, %v2776
      %v2819 = vadd.f32 %v2642, %v2781
      %v2820 = vadd.f32 %v2643, %v2786
      %v2821 = vadd.f32 %v2644, %v2791
      %v2822 = vadd.f32 %v2645, %v2796
      %v2823 = vadd.f32 %v2646, %v2801
      %v2824 = vadd.f32 %v2647, %v2806
      %2825 = vst [vmem:[#allocation5] sm:$0xff] %v2809
      %2826 = vst [vmem:[#allocation5 + $0x8] sm:$0xff] %v2810
      %2827 = vst [vmem:[#allocation5 + $0x10] sm:$0xff] %v2811
      %2828 = vst [vmem:[#allocation5 + $0x18] sm:$0xff] %v2812
      %2829 = vst [vmem:[#allocation5 + $0x20] sm:$0xff] %v2813
      %2830 = vst [vmem:[#allocation5 + $0x28] sm:$0xff] %v2814
      %2831 = vst [vmem:[#allocation5 + $0x30] sm:$0xff] %v2815
      %2832 = vst [vmem:[#allocation5 + $0x38] sm:$0xff] %v2816
      %2833 = vst [vmem:[#allocation5 + $0x40] sm:$0xff] %v2817
      %2834 = vst [vmem:[#allocation5 + $0x48] sm:$0xff] %v2818
      %2835 = vst [vmem:[#allocation5 + $0x50] sm:$0xff] %v2819
      %2836 = vst [vmem:[#allocation5 + $0x58] sm:$0xff] %v2820
      %2837 = vst [vmem:[#allocation5 + $0x60] sm:$0xff] %v2821
      %2838 = vst [vmem:[#allocation5 + $0x68] sm:$0xff] %v2822
      %2839 = vst [vmem:[#allocation5 + $0x70] sm:$0xff] %v2823
      %2840 = vst [vmem:[#allocation5 + $0x78] sm:$0xff] %v2824
      %v2841 = vld [vmem:[#allocation6] sm:$0xff]
      %v2842 = vld [vmem:[#allocation6 + $0x8] sm:$0xff]
      %v2843 = vld [vmem:[#allocation6 + $0x10] sm:$0xff]
      %v2844 = vld [vmem:[#allocation6 + $0x18] sm:$0xff]
      %v2845 = vld [vmem:[#allocation6 + $0x20] sm:$0xff]
      %v2846 = vld [vmem:[#allocation6 + $0x28] sm:$0xff]
      %v2847 = vld [vmem:[#allocation6 + $0x30] sm:$0xff]
      %v2848 = vld [vmem:[#allocation6 + $0x38] sm:$0xff]
      %v2849 = vld [vmem:[#allocation6 + $0x40] sm:$0xff]
      %v2850 = vld [vmem:[#allocation6 + $0x48] sm:$0xff]
      %v2851 = vld [vmem:[#allocation6 + $0x50] sm:$0xff]
      %v2852 = vld [vmem:[#allocation6 + $0x58] sm:$0xff]
      %v2853 = vld [vmem:[#allocation6 + $0x60] sm:$0xff]
      %v2854 = vld [vmem:[#allocation6 + $0x68] sm:$0xff]
      %v2855 = vld [vmem:[#allocation6 + $0x70] sm:$0xff]
      %v2856 = vld [vmem:[#allocation6 + $0x78] sm:$0xff]
      %v2857 = vlaneseq
      %v2858 = vshrl.u32 %v2857, 7
      %v2859 = vsub.s32 0, %v2858
      %v2860 = vrot.slane %v2211, %v2859
      %v2862 = vmul.f32 %v2841, %v2860
      %v2863 = vmul.f32 %v2842, %v2860
      %v2864 = vmul.f32 %v2843, %v2860
      %v2865 = vmul.f32 %v2844, %v2860
      %v2866 = vmul.f32 %v2845, %v2860
      %v2867 = vmul.f32 %v2846, %v2860
      %v2868 = vmul.f32 %v2847, %v2860
      %v2869 = vmul.f32 %v2848, %v2860
      %v2870 = vmul.f32 %v2849, %v2860
      %v2871 = vmul.f32 %v2850, %v2860
      %v2872 = vmul.f32 %v2851, %v2860
      %v2873 = vmul.f32 %v2852, %v2860
      %v2874 = vmul.f32 %v2853, %v2860
      %v2875 = vmul.f32 %v2854, %v2860
      %v2876 = vmul.f32 %v2855, %v2860
      %v2877 = vmul.f32 %v2856, %v2860
      %2878 = vmatprep.subr.mxu0 0.0
      %2879 = vmatpush1.msra.mxu0 %v2282
      %2880 = vmatprep.subr.mxu0 0.0
      %2881 = vmatpush1.msra.mxu0 %v2283
      %2882 = vmatprep.subr.mxu0 0.0
      %2883 = vmatpush1.msra.mxu0 %v2284
      %2884 = vmatprep.subr.mxu0 0.0
      %2885 = vmatpush1.msra.mxu0 %v2285
      %2886 = vmatprep.subr.mxu0 0.0
      %2887 = vmatpush1.msra.mxu0 %v2286
      %2888 = vmatprep.subr.mxu0 0.0
      %2889 = vmatpush1.msra.mxu0 %v2287
      %2890 = vmatprep.subr.mxu0 0.0
      %2891 = vmatpush1.msra.mxu0 %v2288
      %2892 = vmatprep.subr.mxu0 0.0
      %2893 = vmatpush1.msra.mxu0 %v2289
      %2894 = vmatprep.subr.mxu0 0.0
      %2895 = vmatpush1.msra.mxu0 %v2290
      %2896 = vmatprep.subr.mxu0 0.0
      %2897 = vmatpush1.msra.mxu0 %v2291
      %2898 = vmatprep.subr.mxu0 0.0
      %2899 = vmatpush1.msra.mxu0 %v2292
      %2900 = vmatprep.subr.mxu0 0.0
      %2901 = vmatpush1.msra.mxu0 %v2293
      %2902 = vmatprep.subr.mxu0 0.0
      %2903 = vmatpush1.msra.mxu0 %v2294
      %2904 = vmatprep.subr.mxu0 0.0
      %2905 = vmatpush1.msra.mxu0 %v2295
      %2906 = vmatprep.subr.mxu0 0.0
      %2907 = vmatpush1.msra.mxu0 %v2296
      %2908 = vmatprep.subr.mxu0 0.0
      %2909 = vmatpush1.msra.mxu0 %v2297
      %2910 = vmatprep.subr.mxu0 0.0
      %2911 = vmatpush1.msra.mxu0 0.0
      %2912 = vmatprep.subr.mxu0 0.0
      %2913 = vmatpush1.msra.mxu0 0.0
      %2914 = vmatprep.subr.mxu0 0.0
      %2915 = vmatpush1.msra.mxu0 0.0
      %2916 = vmatprep.subr.mxu0 0.0
      %2917 = vmatpush1.msra.mxu0 0.0
      %2918 = vmatprep.subr.mxu0 0.0
      %2919 = vmatpush1.msra.mxu0 0.0
      %2920 = vmatprep.subr.mxu0 0.0
      %2921 = vmatpush1.msra.mxu0 0.0
      %2922 = vmatprep.subr.mxu0 0.0
      %2923 = vmatpush1.msra.mxu0 0.0
      %2924 = vmatprep.subr.mxu0 0.0
      %2925 = vmatpush1.msra.mxu0 0.0
      %2926 = vmatprep.subr.mxu0 0.0
      %2927 = vmatpush1.msra.mxu0 0.0
      %2928 = vmatprep.subr.mxu0 0.0
      %2929 = vmatpush1.msra.mxu0 0.0
      %2930 = vmatprep.subr.mxu0 0.0
      %2931 = vmatpush1.msra.mxu0 0.0
      %2932 = vmatprep.subr.mxu0 0.0
      %2933 = vmatpush1.msra.mxu0 0.0
      %2934 = vmatprep.subr.mxu0 0.0
      %2935 = vmatpush1.msra.mxu0 0.0
      %2936 = vmatprep.subr.mxu0 0.0
      %2937 = vmatpush1.msra.mxu0 0.0
      %2938 = vmatprep.subr.mxu0 0.0
      %2939 = vmatpush1.msra.mxu0 0.0
      %2940 = vmatprep.subr.mxu0 0.0
      %2941 = vmatpush1.msra.mxu0 0.0
      %2942 = vmatprep.mubr.f32.mxu0 0.0
      %2943 = vmatmul.mubr.f32.gmra.mrb[0].mxu0 %v1293
      %v2944 = vpop.f32.mrb[0].mxu0
      %v2945 = vadd.f32 0.0, %v2944
      %v2946 = vpop.f32.mrb[0].mxu0
      %2947 = vmatprep.mubr.f32.mxu0 0.0
      %2948 = vmatmul.mubr.f32.gmra.mrb[0].mxu0 %v1294
      %v2949 = vpop.f32.mrb[0].mxu0
      %v2950 = vadd.f32 0.0, %v2949
      %v2951 = vpop.f32.mrb[0].mxu0
      %2952 = vmatprep.mubr.f32.mxu0 0.0
      %2953 = vmatmul.mubr.f32.gmra.mrb[0].mxu0 %v1295
      %v2954 = vpop.f32.mrb[0].mxu0
      %v2955 = vadd.f32 0.0, %v2954
      %v2956 = vpop.f32.mrb[0].mxu0
      %2957 = vmatprep.mubr.f32.mxu0 0.0
      %2958 = vmatmul.mubr.f32.gmra.mrb[0].mxu0 %v1296
      %v2959 = vpop.f32.mrb[0].mxu0
      %v2960 = vadd.f32 0.0, %v2959
      %v2961 = vpop.f32.mrb[0].mxu0
      %2962 = vmatprep.mubr.f32.mxu0 0.0
      %2963 = vmatmul.mubr.f32.gmra.mrb[0].mxu0 %v1297
      %v2964 = vpop.f32.mrb[0].mxu0
      %v2965 = vadd.f32 0.0, %v2964
      %v2966 = vpop.f32.mrb[0].mxu0
      %2967 = vmatprep.mubr.f32.mxu0 0.0
      %2968 = vmatmul.mubr.f32.gmra.mrb[0].mxu0 %v1298
      %v2969 = vpop.f32.mrb[0].mxu0
      %v2970 = vadd.f32 0.0, %v2969
      %v2971 = vpop.f32.mrb[0].mxu0
      %2972 = vmatprep.mubr.f32.mxu0 0.0
      %2973 = vmatmul.mubr.f32.gmra.mrb[0].mxu0 %v1299
      %v2974 = vpop.f32.mrb[0].mxu0
      %v2975 = vadd.f32 0.0, %v2974
      %v2976 = vpop.f32.mrb[0].mxu0
      %2977 = vmatprep.mubr.f32.mxu0 0.0
      %2978 = vmatmul.mubr.f32.gmra.mrb[0].mxu0 %v1300
      %v2979 = vpop.f32.mrb[0].mxu0
      %v2980 = vadd.f32 0.0, %v2979
      %v2981 = vpop.f32.mrb[0].mxu0
      %2982 = vmatprep.mubr.f32.mxu0 0.0
      %2983 = vmatmul.mubr.f32.gmra.mrb[0].mxu0 %v1301
      %v2984 = vpop.f32.mrb[0].mxu0
      %v2985 = vadd.f32 0.0, %v2984
      %v2986 = vpop.f32.mrb[0].mxu0
      %2987 = vmatprep.mubr.f32.mxu0 0.0
      %2988 = vmatmul.mubr.f32.gmra.mrb[0].mxu0 %v1302
      %v2989 = vpop.f32.mrb[0].mxu0
      %v2990 = vadd.f32 0.0, %v2989
      %v2991 = vpop.f32.mrb[0].mxu0
      %2992 = vmatprep.mubr.f32.mxu0 0.0
      %2993 = vmatmul.mubr.f32.gmra.mrb[0].mxu0 %v1303
      %v2994 = vpop.f32.mrb[0].mxu0
      %v2995 = vadd.f32 0.0, %v2994
      %v2996 = vpop.f32.mrb[0].mxu0
      %2997 = vmatprep.mubr.f32.mxu0 0.0
      %2998 = vmatmul.mubr.f32.gmra.mrb[0].mxu0 %v1304
      %v2999 = vpop.f32.mrb[0].mxu0
      %v3000 = vadd.f32 0.0, %v2999
      %v3001 = vpop.f32.mrb[0].mxu0
      %3002 = vmatprep.mubr.f32.mxu0 0.0
      %3003 = vmatmul.mubr.f32.gmra.mrb[0].mxu0 %v1305
      %v3004 = vpop.f32.mrb[0].mxu0
      %v3005 = vadd.f32 0.0, %v3004
      %v3006 = vpop.f32.mrb[0].mxu0
      %3007 = vmatprep.mubr.f32.mxu0 0.0
      %3008 = vmatmul.mubr.f32.gmra.mrb[0].mxu0 %v1306
      %v3009 = vpop.f32.mrb[0].mxu0
      %v3010 = vadd.f32 0.0, %v3009
      %v3011 = vpop.f32.mrb[0].mxu0
      %3012 = vmatprep.mubr.f32.mxu0 0.0
      %3013 = vmatmul.mubr.f32.gmra.mrb[0].mxu0 %v1307
      %v3014 = vpop.f32.mrb[0].mxu0
      %v3015 = vadd.f32 0.0, %v3014
      %v3016 = vpop.f32.mrb[0].mxu0
      %3017 = vmatprep.mubr.f32.mxu0 0.0
      %3018 = vmatmul.mubr.f32.gmra.mrb[0].mxu0 %v1308
      %v3019 = vpop.f32.mrb[0].mxu0
      %v3020 = vadd.f32 0.0, %v3019
      %v3021 = vpop.f32.mrb[0].mxu0
      %3022 = vdwg.mxu0
      %v3023 = vadd.f32 %v2862, %v2945
      %v3024 = vadd.f32 %v2863, %v2950
      %v3025 = vadd.f32 %v2864, %v2955
      %v3026 = vadd.f32 %v2865, %v2960
      %v3027 = vadd.f32 %v2866, %v2965
      %v3028 = vadd.f32 %v2867, %v2970
      %v3029 = vadd.f32 %v2868, %v2975
      %v3030 = vadd.f32 %v2869, %v2980
      %v3031 = vadd.f32 %v2870, %v2985
      %v3032 = vadd.f32 %v2871, %v2990
      %v3033 = vadd.f32 %v2872, %v2995
      %v3034 = vadd.f32 %v2873, %v3000
      %v3035 = vadd.f32 %v2874, %v3005
      %v3036 = vadd.f32 %v2875, %v3010
      %v3037 = vadd.f32 %v2876, %v3015
      %v3038 = vadd.f32 %v2877, %v3020
      %3039 = vst.msk [vmem:[#allocation6] sm:$0xff] %vm2170, %v3023
      %3040 = vst.msk [vmem:[#allocation6 + $0x8] sm:$0xff] %vm2170, %v3024
      %3041 = vst.msk [vmem:[#allocation6 + $0x10] sm:$0xff] %vm2170, %v3025
      %3042 = vst.msk [vmem:[#allocation6 + $0x18] sm:$0xff] %vm2170, %v3026
      %3043 = vst.msk [vmem:[#allocation6 + $0x20] sm:$0xff] %vm2170, %v3027
      %3044 = vst.msk [vmem:[#allocation6 + $0x28] sm:$0xff] %vm2170, %v3028
      %3045 = vst.msk [vmem:[#allocation6 + $0x30] sm:$0xff] %vm2170, %v3029
      %3046 = vst.msk [vmem:[#allocation6 + $0x38] sm:$0xff] %vm2170, %v3030
      %3047 = vst.msk [vmem:[#allocation6 + $0x40] sm:$0xff] %vm2170, %v3031
      %3048 = vst.msk [vmem:[#allocation6 + $0x48] sm:$0xff] %vm2170, %v3032
      %3049 = vst.msk [vmem:[#allocation6 + $0x50] sm:$0xff] %vm2170, %v3033
      %3050 = vst.msk [vmem:[#allocation6 + $0x58] sm:$0xff] %vm2170, %v3034
      %3051 = vst.msk [vmem:[#allocation6 + $0x60] sm:$0xff] %vm2170, %v3035
      %3052 = vst.msk [vmem:[#allocation6 + $0x68] sm:$0xff] %vm2170, %v3036
      %3053 = vst.msk [vmem:[#allocation6 + $0x70] sm:$0xff] %vm2170, %v3037
      %3054 = vst.msk [vmem:[#allocation6 + $0x78] sm:$0xff] %vm2170, %v3038
      %vm3055 = vcmask 24576
      %3056 = vst.msk [vmem:[#allocation7] sm:$0x1] %vm3055, %v2208
      %p3057 = scmp.eq.s32.totalorder %s24, 1
      // Predicated region
      $region77: #{tpu_custom_call.1} parent=71 // pred_check
        %p3058 = pneg %p3057
      $region78: #{tpu_custom_call.1} parent=71 // pred_check_branch
        %3060 = sbr.rel (%p3058) target = $region80
      $region79: #{tpu_custom_call.1} parent=71 // pred_region
        %v3061 = vld [vmem:[#allocation6] sm:$0xff]
        %v3062 = vld [vmem:[#allocation6 + $0x8] sm:$0xff]
        %v3063 = vld [vmem:[#allocation6 + $0x10] sm:$0xff]
        %v3064 = vld [vmem:[#allocation6 + $0x18] sm:$0xff]
        %v3065 = vld [vmem:[#allocation6 + $0x20] sm:$0xff]
        %v3066 = vld [vmem:[#allocation6 + $0x28] sm:$0xff]
        %v3067 = vld [vmem:[#allocation6 + $0x30] sm:$0xff]
        %v3068 = vld [vmem:[#allocation6 + $0x38] sm:$0xff]
        %v3069 = vld [vmem:[#allocation6 + $0x40] sm:$0xff]
        %v3070 = vld [vmem:[#allocation6 + $0x48] sm:$0xff]
        %v3071 = vld [vmem:[#allocation6 + $0x50] sm:$0xff]
        %v3072 = vld [vmem:[#allocation6 + $0x58] sm:$0xff]
        %v3073 = vld [vmem:[#allocation6 + $0x60] sm:$0xff]
        %v3074 = vld [vmem:[#allocation6 + $0x68] sm:$0xff]
        %v3075 = vld [vmem:[#allocation6 + $0x70] sm:$0xff]
        %v3076 = vld [vmem:[#allocation6 + $0x78] sm:$0xff]
        %v3077 = vld [vmem:[%s8] sm:$0xff]
        %v3078 = vld [vmem:[%s8 + $0x8] sm:$0xff]
        %v3079 = vld [vmem:[%s8 + $0x10] sm:$0xff]
        %v3080 = vld [vmem:[%s8 + $0x18] sm:$0xff]
        %v3081 = vld [vmem:[%s8 + $0x20] sm:$0xff]
        %v3082 = vld [vmem:[%s8 + $0x28] sm:$0xff]
        %v3083 = vld [vmem:[%s8 + $0x30] sm:$0xff]
        %v3084 = vld [vmem:[%s8 + $0x38] sm:$0xff]
        %v3085 = vld [vmem:[%s8 + $0x40] sm:$0xff]
        %v3086 = vld [vmem:[%s8 + $0x48] sm:$0xff]
        %v3087 = vld [vmem:[%s8 + $0x50] sm:$0xff]
        %v3088 = vld [vmem:[%s8 + $0x58] sm:$0xff]
        %v3089 = vld [vmem:[%s8 + $0x60] sm:$0xff]
        %v3090 = vld [vmem:[%s8 + $0x68] sm:$0xff]
        %v3091 = vld [vmem:[%s8 + $0x70] sm:$0xff]
        %v3092 = vld [vmem:[%s8 + $0x78] sm:$0xff]
        %v3094 = vsel %vm2170, %v3061, 0
        %v3097 = vsel %vm2170, %v3062, 0
        %v3100 = vsel %vm2170, %v3063, 0
        %v3103 = vsel %vm2170, %v3064, 0
        %v3106 = vsel %vm2170, %v3065, 0
        %v3109 = vsel %vm2170, %v3066, 0
        %v3112 = vsel %vm2170, %v3067, 0
        %v3115 = vsel %vm2170, %v3068, 0
        %v3118 = vsel %vm2170, %v3069, 0
        %v3121 = vsel %vm2170, %v3070, 0
        %v3124 = vsel %vm2170, %v3071, 0
        %v3127 = vsel %vm2170, %v3072, 0
        %v3130 = vsel %vm2170, %v3073, 0
        %v3133 = vsel %vm2170, %v3074, 0
        %v3136 = vsel %vm2170, %v3075, 0
        %v3139 = vsel %vm2170, %v3076, 0
        %v3142 = vsel %vm2170, %v3077, 0
        %v3145 = vsel %vm2170, %v3078, 0
        %v3148 = vsel %vm2170, %v3079, 0
        %v3151 = vsel %vm2170, %v3080, 0
        %v3154 = vsel %vm2170, %v3081, 0
        %v3157 = vsel %vm2170, %v3082, 0
        %v3160 = vsel %vm2170, %v3083, 0
        %v3163 = vsel %vm2170, %v3084, 0
        %v3166 = vsel %vm2170, %v3085, 0
        %v3169 = vsel %vm2170, %v3086, 0
        %v3172 = vsel %vm2170, %v3087, 0
        %v3175 = vsel %vm2170, %v3088, 0
        %v3178 = vsel %vm2170, %v3089, 0
        %v3181 = vsel %vm2170, %v3090, 0
        %v3184 = vsel %vm2170, %v3091, 0
        %v3187 = vsel %vm2170, %v3092, 0
        %3189 = vmatprep.subr.mxu0 0.0
        %3190 = vmatpush1.xpose.msra.mxu0 %v3142
        %3191 = vmatprep.subr.mxu0 0.0
        %3192 = vmatpush1.xpose.msra.mxu0 %v3145
        %3193 = vmatprep.subr.mxu0 0.0
        %3194 = vmatpush1.xpose.msra.mxu0 %v3148
        %3195 = vmatprep.subr.mxu0 0.0
        %3196 = vmatpush1.xpose.msra.mxu0 %v3151
        %3197 = vmatprep.subr.mxu0 0.0
        %3198 = vmatpush1.xpose.msra.mxu0 %v3154
        %3199 = vmatprep.subr.mxu0 0.0
        %3200 = vmatpush1.xpose.msra.mxu0 %v3157
        %3201 = vmatprep.subr.mxu0 0.0
        %3202 = vmatpush1.xpose.msra.mxu0 %v3160
        %3203 = vmatprep.subr.mxu0 0.0
        %3204 = vmatpush1.xpose.msra.mxu0 %v3163
        %3205 = vmatprep.subr.mxu0 0.0
        %3206 = vmatpush1.xpose.msra.mxu0 %v3166
        %3207 = vmatprep.subr.mxu0 0.0
        %3208 = vmatpush1.xpose.msra.mxu0 %v3169
        %3209 = vmatprep.subr.mxu0 0.0
        %3210 = vmatpush1.xpose.msra.mxu0 %v3172
        %3211 = vmatprep.subr.mxu0 0.0
        %3212 = vmatpush1.xpose.msra.mxu0 %v3175
        %3213 = vmatprep.subr.mxu0 0.0
        %3214 = vmatpush1.xpose.msra.mxu0 %v3178
        %3215 = vmatprep.subr.mxu0 0.0
        %3216 = vmatpush1.xpose.msra.mxu0 %v3181
        %3217 = vmatprep.subr.mxu0 0.0
        %3218 = vmatpush1.xpose.msra.mxu0 %v3184
        %3219 = vmatprep.subr.mxu0 0.0
        %3220 = vmatpush1.xpose.msra.mxu0 %v3187
        %3221 = vmatprep.subr.mxu0 0.0
        %3222 = vmatpush1.xpose.msra.mxu0 0.0
        %3223 = vmatprep.subr.mxu0 0.0
        %3224 = vmatpush1.xpose.msra.mxu0 0.0
        %3225 = vmatprep.subr.mxu0 0.0
        %3226 = vmatpush1.xpose.msra.mxu0 0.0
        %3227 = vmatprep.subr.mxu0 0.0
        %3228 = vmatpush1.xpose.msra.mxu0 0.0
        %3229 = vmatprep.subr.mxu0 0.0
        %3230 = vmatpush1.xpose.msra.mxu0 0.0
        %3231 = vmatprep.subr.mxu0 0.0
        %3232 = vmatpush1.xpose.msra.mxu0 0.0
        %3233 = vmatprep.subr.mxu0 0.0
        %3234 = vmatpush1.xpose.msra.mxu0 0.0
        %3235 = vmatprep.subr.mxu0 0.0
        %3236 = vmatpush1.xpose.msra.mxu0 0.0
        %3237 = vmatprep.subr.mxu0 0.0
        %3238 = vmatpush1.xpose.msra.mxu0 0.0
        %3239 = vmatprep.subr.mxu0 0.0
        %3240 = vmatpush1.xpose.msra.mxu0 0.0
        %3241 = vmatprep.subr.mxu0 0.0
        %3242 = vmatpush1.xpose.msra.mxu0 0.0
        %3243 = vmatprep.subr.mxu0 0.0
        %3244 = vmatpush1.xpose.msra.mxu0 0.0
        %3245 = vmatprep.subr.mxu0 0.0
        %3246 = vmatpush1.xpose.msra.mxu0 0.0
        %3247 = vmatprep.subr.mxu0 0.0
        %3248 = vmatpush1.xpose.msra.mxu0 0.0
        %3249 = vmatprep.subr.mxu0 0.0
        %3250 = vmatpush1.xpose.msra.mxu0 0.0
        %3251 = vmatprep.subr.mxu0 0.0
        %3252 = vmatpush1.xpose.msra.mxu0 0.0
        %3253 = vmatprep.mubr.f32.mxu0 0.0
        %3254 = vmatmul.mubr.f32.gmra.mrb[0].mxu0 %v3094
        %v3255 = vpop.f32.mrb[0].mxu0
        %v3256 = vadd.f32 0.0, %v3255
        %v3257 = vpop.f32.mrb[0].mxu0
        %3258 = vmatprep.mubr.f32.mxu0 0.0
        %3259 = vmatmul.mubr.f32.gmra.mrb[0].mxu0 %v3097
        %v3260 = vpop.f32.mrb[0].mxu0
        %v3261 = vadd.f32 0.0, %v3260
        %v3262 = vpop.f32.mrb[0].mxu0
        %3263 = vmatprep.mubr.f32.mxu0 0.0
        %3264 = vmatmul.mubr.f32.gmra.mrb[0].mxu0 %v3100
        %v3265 = vpop.f32.mrb[0].mxu0
        %v3266 = vadd.f32 0.0, %v3265
        %v3267 = vpop.f32.mrb[0].mxu0
        %3268 = vmatprep.mubr.f32.mxu0 0.0
        %3269 = vmatmul.mubr.f32.gmra.mrb[0].mxu0 %v3103
        %v3270 = vpop.f32.mrb[0].mxu0
        %v3271 = vadd.f32 0.0, %v3270
        %v3272 = vpop.f32.mrb[0].mxu0
        %3273 = vmatprep.mubr.f32.mxu0 0.0
        %3274 = vmatmul.mubr.f32.gmra.mrb[0].mxu0 %v3106
        %v3275 = vpop.f32.mrb[0].mxu0
        %v3276 = vadd.f32 0.0, %v3275
        %v3277 = vpop.f32.mrb[0].mxu0
        %3278 = vmatprep.mubr.f32.mxu0 0.0
        %3279 = vmatmul.mubr.f32.gmra.mrb[0].mxu0 %v3109
        %v3280 = vpop.f32.mrb[0].mxu0
        %v3281 = vadd.f32 0.0, %v3280
        %v3282 = vpop.f32.mrb[0].mxu0
        %3283 = vmatprep.mubr.f32.mxu0 0.0
        %3284 = vmatmul.mubr.f32.gmra.mrb[0].mxu0 %v3112
        %v3285 = vpop.f32.mrb[0].mxu0
        %v3286 = vadd.f32 0.0, %v3285
        %v3287 = vpop.f32.mrb[0].mxu0
        %3288 = vmatprep.mubr.f32.mxu0 0.0
        %3289 = vmatmul.mubr.f32.gmra.mrb[0].mxu0 %v3115
        %v3290 = vpop.f32.mrb[0].mxu0
        %v3291 = vadd.f32 0.0, %v3290
        %v3292 = vpop.f32.mrb[0].mxu0
        %3293 = vmatprep.mubr.f32.mxu0 0.0
        %3294 = vmatmul.mubr.f32.gmra.mrb[0].mxu0 %v3118
        %v3295 = vpop.f32.mrb[0].mxu0
        %v3296 = vadd.f32 0.0, %v3295
        %v3297 = vpop.f32.mrb[0].mxu0
        %3298 = vmatprep.mubr.f32.mxu0 0.0
        %3299 = vmatmul.mubr.f32.gmra.mrb[0].mxu0 %v3121
        %v3300 = vpop.f32.mrb[0].mxu0
        %v3301 = vadd.f32 0.0, %v3300
        %v3302 = vpop.f32.mrb[0].mxu0
        %3303 = vmatprep.mubr.f32.mxu0 0.0
        %3304 = vmatmul.mubr.f32.gmra.mrb[0].mxu0 %v3124
        %v3305 = vpop.f32.mrb[0].mxu0
        %v3306 = vadd.f32 0.0, %v3305
        %v3307 = vpop.f32.mrb[0].mxu0
        %3308 = vmatprep.mubr.f32.mxu0 0.0
        %3309 = vmatmul.mubr.f32.gmra.mrb[0].mxu0 %v3127
        %v3310 = vpop.f32.mrb[0].mxu0
        %v3311 = vadd.f32 0.0, %v3310
        %v3312 = vpop.f32.mrb[0].mxu0
        %3313 = vmatprep.mubr.f32.mxu0 0.0
        %3314 = vmatmul.mubr.f32.gmra.mrb[0].mxu0 %v3130
        %v3315 = vpop.f32.mrb[0].mxu0
        %v3316 = vadd.f32 0.0, %v3315
        %v3317 = vpop.f32.mrb[0].mxu0
        %3318 = vmatprep.mubr.f32.mxu0 0.0
        %3319 = vmatmul.mubr.f32.gmra.mrb[0].mxu0 %v3133
        %v3320 = vpop.f32.mrb[0].mxu0
        %v3321 = vadd.f32 0.0, %v3320
        %v3322 = vpop.f32.mrb[0].mxu0
        %3323 = vmatprep.mubr.f32.mxu0 0.0
        %3324 = vmatmul.mubr.f32.gmra.mrb[0].mxu0 %v3136
        %v3325 = vpop.f32.mrb[0].mxu0
        %v3326 = vadd.f32 0.0, %v3325
        %v3327 = vpop.f32.mrb[0].mxu0
        %3328 = vmatprep.mubr.f32.mxu0 0.0
        %3329 = vmatmul.mubr.f32.gmra.mrb[0].mxu0 %v3139
        %v3330 = vpop.f32.mrb[0].mxu0
        %v3331 = vadd.f32 0.0, %v3330
        %v3332 = vpop.f32.mrb[0].mxu0
        %3333 = vdwg.mxu0
        %vm3334 = vcmp.gt.f32.partialorder %v3256, 0.0
        %vm3335 = vcmp.gt.f32.partialorder %v3261, 0.0
        %vm3336 = vcmp.gt.f32.partialorder %v3266, 0.0
        %vm3337 = vcmp.gt.f32.partialorder %v3271, 0.0
        %vm3338 = vcmp.gt.f32.partialorder %v3276, 0.0
        %vm3339 = vcmp.gt.f32.partialorder %v3281, 0.0
        %vm3340 = vcmp.gt.f32.partialorder %v3286, 0.0
        %vm3341 = vcmp.gt.f32.partialorder %v3291, 0.0
        %vm3342 = vcmp.gt.f32.partialorder %v3296, 0.0
        %vm3343 = vcmp.gt.f32.partialorder %v3301, 0.0
        %vm3344 = vcmp.gt.f32.partialorder %v3306, 0.0
        %vm3345 = vcmp.gt.f32.partialorder %v3311, 0.0
        %vm3346 = vcmp.gt.f32.partialorder %v3316, 0.0
        %vm3347 = vcmp.gt.f32.partialorder %v3321, 0.0
        %vm3348 = vcmp.gt.f32.partialorder %v3326, 0.0
        %vm3349 = vcmp.gt.f32.partialorder %v3331, 0.0
        %v3350 = vsel %vm3334, %v3256, 1.0
        %v3351 = vsel %vm3335, %v3261, 1.0
        %v3352 = vsel %vm3336, %v3266, 1.0
        %v3353 = vsel %vm3337, %v3271, 1.0
        %v3354 = vsel %vm3338, %v3276, 1.0
        %v3355 = vsel %vm3339, %v3281, 1.0
        %v3356 = vsel %vm3340, %v3286, 1.0
        %v3357 = vsel %vm3341, %v3291, 1.0
        %v3358 = vsel %vm3342, %v3296, 1.0
        %v3359 = vsel %vm3343, %v3301, 1.0
        %v3360 = vsel %vm3344, %v3306, 1.0
        %v3361 = vsel %vm3345, %v3311, 1.0
        %v3362 = vsel %vm3346, %v3316, 1.0
        %v3363 = vsel %vm3347, %v3321, 1.0
        %v3364 = vsel %vm3348, %v3326, 1.0
        %v3365 = vsel %vm3349, %v3331, 1.0
        %v3366 = vld [vmem:[#allocation5] sm:$0xff]
        %v3367 = vld [vmem:[#allocation5 + $0x8] sm:$0xff]
        %v3368 = vld [vmem:[#allocation5 + $0x10] sm:$0xff]
        %v3369 = vld [vmem:[#allocation5 + $0x18] sm:$0xff]
        %v3370 = vld [vmem:[#allocation5 + $0x20] sm:$0xff]
        %v3371 = vld [vmem:[#allocation5 + $0x28] sm:$0xff]
        %v3372 = vld [vmem:[#allocation5 + $0x30] sm:$0xff]
        %v3373 = vld [vmem:[#allocation5 + $0x38] sm:$0xff]
        %v3374 = vld [vmem:[#allocation5 + $0x40] sm:$0xff]
        %v3375 = vld [vmem:[#allocation5 + $0x48] sm:$0xff]
        %v3376 = vld [vmem:[#allocation5 + $0x50] sm:$0xff]
        %v3377 = vld [vmem:[#allocation5 + $0x58] sm:$0xff]
        %v3378 = vld [vmem:[#allocation5 + $0x60] sm:$0xff]
        %v3379 = vld [vmem:[#allocation5 + $0x68] sm:$0xff]
        %v3380 = vld [vmem:[#allocation5 + $0x70] sm:$0xff]
        %v3381 = vld [vmem:[#allocation5 + $0x78] sm:$0xff]
        %v3382 = vrcp.pop %v3350
        %v3383 = vmul.f32 %v3366, %v3382
        %v3384 = vrcp.pop %v3351
        %v3385 = vmul.f32 %v3367, %v3384
        %v3386 = vrcp.pop %v3352
        %v3387 = vmul.f32 %v3368, %v3386
        %v3388 = vrcp.pop %v3353
        %v3389 = vmul.f32 %v3369, %v3388
        %v3390 = vrcp.pop %v3354
        %v3391 = vmul.f32 %v3370, %v3390
        %v3392 = vrcp.pop %v3355
        %v3393 = vmul.f32 %v3371, %v3392
        %v3394 = vrcp.pop %v3356
        %v3395 = vmul.f32 %v3372, %v3394
        %v3396 = vrcp.pop %v3357
        %v3397 = vmul.f32 %v3373, %v3396
        %v3398 = vrcp.pop %v3358
        %v3399 = vmul.f32 %v3374, %v3398
        %v3400 = vrcp.pop %v3359
        %v3401 = vmul.f32 %v3375, %v3400
        %v3402 = vrcp.pop %v3360
        %v3403 = vmul.f32 %v3376, %v3402
        %v3404 = vrcp.pop %v3361
        %v3405 = vmul.f32 %v3377, %v3404
        %v3406 = vrcp.pop %v3362
        %v3407 = vmul.f32 %v3378, %v3406
        %v3408 = vrcp.pop %v3363
        %v3409 = vmul.f32 %v3379, %v3408
        %v3410 = vrcp.pop %v3364
        %v3411 = vmul.f32 %v3380, %v3410
        %v3412 = vrcp.pop %v3365
        %v3413 = vmul.f32 %v3381, %v3412
        %v3414 = vld [vmem:[%s9] sm:$0xff]
        %v3415 = vld [vmem:[%s9 + $0x8] sm:$0xff]
        %v3416 = vld [vmem:[%s9 + $0x10] sm:$0xff]
        %v3417 = vld [vmem:[%s9 + $0x18] sm:$0xff]
        %v3418 = vld [vmem:[%s9 + $0x20] sm:$0xff]
        %v3419 = vld [vmem:[%s9 + $0x28] sm:$0xff]
        %v3420 = vld [vmem:[%s9 + $0x30] sm:$0xff]
        %v3421 = vld [vmem:[%s9 + $0x38] sm:$0xff]
        %v3422 = vld [vmem:[%s9 + $0x40] sm:$0xff]
        %v3423 = vld [vmem:[%s9 + $0x48] sm:$0xff]
        %v3424 = vld [vmem:[%s9 + $0x50] sm:$0xff]
        %v3425 = vld [vmem:[%s9 + $0x58] sm:$0xff]
        %v3426 = vld [vmem:[%s9 + $0x60] sm:$0xff]
        %v3427 = vld [vmem:[%s9 + $0x68] sm:$0xff]
        %v3428 = vld [vmem:[%s9 + $0x70] sm:$0xff]
        %v3429 = vld [vmem:[%s9 + $0x78] sm:$0xff]
        %v3430 = vld [vmem:[#allocation4] sm:$0xff]
        %v3431 = vld [vmem:[#allocation4 + $0x8] sm:$0xff]
        %v3432 = vld [vmem:[#allocation4 + $0x10] sm:$0xff]
        %v3433 = vld [vmem:[#allocation4 + $0x18] sm:$0xff]
        %v3434 = vld [vmem:[#allocation4 + $0x20] sm:$0xff]
        %v3435 = vld [vmem:[#allocation4 + $0x28] sm:$0xff]
        %v3436 = vld [vmem:[#allocation4 + $0x30] sm:$0xff]
        %v3437 = vld [vmem:[#allocation4 + $0x38] sm:$0xff]
        %v3438 = vld [vmem:[#allocation4 + $0x40] sm:$0xff]
        %v3439 = vld [vmem:[#allocation4 + $0x48] sm:$0xff]
        %v3440 = vld [vmem:[#allocation4 + $0x50] sm:$0xff]
        %v3441 = vld [vmem:[#allocation4 + $0x58] sm:$0xff]
        %v3442 = vld [vmem:[#allocation4 + $0x60] sm:$0xff]
        %v3443 = vld [vmem:[#allocation4 + $0x68] sm:$0xff]
        %v3444 = vld [vmem:[#allocation4 + $0x70] sm:$0xff]
        %v3445 = vld [vmem:[#allocation4 + $0x78] sm:$0xff]
        %3446 = vmatprep.subr.mxu0 0.0
        %3447 = vmatpush1.msra.mxu0 %v3414
        %3448 = vmatprep.subr.mxu0 0.0
        %3449 = vmatpush1.msra.mxu0 %v3415
        %3450 = vmatprep.subr.mxu0 0.0
        %3451 = vmatpush1.msra.mxu0 %v3416
        %3452 = vmatprep.subr.mxu0 0.0
        %3453 = vmatpush1.msra.mxu0 %v3417
        %3454 = vmatprep.subr.mxu0 0.0
        %3455 = vmatpush1.msra.mxu0 %v3418
        %3456 = vmatprep.subr.mxu0 0.0
        %3457 = vmatpush1.msra.mxu0 %v3419
        %3458 = vmatprep.subr.mxu0 0.0
        %3459 = vmatpush1.msra.mxu0 %v3420
        %3460 = vmatprep.subr.mxu0 0.0
        %3461 = vmatpush1.msra.mxu0 %v3421
        %3462 = vmatprep.subr.mxu0 0.0
        %3463 = vmatpush1.msra.mxu0 %v3422
        %3464 = vmatprep.subr.mxu0 0.0
        %3465 = vmatpush1.msra.mxu0 %v3423
        %3466 = vmatprep.subr.mxu0 0.0
        %3467 = vmatpush1.msra.mxu0 %v3424
        %3468 = vmatprep.subr.mxu0 0.0
        %3469 = vmatpush1.msra.mxu0 %v3425
        %3470 = vmatprep.subr.mxu0 0.0
        %3471 = vmatpush1.msra.mxu0 %v3426
        %3472 = vmatprep.subr.mxu0 0.0
        %3473 = vmatpush1.msra.mxu0 %v3427
        %3474 = vmatprep.subr.mxu0 0.0
        %3475 = vmatpush1.msra.mxu0 %v3428
        %3476 = vmatprep.subr.mxu0 0.0
        %3477 = vmatpush1.msra.mxu0 %v3429
        %3478 = vmatprep.subr.mxu0 0.0
        %3479 = vmatpush1.msra.mxu0 0.0
        %3480 = vmatprep.subr.mxu0 0.0
        %3481 = vmatpush1.msra.mxu0 0.0
        %3482 = vmatprep.subr.mxu0 0.0
        %3483 = vmatpush1.msra.mxu0 0.0
        %3484 = vmatprep.subr.mxu0 0.0
        %3485 = vmatpush1.msra.mxu0 0.0
        %3486 = vmatprep.subr.mxu0 0.0
        %3487 = vmatpush1.msra.mxu0 0.0
        %3488 = vmatprep.subr.mxu0 0.0
        %3489 = vmatpush1.msra.mxu0 0.0
        %3490 = vmatprep.subr.mxu0 0.0
        %3491 = vmatpush1.msra.mxu0 0.0
        %3492 = vmatprep.subr.mxu0 0.0
        %3493 = vmatpush1.msra.mxu0 0.0
        %3494 = vmatprep.subr.mxu0 0.0
        %3495 = vmatpush1.msra.mxu0 0.0
        %3496 = vmatprep.subr.mxu0 0.0
        %3497 = vmatpush1.msra.mxu0 0.0
        %3498 = vmatprep.subr.mxu0 0.0
        %3499 = vmatpush1.msra.mxu0 0.0
        %3500 = vmatprep.subr.mxu0 0.0
        %3501 = vmatpush1.msra.mxu0 0.0
        %3502 = vmatprep.subr.mxu0 0.0
        %3503 = vmatpush1.msra.mxu0 0.0
        %3504 = vmatprep.subr.mxu0 0.0
        %3505 = vmatpush1.msra.mxu0 0.0
        %3506 = vmatprep.subr.mxu0 0.0
        %3507 = vmatpush1.msra.mxu0 0.0
        %3508 = vmatprep.subr.mxu0 0.0
        %3509 = vmatpush1.msra.mxu0 0.0
        %3510 = vmatprep.mubr.f32.mxu0 0.0
        %3511 = vmatmul.mubr.f32.gmra.mrb[0].mxu0 %v3383
        %v3512 = vpop.f32.mrb[0].mxu0
        %v3513 = vadd.f32 %v3430, %v3512
        %v3514 = vpop.f32.mrb[0].mxu0
        %3515 = vmatprep.mubr.f32.mxu0 0.0
        %3516 = vmatmul.mubr.f32.gmra.mrb[0].mxu0 %v3385
        %v3517 = vpop.f32.mrb[0].mxu0
        %v3518 = vadd.f32 %v3431, %v3517
        %v3519 = vpop.f32.mrb[0].mxu0
        %3520 = vmatprep.mubr.f32.mxu0 0.0
        %3521 = vmatmul.mubr.f32.gmra.mrb[0].mxu0 %v3387
        %v3522 = vpop.f32.mrb[0].mxu0
        %v3523 = vadd.f32 %v3432, %v3522
        %v3524 = vpop.f32.mrb[0].mxu0
        %3525 = vmatprep.mubr.f32.mxu0 0.0
        %3526 = vmatmul.mubr.f32.gmra.mrb[0].mxu0 %v3389
        %v3527 = vpop.f32.mrb[0].mxu0
        %v3528 = vadd.f32 %v3433, %v3527
        %v3529 = vpop.f32.mrb[0].mxu0
        %3530 = vmatprep.mubr.f32.mxu0 0.0
        %3531 = vmatmul.mubr.f32.gmra.mrb[0].mxu0 %v3391
        %v3532 = vpop.f32.mrb[0].mxu0
        %v3533 = vadd.f32 %v3434, %v3532
        %v3534 = vpop.f32.mrb[0].mxu0
        %3535 = vmatprep.mubr.f32.mxu0 0.0
        %3536 = vmatmul.mubr.f32.gmra.mrb[0].mxu0 %v3393
        %v3537 = vpop.f32.mrb[0].mxu0
        %v3538 = vadd.f32 %v3435, %v3537
        %v3539 = vpop.f32.mrb[0].mxu0
        %3540 = vmatprep.mubr.f32.mxu0 0.0
        %3541 = vmatmul.mubr.f32.gmra.mrb[0].mxu0 %v3395
        %v3542 = vpop.f32.mrb[0].mxu0
        %v3543 = vadd.f32 %v3436, %v3542
        %v3544 = vpop.f32.mrb[0].mxu0
        %3545 = vmatprep.mubr.f32.mxu0 0.0
        %3546 = vmatmul.mubr.f32.gmra.mrb[0].mxu0 %v3397
        %v3547 = vpop.f32.mrb[0].mxu0
        %v3548 = vadd.f32 %v3437, %v3547
        %v3549 = vpop.f32.mrb[0].mxu0
        %3550 = vmatprep.mubr.f32.mxu0 0.0
        %3551 = vmatmul.mubr.f32.gmra.mrb[0].mxu0 %v3399
        %v3552 = vpop.f32.mrb[0].mxu0
        %v3553 = vadd.f32 %v3438, %v3552
        %v3554 = vpop.f32.mrb[0].mxu0
        %3555 = vmatprep.mubr.f32.mxu0 0.0
        %3556 = vmatmul.mubr.f32.gmra.mrb[0].mxu0 %v3401
        %v3557 = vpop.f32.mrb[0].mxu0
        %v3558 = vadd.f32 %v3439, %v3557
        %v3559 = vpop.f32.mrb[0].mxu0
        %3560 = vmatprep.mubr.f32.mxu0 0.0
        %3561 = vmatmul.mubr.f32.gmra.mrb[0].mxu0 %v3403
        %v3562 = vpop.f32.mrb[0].mxu0
        %v3563 = vadd.f32 %v3440, %v3562
        %v3564 = vpop.f32.mrb[0].mxu0
        %3565 = vmatprep.mubr.f32.mxu0 0.0
        %3566 = vmatmul.mubr.f32.gmra.mrb[0].mxu0 %v3405
        %v3567 = vpop.f32.mrb[0].mxu0
        %v3568 = vadd.f32 %v3441, %v3567
        %v3569 = vpop.f32.mrb[0].mxu0
        %3570 = vmatprep.mubr.f32.mxu0 0.0
        %3571 = vmatmul.mubr.f32.gmra.mrb[0].mxu0 %v3407
        %v3572 = vpop.f32.mrb[0].mxu0
        %v3573 = vadd.f32 %v3442, %v3572
        %v3574 = vpop.f32.mrb[0].mxu0
        %3575 = vmatprep.mubr.f32.mxu0 0.0
        %3576 = vmatmul.mubr.f32.gmra.mrb[0].mxu0 %v3409
        %v3577 = vpop.f32.mrb[0].mxu0
        %v3578 = vadd.f32 %v3443, %v3577
        %v3579 = vpop.f32.mrb[0].mxu0
        %3580 = vmatprep.mubr.f32.mxu0 0.0
        %3581 = vmatmul.mubr.f32.gmra.mrb[0].mxu0 %v3411
        %v3582 = vpop.f32.mrb[0].mxu0
        %v3583 = vadd.f32 %v3444, %v3582
        %v3584 = vpop.f32.mrb[0].mxu0
        %3585 = vmatprep.mubr.f32.mxu0 0.0
        %3586 = vmatmul.mubr.f32.gmra.mrb[0].mxu0 %v3413
        %v3587 = vpop.f32.mrb[0].mxu0
        %v3588 = vadd.f32 %v3445, %v3587
        %v3589 = vpop.f32.mrb[0].mxu0
        %3590 = vdwg.mxu0
        %v3591 = vld [vmem:[%s10] sm:$0xff]
        %v3592 = vld [vmem:[%s10 + $0x8] sm:$0xff]
        %v3593 = vld [vmem:[%s10 + $0x10] sm:$0xff]
        %v3594 = vld [vmem:[%s10 + $0x18] sm:$0xff]
        %vm3595 = vcmask 261120
        %v3597 = vsel %vm3595, %v3513, 0
        %v3600 = vsel %vm3595, %v3518, 0
        %v3603 = vsel %vm3595, %v3523, 0
        %v3606 = vsel %vm3595, %v3528, 0
        %v3609 = vsel %vm3595, %v3533, 0
        %v3612 = vsel %vm3595, %v3538, 0
        %v3615 = vsel %vm3595, %v3543, 0
        %v3618 = vsel %vm3595, %v3548, 0
        %v3621 = vsel %vm3595, %v3553, 0
        %v3624 = vsel %vm3595, %v3558, 0
        %v3627 = vsel %vm3595, %v3563, 0
        %v3630 = vsel %vm3595, %v3568, 0
        %v3633 = vsel %vm3595, %v3573, 0
        %v3636 = vsel %vm3595, %v3578, 0
        %v3639 = vsel %vm3595, %v3583, 0
        %v3642 = vsel %vm3595, %v3588, 0
        %3644 = vmatprep.subr.mxu0 0.0
        %3645 = vmatpush1.msra.mxu0 %v3591
        %3646 = vmatprep.subr.mxu0 0.0
        %3647 = vmatpush1.msra.mxu0 %v3592
        %3648 = vmatprep.subr.mxu0 0.0
        %3649 = vmatpush1.msra.mxu0 %v3593
        %3650 = vmatprep.subr.mxu0 0.0
        %3651 = vmatpush1.msra.mxu0 %v3594
        %3652 = vmatprep.subr.mxu0 0.0
        %3653 = vmatpush1.msra.mxu0 0.0
        %3654 = vmatprep.subr.mxu0 0.0
        %3655 = vmatpush1.msra.mxu0 0.0
        %3656 = vmatprep.subr.mxu0 0.0
        %3657 = vmatpush1.msra.mxu0 0.0
        %3658 = vmatprep.subr.mxu0 0.0
        %3659 = vmatpush1.msra.mxu0 0.0
        %3660 = vmatprep.subr.mxu0 0.0
        %3661 = vmatpush1.msra.mxu0 0.0
        %3662 = vmatprep.subr.mxu0 0.0
        %3663 = vmatpush1.msra.mxu0 0.0
        %3664 = vmatprep.subr.mxu0 0.0
        %3665 = vmatpush1.msra.mxu0 0.0
        %3666 = vmatprep.subr.mxu0 0.0
        %3667 = vmatpush1.msra.mxu0 0.0
        %3668 = vmatprep.subr.mxu0 0.0
        %3669 = vmatpush1.msra.mxu0 0.0
        %3670 = vmatprep.subr.mxu0 0.0
        %3671 = vmatpush1.msra.mxu0 0.0
        %3672 = vmatprep.subr.mxu0 0.0
        %3673 = vmatpush1.msra.mxu0 0.0
        %3674 = vmatprep.subr.mxu0 0.0
        %3675 = vmatpush1.msra.mxu0 0.0
        %3676 = vmatprep.subr.mxu0 0.0
        %3677 = vmatpush1.msra.mxu0 0.0
        %3678 = vmatprep.subr.mxu0 0.0
        %3679 = vmatpush1.msra.mxu0 0.0
        %3680 = vmatprep.subr.mxu0 0.0
        %3681 = vmatpush1.msra.mxu0 0.0
        %3682 = vmatprep.subr.mxu0 0.0
        %3683 = vmatpush1.msra.mxu0 0.0
        %3684 = vmatprep.subr.mxu0 0.0
        %3685 = vmatpush1.msra.mxu0 0.0
        %3686 = vmatprep.subr.mxu0 0.0
        %3687 = vmatpush1.msra.mxu0 0.0
        %3688 = vmatprep.subr.mxu0 0.0
        %3689 = vmatpush1.msra.mxu0 0.0
        %3690 = vmatprep.subr.mxu0 0.0
        %3691 = vmatpush1.msra.mxu0 0.0
        %3692 = vmatprep.subr.mxu0 0.0
        %3693 = vmatpush1.msra.mxu0 0.0
        %3694 = vmatprep.subr.mxu0 0.0
        %3695 = vmatpush1.msra.mxu0 0.0
        %3696 = vmatprep.subr.mxu0 0.0
        %3697 = vmatpush1.msra.mxu0 0.0
        %3698 = vmatprep.subr.mxu0 0.0
        %3699 = vmatpush1.msra.mxu0 0.0
        %3700 = vmatprep.subr.mxu0 0.0
        %3701 = vmatpush1.msra.mxu0 0.0
        %3702 = vmatprep.subr.mxu0 0.0
        %3703 = vmatpush1.msra.mxu0 0.0
        %3704 = vmatprep.subr.mxu0 0.0
        %3705 = vmatpush1.msra.mxu0 0.0
        %3706 = vmatprep.subr.mxu0 0.0
        %3707 = vmatpush1.msra.mxu0 0.0
        %3708 = vmatprep.mubr.f32.mxu0 0.0
        %3709 = vmatmul.mubr.f32.gmra.mrb[0].mxu0 %v3597
        %v3710 = vpop.f32.mrb[0].mxu0
        %v3711 = vadd.f32 0.0, %v3710
        %v3712 = vpop.f32.mrb[0].mxu0
        %3713 = vmatprep.mubr.f32.mxu0 0.0
        %3714 = vmatmul.mubr.f32.gmra.mrb[0].mxu0 %v3600
        %v3715 = vpop.f32.mrb[0].mxu0
        %v3716 = vadd.f32 0.0, %v3715
        %v3717 = vpop.f32.mrb[0].mxu0
        %3718 = vmatprep.mubr.f32.mxu0 0.0
        %3719 = vmatmul.mubr.f32.gmra.mrb[0].mxu0 %v3603
        %v3720 = vpop.f32.mrb[0].mxu0
        %v3721 = vadd.f32 0.0, %v3720
        %v3722 = vpop.f32.mrb[0].mxu0
        %3723 = vmatprep.mubr.f32.mxu0 0.0
        %3724 = vmatmul.mubr.f32.gmra.mrb[0].mxu0 %v3606
        %v3725 = vpop.f32.mrb[0].mxu0
        %v3726 = vadd.f32 0.0, %v3725
        %v3727 = vpop.f32.mrb[0].mxu0
        %3728 = vmatprep.mubr.f32.mxu0 0.0
        %3729 = vmatmul.mubr.f32.gmra.mrb[0].mxu0 %v3609
        %v3730 = vpop.f32.mrb[0].mxu0
        %v3731 = vadd.f32 0.0, %v3730
        %v3732 = vpop.f32.mrb[0].mxu0
        %3733 = vmatprep.mubr.f32.mxu0 0.0
        %3734 = vmatmul.mubr.f32.gmra.mrb[0].mxu0 %v3612
        %v3735 = vpop.f32.mrb[0].mxu0
        %v3736 = vadd.f32 0.0, %v3735
        %v3737 = vpop.f32.mrb[0].mxu0
        %3738 = vmatprep.mubr.f32.mxu0 0.0
        %3739 = vmatmul.mubr.f32.gmra.mrb[0].mxu0 %v3615
        %v3740 = vpop.f32.mrb[0].mxu0
        %v3741 = vadd.f32 0.0, %v3740
        %v3742 = vpop.f32.mrb[0].mxu0
        %3743 = vmatprep.mubr.f32.mxu0 0.0
        %3744 = vmatmul.mubr.f32.gmra.mrb[0].mxu0 %v3618
        %v3745 = vpop.f32.mrb[0].mxu0
        %v3746 = vadd.f32 0.0, %v3745
        %v3747 = vpop.f32.mrb[0].mxu0
        %3748 = vmatprep.mubr.f32.mxu0 0.0
        %3749 = vmatmul.mubr.f32.gmra.mrb[0].mxu0 %v3621
        %v3750 = vpop.f32.mrb[0].mxu0
        %v3751 = vadd.f32 0.0, %v3750
        %v3752 = vpop.f32.mrb[0].mxu0
        %3753 = vmatprep.mubr.f32.mxu0 0.0
        %3754 = vmatmul.mubr.f32.gmra.mrb[0].mxu0 %v3624
        %v3755 = vpop.f32.mrb[0].mxu0
        %v3756 = vadd.f32 0.0, %v3755
        %v3757 = vpop.f32.mrb[0].mxu0
        %3758 = vmatprep.mubr.f32.mxu0 0.0
        %3759 = vmatmul.mubr.f32.gmra.mrb[0].mxu0 %v3627
        %v3760 = vpop.f32.mrb[0].mxu0
        %v3761 = vadd.f32 0.0, %v3760
        %v3762 = vpop.f32.mrb[0].mxu0
        %3763 = vmatprep.mubr.f32.mxu0 0.0
        %3764 = vmatmul.mubr.f32.gmra.mrb[0].mxu0 %v3630
        %v3765 = vpop.f32.mrb[0].mxu0
        %v3766 = vadd.f32 0.0, %v3765
        %v3767 = vpop.f32.mrb[0].mxu0
        %3768 = vmatprep.mubr.f32.mxu0 0.0
        %3769 = vmatmul.mubr.f32.gmra.mrb[0].mxu0 %v3633
        %v3770 = vpop.f32.mrb[0].mxu0
        %v3771 = vadd.f32 0.0, %v3770
        %v3772 = vpop.f32.mrb[0].mxu0
        %3773 = vmatprep.mubr.f32.mxu0 0.0
        %3774 = vmatmul.mubr.f32.gmra.mrb[0].mxu0 %v3636
        %v3775 = vpop.f32.mrb[0].mxu0
        %v3776 = vadd.f32 0.0, %v3775
        %v3777 = vpop.f32.mrb[0].mxu0
        %3778 = vmatprep.mubr.f32.mxu0 0.0
        %3779 = vmatmul.mubr.f32.gmra.mrb[0].mxu0 %v3639
        %v3780 = vpop.f32.mrb[0].mxu0
        %v3781 = vadd.f32 0.0, %v3780
        %v3782 = vpop.f32.mrb[0].mxu0
        %3783 = vmatprep.mubr.f32.mxu0 0.0
        %3784 = vmatmul.mubr.f32.gmra.mrb[0].mxu0 %v3642
        %v3785 = vpop.f32.mrb[0].mxu0
        %v3786 = vadd.f32 0.0, %v3785
        %v3787 = vpop.f32.mrb[0].mxu0
        %3788 = vdwg.mxu0
        %v3789 = vld [vmem:[%s11] sm:$0xff]
        %v3790 = vld [vmem:[%s11 + $0x8] sm:$0xff]
        %v3791 = vld [vmem:[%s11 + $0x10] sm:$0xff]
        %v3792 = vld [vmem:[%s11 + $0x18] sm:$0xff]
        %v3793 = vld [vmem:[%s12] sm:$0x1]
        %v3795 = vlaneseq
        %v3796 = vshrl.u32 %v3795, 7
        %v3797 = vsub.s32 0, %v3796
        %v3798 = vrot.slane %v3793, %v3797
        %3800 = vmatprep.subr.mxu0 0.0
        %3801 = vmatpush1.msra.mxu0 %v3789
        %3802 = vmatprep.subr.mxu0 0.0
        %3803 = vmatpush1.msra.mxu0 %v3790
        %3804 = vmatprep.subr.mxu0 0.0
        %3805 = vmatpush1.msra.mxu0 %v3791
        %3806 = vmatprep.subr.mxu0 0.0
        %3807 = vmatpush1.msra.mxu0 %v3792
        %3808 = vmatprep.subr.mxu0 0.0
        %3809 = vmatpush1.msra.mxu0 0.0
        %3810 = vmatprep.subr.mxu0 0.0
        %3811 = vmatpush1.msra.mxu0 0.0
        %3812 = vmatprep.subr.mxu0 0.0
        %3813 = vmatpush1.msra.mxu0 0.0
        %3814 = vmatprep.subr.mxu0 0.0
        %3815 = vmatpush1.msra.mxu0 0.0
        %3816 = vmatprep.subr.mxu0 0.0
        %3817 = vmatpush1.msra.mxu0 0.0
        %3818 = vmatprep.subr.mxu0 0.0
        %3819 = vmatpush1.msra.mxu0 0.0
        %3820 = vmatprep.subr.mxu0 0.0
        %3821 = vmatpush1.msra.mxu0 0.0
        %3822 = vmatprep.subr.mxu0 0.0
        %3823 = vmatpush1.msra.mxu0 0.0
        %3824 = vmatprep.subr.mxu0 0.0
        %3825 = vmatpush1.msra.mxu0 0.0
        %3826 = vmatprep.subr.mxu0 0.0
        %3827 = vmatpush1.msra.mxu0 0.0
        %3828 = vmatprep.subr.mxu0 0.0
        %3829 = vmatpush1.msra.mxu0 0.0
        %3830 = vmatprep.subr.mxu0 0.0
        %3831 = vmatpush1.msra.mxu0 0.0
        %3832 = vmatprep.subr.mxu0 0.0
        %3833 = vmatpush1.msra.mxu0 0.0
        %3834 = vmatprep.subr.mxu0 0.0
        %3835 = vmatpush1.msra.mxu0 0.0
        %3836 = vmatprep.subr.mxu0 0.0
        %3837 = vmatpush1.msra.mxu0 0.0
        %3838 = vmatprep.subr.mxu0 0.0
        %3839 = vmatpush1.msra.mxu0 0.0
        %3840 = vmatprep.subr.mxu0 0.0
        %3841 = vmatpush1.msra.mxu0 0.0
        %3842 = vmatprep.subr.mxu0 0.0
        %3843 = vmatpush1.msra.mxu0 0.0
        %3844 = vmatprep.subr.mxu0 0.0
        %3845 = vmatpush1.msra.mxu0 0.0
        %3846 = vmatprep.subr.mxu0 0.0
        %3847 = vmatpush1.msra.mxu0 0.0
        %3848 = vmatprep.subr.mxu0 0.0
        %3849 = vmatpush1.msra.mxu0 0.0
        %3850 = vmatprep.subr.mxu0 0.0
        %3851 = vmatpush1.msra.mxu0 0.0
        %3852 = vmatprep.subr.mxu0 0.0
        %3853 = vmatpush1.msra.mxu0 0.0
        %3854 = vmatprep.subr.mxu0 0.0
        %3855 = vmatpush1.msra.mxu0 0.0
        %3856 = vmatprep.subr.mxu0 0.0
        %3857 = vmatpush1.msra.mxu0 0.0
        %3858 = vmatprep.subr.mxu0 0.0
        %3859 = vmatpush1.msra.mxu0 0.0
        %3860 = vmatprep.subr.mxu0 0.0
        %3861 = vmatpush1.msra.mxu0 0.0
        %3862 = vmatprep.subr.mxu0 0.0
        %3863 = vmatpush1.msra.mxu0 0.0
        %3864 = vmatprep.mubr.f32.mxu0 0.0
        %3865 = vmatmul.mubr.f32.gmra.mrb[0].mxu0 %v3597
        %v3866 = vpop.f32.mrb[0].mxu0
        %v3867 = vadd.f32 %v3798, %v3866
        %v3868 = vpop.f32.mrb[0].mxu0
        %3869 = vmatprep.mubr.f32.mxu0 0.0
        %3870 = vmatmul.mubr.f32.gmra.mrb[0].mxu0 %v3600
        %v3871 = vpop.f32.mrb[0].mxu0
        %v3872 = vadd.f32 %v3798, %v3871
        %v3873 = vpop.f32.mrb[0].mxu0
        %3874 = vmatprep.mubr.f32.mxu0 0.0
        %3875 = vmatmul.mubr.f32.gmra.mrb[0].mxu0 %v3603
        %v3876 = vpop.f32.mrb[0].mxu0
        %v3877 = vadd.f32 %v3798, %v3876
        %v3878 = vpop.f32.mrb[0].mxu0
        %3879 = vmatprep.mubr.f32.mxu0 0.0
        %3880 = vmatmul.mubr.f32.gmra.mrb[0].mxu0 %v3606
        %v3881 = vpop.f32.mrb[0].mxu0
        %v3882 = vadd.f32 %v3798, %v3881
        %v3883 = vpop.f32.mrb[0].mxu0
        %3884 = vmatprep.mubr.f32.mxu0 0.0
        %3885 = vmatmul.mubr.f32.gmra.mrb[0].mxu0 %v3609
        %v3886 = vpop.f32.mrb[0].mxu0
        %v3887 = vadd.f32 %v3798, %v3886
        %v3888 = vpop.f32.mrb[0].mxu0
        %3889 = vmatprep.mubr.f32.mxu0 0.0
        %3890 = vmatmul.mubr.f32.gmra.mrb[0].mxu0 %v3612
        %v3891 = vpop.f32.mrb[0].mxu0
        %v3892 = vadd.f32 %v3798, %v3891
        %v3893 = vpop.f32.mrb[0].mxu0
        %3894 = vmatprep.mubr.f32.mxu0 0.0
        %3895 = vmatmul.mubr.f32.gmra.mrb[0].mxu0 %v3615
        %v3896 = vpop.f32.mrb[0].mxu0
        %v3897 = vadd.f32 %v3798, %v3896
        %v3898 = vpop.f32.mrb[0].mxu0
        %3899 = vmatprep.mubr.f32.mxu0 0.0
        %3900 = vmatmul.mubr.f32.gmra.mrb[0].mxu0 %v3618
        %v3901 = vpop.f32.mrb[0].mxu0
        %v3902 = vadd.f32 %v3798, %v3901
        %v3903 = vpop.f32.mrb[0].mxu0
        %3904 = vmatprep.mubr.f32.mxu0 0.0
        %3905 = vmatmul.mubr.f32.gmra.mrb[0].mxu0 %v3621
        %v3906 = vpop.f32.mrb[0].mxu0
        %v3907 = vadd.f32 %v3798, %v3906
        %v3908 = vpop.f32.mrb[0].mxu0
        %3909 = vmatprep.mubr.f32.mxu0 0.0
        %3910 = vmatmul.mubr.f32.gmra.mrb[0].mxu0 %v3624
        %v3911 = vpop.f32.mrb[0].mxu0
        %v3912 = vadd.f32 %v3798, %v3911
        %v3913 = vpop.f32.mrb[0].mxu0
        %3914 = vmatprep.mubr.f32.mxu0 0.0
        %3915 = vmatmul.mubr.f32.gmra.mrb[0].mxu0 %v3627
        %v3916 = vpop.f32.mrb[0].mxu0
        %v3917 = vadd.f32 %v3798, %v3916
        %v3918 = vpop.f32.mrb[0].mxu0
        %3919 = vmatprep.mubr.f32.mxu0 0.0
        %3920 = vmatmul.mubr.f32.gmra.mrb[0].mxu0 %v3630
        %v3921 = vpop.f32.mrb[0].mxu0
        %v3922 = vadd.f32 %v3798, %v3921
        %v3923 = vpop.f32.mrb[0].mxu0
        %3924 = vmatprep.mubr.f32.mxu0 0.0
        %3925 = vmatmul.mubr.f32.gmra.mrb[0].mxu0 %v3633
        %v3926 = vpop.f32.mrb[0].mxu0
        %v3927 = vadd.f32 %v3798, %v3926
        %v3928 = vpop.f32.mrb[0].mxu0
        %3929 = vmatprep.mubr.f32.mxu0 0.0
        %3930 = vmatmul.mubr.f32.gmra.mrb[0].mxu0 %v3636
        %v3931 = vpop.f32.mrb[0].mxu0
        %v3932 = vadd.f32 %v3798, %v3931
        %v3933 = vpop.f32.mrb[0].mxu0
        %3934 = vmatprep.mubr.f32.mxu0 0.0
        %3935 = vmatmul.mubr.f32.gmra.mrb[0].mxu0 %v3639
        %v3936 = vpop.f32.mrb[0].mxu0
        %v3937 = vadd.f32 %v3798, %v3936
        %v3938 = vpop.f32.mrb[0].mxu0
        %3939 = vmatprep.mubr.f32.mxu0 0.0
        %3940 = vmatmul.mubr.f32.gmra.mrb[0].mxu0 %v3642
        %v3941 = vpop.f32.mrb[0].mxu0
        %v3942 = vadd.f32 %v3798, %v3941
        %v3943 = vpop.f32.mrb[0].mxu0
        %3944 = vdwg.mxu0
        %3945 = vst.msk [vmem:[%s13] sm:$0xff] %vm3595, %v3711
        %3946 = vst.msk [vmem:[%s13 + $0x8] sm:$0xff] %vm3595, %v3716
        %3947 = vst.msk [vmem:[%s13 + $0x10] sm:$0xff] %vm3595, %v3721
        %3948 = vst.msk [vmem:[%s13 + $0x18] sm:$0xff] %vm3595, %v3726
        %3949 = vst.msk [vmem:[%s13 + $0x20] sm:$0xff] %vm3595, %v3731
        %3950 = vst.msk [vmem:[%s13 + $0x28] sm:$0xff] %vm3595, %v3736
        %3951 = vst.msk [vmem:[%s13 + $0x30] sm:$0xff] %vm3595, %v3741
        %3952 = vst.msk [vmem:[%s13 + $0x38] sm:$0xff] %vm3595, %v3746
        %3953 = vst.msk [vmem:[%s13 + $0x40] sm:$0xff] %vm3595, %v3751
        %3954 = vst.msk [vmem:[%s13 + $0x48] sm:$0xff] %vm3595, %v3756
        %3955 = vst.msk [vmem:[%s13 + $0x50] sm:$0xff] %vm3595, %v3761
        %3956 = vst.msk [vmem:[%s13 + $0x58] sm:$0xff] %vm3595, %v3766
        %3957 = vst.msk [vmem:[%s13 + $0x60] sm:$0xff] %vm3595, %v3771
        %3958 = vst.msk [vmem:[%s13 + $0x68] sm:$0xff] %vm3595, %v3776
        %3959 = vst.msk [vmem:[%s13 + $0x70] sm:$0xff] %vm3595, %v3781
        %3960 = vst.msk [vmem:[%s13 + $0x78] sm:$0xff] %vm3595, %v3786
        %3961 = vst.msk [vmem:[%s13 + $0x80] sm:$0xff] %vm3595, %v3867
        %3962 = vst.msk [vmem:[%s13 + $0x88] sm:$0xff] %vm3595, %v3872
        %3963 = vst.msk [vmem:[%s13 + $0x90] sm:$0xff] %vm3595, %v3877
        %3964 = vst.msk [vmem:[%s13 + $0x98] sm:$0xff] %vm3595, %v3882
        %3965 = vst.msk [vmem:[%s13 + $0xa0] sm:$0xff] %vm3595, %v3887
        %3966 = vst.msk [vmem:[%s13 + $0xa8] sm:$0xff] %vm3595, %v3892
        %3967 = vst.msk [vmem:[%s13 + $0xb0] sm:$0xff] %vm3595, %v3897
        %3968 = vst.msk [vmem:[%s13 + $0xb8] sm:$0xff] %vm3595, %v3902
        %3969 = vst.msk [vmem:[%s13 + $0xc0] sm:$0xff] %vm3595, %v3907
        %3970 = vst.msk [vmem:[%s13 + $0xc8] sm:$0xff] %vm3595, %v3912
        %3971 = vst.msk [vmem:[%s13 + $0xd0] sm:$0xff] %vm3595, %v3917
        %3972 = vst.msk [vmem:[%s13 + $0xd8] sm:$0xff] %vm3595, %v3922
        %3973 = vst.msk [vmem:[%s13 + $0xe0] sm:$0xff] %vm3595, %v3927
        %3974 = vst.msk [vmem:[%s13 + $0xe8] sm:$0xff] %vm3595, %v3932
        %3975 = vst.msk [vmem:[%s13 + $0xf0] sm:$0xff] %vm3595, %v3937
        %3976 = vst.msk [vmem:[%s13 + $0xf8] sm:$0xff] %vm3595, %v3942
      $region80: #{tpu_custom_call.1} parent=71 // pred_fallthru
        _
      // Predicated region
      $region81: #{tpu_custom_call.1} parent=71 // pred_check
        %p3977 = pneg %p330
      $region82: #{tpu_custom_call.1} parent=71 // pred_check_branch
        %3979 = sbr.rel (%p3977) target = $region84
      $region83: #{tpu_custom_call.1} parent=71 // pred_region
        _
      $region84: #{tpu_custom_call.1} parent=71 // pred_fallthru
        _
      // Predicated region
      $region85: #{tpu_custom_call.1} parent=71 // pred_check
        %p3980 = pneg %p330
      $region86: #{tpu_custom_call.1} parent=71 // pred_check_branch
        %3982 = sbr.rel (%p3980) target = $region88
      $region87: #{tpu_custom_call.1} parent=71 // pred_region
        _
      $region88: #{tpu_custom_call.1} parent=71 // pred_fallthru
        _
    $region72: #{tpu_custom_call.1} parent=5 // pred_fallthru
      _
    %p3983 = scmp.le.s32.totalorder 2, %s19
    // Predicated region
    $region89: #{tpu_custom_call.1} parent=5 // pred_check
      %p3984 = pneg %p3983
    $region90: #{tpu_custom_call.1} parent=5 // pred_check_branch
      %3986 = sbr.rel (%p3984) target = $region92
    $region91: #{tpu_custom_call.1} parent=5 // pred_region
      %s3987 = ssub.s32 %s19, 2
    $region92: #{tpu_custom_call.1} parent=5 // pred_fallthru
      _
  $region6: #{tpu_custom_call.1} parent=0 // loop_footer
    %s23 = sadd.s32 1, %s19
  $region7: #{tpu_custom_call.1} parent=0 // loop_footer_branch
    %18 = sbr.rel target = $region3
  $region8: #{tpu_custom_call.1} parent=0 // loop_exit
    _

</llo_original>
